<compile_context>
chip_gen: v6e
topology: v6e:2x2x1
jax: 0.10.0
libtpu: 0.0.40
codegen_flags: <defaults>
</compile_context>

<pallas_src>
import functools

import jax
import jax.numpy as jnp
from jax import lax
from jax.experimental import pallas as pl
from jax.experimental.pallas import tpu as pltpu

OUT_CHANNELS_DEF = 16  # out_channels_def in DenseBlock.__init__


def _reflect_pad_hw(a, pad):
    """PyTorch ReflectionPad2d semantics on the first two axes of (H, W, C)."""
    h, w = a.shape[0], a.shape[1]
    top = [a[i:i + 1] for i in range(pad, 0, -1)]
    bot = [a[h - 1 - i:h - i] for i in range(1, pad + 1)]
    a = jnp.concatenate(top + [a] + bot, axis=0)
    left = [a[:, j:j + 1] for j in range(pad, 0, -1)]
    right = [a[:, w - 1 - j:w - j] for j in range(1, pad + 1)]
    return jnp.concatenate(left + [a] + right, axis=1)


def _transpose2d(v):
    """2-D transpose, zero-padded to (8,128)-aligned operands for robust XLU lowering."""
    r, c = v.shape
    rpad = (-r) % 8
    cpad = (-c) % 128
    if rpad:
        v = jnp.concatenate([v, jnp.zeros((rpad, v.shape[1]), v.dtype)], axis=0)
    if cpad:
        v = jnp.concatenate([v, jnp.zeros((v.shape[0], cpad), v.dtype)], axis=1)
    return jnp.transpose(v, (1, 0))[:c, :r]


def _dense_block_kernel(x_ref, *refs, h, w, k):
    """Fused 3-layer DenseBlock for one image, channel-major I/O.

    x_ref   : (1, Cin, H*W)        channels on sublanes, pixels on 128-lane axis
    refs    : w1, b1, w2, b2, w3, b3, out_ref
              w_l : (k*k*C_l, 16)  HWIO-flattened;   b_l : (1, 16)
    out_ref : (1, Cin + 48, H*W)   reshapes straight back to NCHW in the wrapper
    """
    out_ref = refs[-1]
    wb_refs = refs[:-1]
    n_layers = len(wb_refs) // 2
    hw = h * w
    pad = k // 2
    cin = x_ref.shape[1]

    # torch.cat([x, out], 1) keeps the input channels first in the slab.
    out_ref[0, :cin, :] = x_ref[0]

    # Pixel-major (H*W, C) copy of the running activation for the spatial work
    # (channels on lanes -> the k*k shifted windows are cheap static slices and
    #  reshape (H, W, C) <-> (H*W, C) is tiling-compatible for W % 8 == 0).
    cur = _transpose2d(x_ref[0].astype(jnp.float32))          # (H*W, Cin)

    c0 = cin
    for li in range(n_layers):
        w_ref = wb_refs[2 * li]
        b_ref = wb_refs[2 * li + 1]
        cout = w_ref.shape[-1]
        c = cur.shape[-1]

        a = _reflect_pad_hw(cur.reshape(h, w, c), pad)        # (H+2p, W+2p, c)

        # In-VMEM "im2col": k*k shifted windows concatenated on the lane axis
        # -> one deep-contraction MXU matmul per layer (depth k*k*c).
        taps = []
        for dy in range(k):
            for dx in range(k):
                taps.append(a[dy:dy + h, dx:dx + w, :].reshape(hw, c))
        xcol = jnp.concatenate(taps, axis=-1)                 # (H*W, k*k*c)

        y = jnp.dot(xcol, w_ref[...].astype(jnp.float32),
                    preferred_element_type=jnp.float32)       # (H*W, 16)
        y = jnp.maximum(y + b_ref[...].astype(jnp.float32), 0.0)  # bias + ReLU

        # Channel-major slab write: 256-lane-dense stores.
        out_ref[0, c0:c0 + cout, :] = _transpose2d(y).astype(out_ref.dtype)

        if li + 1 < n_layers:
            cur = jnp.concatenate([cur, y], axis=-1)          # dense concat in VMEM
        c0 += cout


def init_dense_block_params(key, in_channels, kernel_size):
    """Deterministic (PRNGKey-seeded) params; shapes match the PyTorch module."""
    params = []
    cin = in_channels
    for _ in range(3):
        key, kw, kb = jax.random.split(key, 3)
        fan_in = cin * kernel_size * kernel_size
        bound = 1.0 / (fan_in ** 0.5)
        wgt = jax.random.uniform(
            kw, (kernel_size, kernel_size, cin, OUT_CHANNELS_DEF),
            jnp.float32, -bound, bound)                        # HWIO
        b = jax.random.uniform(kb, (OUT_CHANNELS_DEF,), jnp.float32, -bound, bound)
        params.append((wgt, b))
        cin += OUT_CHANNELS_DEF
    return params


def dense_block(x_nchw, params, kernel_size):
    """Forward pass of DenseBlock. Input/output NCHW like PyTorch."""
    if kernel_size % 2 != 1:
        raise ValueError("reflection-pad/conv alignment requires odd kernel_size")
    n, cin, h, w = x_nchw.shape
    k = kernel_size
    hw = h * w
    c_total = cin + len(params) * OUT_CHANNELS_DEF

    # NCHW -> (N, Cin, H*W): pure reshape, no HBM transpose; pixels on lanes.
    x_cf = x_nchw.reshape(n, cin, hw)

    flat_args = []
    in_specs = [pl.BlockSpec((1, cin, hw), lambda i: (i, 0, 0))]
    flops = 0
    bytes_accessed = (x_cf.size + n * hw * c_total) * 4
    for wgt, b in params:
        kh, kw_, ci, co = wgt.shape
        wm = wgt.reshape(kh * kw_ * ci, co)                    # (k*k*C_l, 16)
        bm = b.reshape(1, co)
        flat_args += [wm, bm]
        in_specs += [pl.BlockSpec((kh * kw_ * ci, co), lambda i: (0, 0)),
                     pl.BlockSpec((1, co), lambda i: (0, 0))]
        flops += 2 * n * hw * kh * kw_ * ci * co
        bytes_accessed += (wm.size + bm.size) * 4

    kernel = functools.partial(_dense_block_kernel, h=h, w=w, k=k)
    out = pl.pallas_call(
        kernel,
        out_shape=jax.ShapeDtypeStruct((n, c_total, hw), x_nchw.dtype),
        grid_spec=pltpu.PrefetchScalarGridSpec(
            num_scalar_prefetch=0,
            grid=(n,),                                         # one image per step
            in_specs=in_specs,
            out_specs=pl.BlockSpec((1, c_total, hw), lambda i: (i, 0, 0)),
        ),
        compiler_params=pltpu.CompilerParams(
            dimension_semantics=("parallel",),
            vmem_limit_bytes=32 * 1024 * 1024,
        ),
        cost_estimate=pl.CostEstimate(
            flops=flops, transcendentals=0, bytes_accessed=bytes_accessed),
    )(x_cf, *flat_args)

    # Channel-major kernel output reshapes straight back to NCHW (no transpose).
    return out.reshape(n, c_total, h, w)


def _reference_dense_block(x_nchw, params, kernel_size):
    """Pure-JAX reference (lax conv) for correctness checking."""
    x = jnp.transpose(x_nchw, (0, 2, 3, 1))
    pad = kernel_size // 2
    for wgt, b in params:
        xpad = jnp.pad(x, ((0, 0), (pad, pad), (pad, pad), (0, 0)), mode="reflect")
        out = lax.conv_general_dilated(
            xpad, wgt, window_strides=(1, 1), padding="VALID",
            dimension_numbers=("NHWC", "HWIO", "NHWC"))
        out = jnp.maximum(out + b, 0.0)
        x = jnp.concatenate([x, out], axis=-1)
    return jnp.transpose(x, (0, 3, 1, 2))


if __name__ == "__main__":
    in_channels, kernel_size, stride = 4, 3, 1
    N, H, W = 2, 16, 16

    key = jax.random.PRNGKey(0)
    key, kx = jax.random.split(key)
    x = jax.random.normal(kx, (N, in_channels, H, W), jnp.float32)   # NCHW
    params = init_dense_block_params(key, in_channels, kernel_size)

    fwd = jax.jit(dense_block, static_argnums=2)
    y = jax.block_until_ready(fwd(x, params, kernel_size))

    # Shape check: channels grow 4 -> 20 -> 36 -> 52
    assert y.shape == (N, in_channels + 3 * OUT_CHANNELS_DEF, H, W), y.shape

    y_ref = _reference_dense_block(x, params, kernel_size)
    assert jnp.allclose(y, y_ref, atol=1e-4, rtol=1e-4), float(
        jnp.max(jnp.abs(y - y_ref)))

    print("KERNEL_OK")
</pallas_src>

<mosaic_0001>
module attributes {stable_mosaic.version = 11 : i64} {
  func.func @_dense_block_kernel(%arg0: i32, %arg1: memref<1x4x256xf32, #tpu.memory_space<vmem>>, %arg2: memref<36x16xf32, #tpu.memory_space<vmem>>, %arg3: memref<1x16xf32, #tpu.memory_space<vmem>>, %arg4: memref<180x16xf32, #tpu.memory_space<vmem>>, %arg5: memref<1x16xf32, #tpu.memory_space<vmem>>, %arg6: memref<324x16xf32, #tpu.memory_space<vmem>>, %arg7: memref<1x16xf32, #tpu.memory_space<vmem>>, %arg8: memref<1x52x256xf32, #tpu.memory_space<vmem>>) attributes {dimension_semantics = [#tpu.dimension_semantics<parallel>], iteration_bounds = array<i64: 2>, scalar_prefetch = 0 : i64, scratch_operands = 0 : i64, tpu.core_type = #tpu.core_type<tc>, window_params = [{transform_indices = @transform_0, window_bounds = array<i64: 1, 4, 256>}, {pipeline_mode = #tpu.pipeline_mode<synchronous>, transform_indices = @transform_1, window_bounds = array<i64: 36, 16>}, {pipeline_mode = #tpu.pipeline_mode<synchronous>, transform_indices = @transform_2, window_bounds = array<i64: 1, 16>}, {pipeline_mode = #tpu.pipeline_mode<synchronous>, transform_indices = @transform_3, window_bounds = array<i64: 180, 16>}, {pipeline_mode = #tpu.pipeline_mode<synchronous>, transform_indices = @transform_4, window_bounds = array<i64: 1, 16>}, {pipeline_mode = #tpu.pipeline_mode<synchronous>, transform_indices = @transform_5, window_bounds = array<i64: 324, 16>}, {pipeline_mode = #tpu.pipeline_mode<synchronous>, transform_indices = @transform_6, window_bounds = array<i64: 1, 16>}, {transform_indices = @transform_7, window_bounds = array<i64: 1, 52, 256>}]} {
    %c0 = arith.constant 0 : index
    %c0_0 = arith.constant 0 : index
    %c0_1 = arith.constant 0 : index
    %0 = vector.load %arg1[%c0, %c0_0, %c0_1] : memref<1x4x256xf32, #tpu.memory_space<vmem>>, vector<1x4x256xf32>
    %1 = vector.shape_cast %0 : vector<1x4x256xf32> to vector<4x256xf32>
    %c0_2 = arith.constant 0 : index
    %c0_3 = arith.constant 0 : index
    %c0_4 = arith.constant 0 : index
    %2 = vector.load %arg8[%c0_2, %c0_3, %c0_4] : memref<1x52x256xf32, #tpu.memory_space<vmem>>, vector<1x4x256xf32>
    %3 = vector.shape_cast %2 : vector<1x4x256xf32> to vector<4x256xf32>
    %4 = vector.shape_cast %1 : vector<4x256xf32> to vector<1x4x256xf32>
    tpu.vector_store %arg8[%c0_2, %c0_3, %c0_4], %4 {strides = array<i32>} : memref<1x52x256xf32, #tpu.memory_space<vmem>>, vector<1x4x256xf32>,
    %c0_5 = arith.constant 0 : index
    %c0_6 = arith.constant 0 : index
    %c0_7 = arith.constant 0 : index
    %5 = vector.load %arg1[%c0_5, %c0_6, %c0_7] : memref<1x4x256xf32, #tpu.memory_space<vmem>>, vector<1x4x256xf32>
    %6 = vector.shape_cast %5 : vector<1x4x256xf32> to vector<4x256xf32>
    %cst = arith.constant 0.000000e+00 : f32
    %7 = vector.broadcast %cst : f32 to vector<4x256xf32>
    %8 = tpu.concatenate %6, %7 in 0 : vector<4x256xf32>, vector<4x256xf32> -> vector<8x256xf32>
    %9 = tpu.transpose %8, [1, 0] : vector<8x256xf32> -> vector<256x8xf32>
    %10 = vector.extract_strided_slice %9 {offsets = [0, 0], sizes = [256, 4], strides = [1, 1]} : vector<256x8xf32> to vector<256x4xf32>
    %11 = vector.shape_cast %10 : vector<256x4xf32> to vector<16x16x4xf32>
    %12 = vector.extract_strided_slice %11 {offsets = [1, 0, 0], sizes = [1, 16, 4], strides = [1, 1, 1]} : vector<16x16x4xf32> to vector<1x16x4xf32>
    %13 = vector.extract_strided_slice %11 {offsets = [14, 0, 0], sizes = [1, 16, 4], strides = [1, 1, 1]} : vector<16x16x4xf32> to vector<1x16x4xf32>
    %14 = tpu.concatenate %12, %11, %13 in 0 : vector<1x16x4xf32>, vector<16x16x4xf32>, vector<1x16x4xf32> -> vector<18x16x4xf32>
    %15 = vector.extract_strided_slice %14 {offsets = [0, 1, 0], sizes = [18, 1, 4], strides = [1, 1, 1]} : vector<18x16x4xf32> to vector<18x1x4xf32>
    %16 = vector.extract_strided_slice %14 {offsets = [0, 14, 0], sizes = [18, 1, 4], strides = [1, 1, 1]} : vector<18x16x4xf32> to vector<18x1x4xf32>
    %17 = tpu.concatenate %15, %14, %16 in 1 : vector<18x1x4xf32>, vector<18x16x4xf32>, vector<18x1x4xf32> -> vector<18x18x4xf32>
    %18 = vector.extract_strided_slice %17 {offsets = [0, 0, 0], sizes = [16, 16, 4], strides = [1, 1, 1]} : vector<18x18x4xf32> to vector<16x16x4xf32>
    %19 = vector.shape_cast %18 : vector<16x16x4xf32> to vector<256x4xf32>
    %20 = vector.extract_strided_slice %17 {offsets = [0, 1, 0], sizes = [16, 16, 4], strides = [1, 1, 1]} : vector<18x18x4xf32> to vector<16x16x4xf32>
    %21 = vector.shape_cast %20 : vector<16x16x4xf32> to vector<256x4xf32>
    %22 = vector.extract_strided_slice %17 {offsets = [0, 2, 0], sizes = [16, 16, 4], strides = [1, 1, 1]} : vector<18x18x4xf32> to vector<16x16x4xf32>
    %23 = vector.shape_cast %22 : vector<16x16x4xf32> to vector<256x4xf32>
    %24 = vector.extract_strided_slice %17 {offsets = [1, 0, 0], sizes = [16, 16, 4], strides = [1, 1, 1]} : vector<18x18x4xf32> to vector<16x16x4xf32>
    %25 = vector.shape_cast %24 : vector<16x16x4xf32> to vector<256x4xf32>
    %26 = vector.extract_strided_slice %17 {offsets = [1, 1, 0], sizes = [16, 16, 4], strides = [1, 1, 1]} : vector<18x18x4xf32> to vector<16x16x4xf32>
    %27 = vector.shape_cast %26 : vector<16x16x4xf32> to vector<256x4xf32>
    %28 = vector.extract_strided_slice %17 {offsets = [1, 2, 0], sizes = [16, 16, 4], strides = [1, 1, 1]} : vector<18x18x4xf32> to vector<16x16x4xf32>
    %29 = vector.shape_cast %28 : vector<16x16x4xf32> to vector<256x4xf32>
    %30 = vector.extract_strided_slice %17 {offsets = [2, 0, 0], sizes = [16, 16, 4], strides = [1, 1, 1]} : vector<18x18x4xf32> to vector<16x16x4xf32>
    %31 = vector.shape_cast %30 : vector<16x16x4xf32> to vector<256x4xf32>
    %32 = vector.extract_strided_slice %17 {offsets = [2, 1, 0], sizes = [16, 16, 4], strides = [1, 1, 1]} : vector<18x18x4xf32> to vector<16x16x4xf32>
    %33 = vector.shape_cast %32 : vector<16x16x4xf32> to vector<256x4xf32>
    %34 = vector.extract_strided_slice %17 {offsets = [2, 2, 0], sizes = [16, 16, 4], strides = [1, 1, 1]} : vector<18x18x4xf32> to vector<16x16x4xf32>
    %35 = vector.shape_cast %34 : vector<16x16x4xf32> to vector<256x4xf32>
    %36 = tpu.concatenate %19, %21, %23, %25, %27, %29, %31, %33, %35 in 1 : vector<256x4xf32>, vector<256x4xf32>, vector<256x4xf32>, vector<256x4xf32>, vector<256x4xf32>, vector<256x4xf32>, vector<256x4xf32>, vector<256x4xf32>, vector<256x4xf32> -> vector<256x36xf32>
    %c0_8 = arith.constant 0 : index
    %c0_9 = arith.constant 0 : index
    %37 = vector.load %arg2[%c0_8, %c0_9] : memref<36x16xf32, #tpu.memory_space<vmem>>, vector<36x16xf32>
    %cst_10 = arith.constant dense<0.000000e+00> : vector<256x16xf32>
    %38 = tpu.matmul %36, %37, %cst_10 {dimension_numbers = #tpu.dot_dimension_numbers<[1], [0], [0], [1], [0, 0, 1, 1], [], []>} : vector<256x36xf32>, vector<36x16xf32>, vector<256x16xf32> -> vector<256x16xf32>
    %c0_11 = arith.constant 0 : index
    %c0_12 = arith.constant 0 : index
    %39 = vector.load %arg3[%c0_11, %c0_12] : memref<1x16xf32, #tpu.memory_space<vmem>>, vector<1x16xf32>
    %40 = vector.broadcast %39 : vector<1x16xf32> to vector<256x16xf32>
    %41 = arith.addf %38, %40 : vector<256x16xf32>
    %cst_13 = arith.constant 0.000000e+00 : f32
    %42 = vector.broadcast %cst_13 : f32 to vector<256x16xf32>
    %43 = arith.maximumf %41, %42 : vector<256x16xf32>
    %cst_14 = arith.constant 0.000000e+00 : f32
    %44 = vector.broadcast %cst_14 : f32 to vector<256x112xf32>
    %45 = tpu.concatenate %43, %44 in 1 : vector<256x16xf32>, vector<256x112xf32> -> vector<256x128xf32>
    %46 = tpu.transpose %45, [1, 0] : vector<256x128xf32> -> vector<128x256xf32>
    %47 = vector.extract_strided_slice %46 {offsets = [0, 0], sizes = [16, 256], strides = [1, 1]} : vector<128x256xf32> to vector<16x256xf32>
    %c0_15 = arith.constant 0 : index
    %c4 = arith.constant 4 : index
    %c0_16 = arith.constant 0 : index
    %48 = vector.load %arg8[%c0_15, %c4, %c0_16] : memref<1x52x256xf32, #tpu.memory_space<vmem>>, vector<1x16x256xf32>
    %49 = vector.shape_cast %48 : vector<1x16x256xf32> to vector<16x256xf32>
    %50 = vector.shape_cast %47 : vector<16x256xf32> to vector<1x16x256xf32>
    tpu.vector_store %arg8[%c0_15, %c4, %c0_16], %50 {strides = array<i32>} : memref<1x52x256xf32, #tpu.memory_space<vmem>>, vector<1x16x256xf32>,
    %51 = tpu.concatenate %10, %43 in 1 : vector<256x4xf32>, vector<256x16xf32> -> vector<256x20xf32>
    %52 = vector.shape_cast %51 : vector<256x20xf32> to vector<16x16x20xf32>
    %53 = vector.extract_strided_slice %52 {offsets = [1, 0, 0], sizes = [1, 16, 20], strides = [1, 1, 1]} : vector<16x16x20xf32> to vector<1x16x20xf32>
    %54 = vector.extract_strided_slice %52 {offsets = [14, 0, 0], sizes = [1, 16, 20], strides = [1, 1, 1]} : vector<16x16x20xf32> to vector<1x16x20xf32>
    %55 = tpu.concatenate %53, %52, %54 in 0 : vector<1x16x20xf32>, vector<16x16x20xf32>, vector<1x16x20xf32> -> vector<18x16x20xf32>
    %56 = vector.extract_strided_slice %55 {offsets = [0, 1, 0], sizes = [18, 1, 20], strides = [1, 1, 1]} : vector<18x16x20xf32> to vector<18x1x20xf32>
    %57 = vector.extract_strided_slice %55 {offsets = [0, 14, 0], sizes = [18, 1, 20], strides = [1, 1, 1]} : vector<18x16x20xf32> to vector<18x1x20xf32>
    %58 = tpu.concatenate %56, %55, %57 in 1 : vector<18x1x20xf32>, vector<18x16x20xf32>, vector<18x1x20xf32> -> vector<18x18x20xf32>
    %59 = vector.extract_strided_slice %58 {offsets = [0, 0, 0], sizes = [16, 16, 20], strides = [1, 1, 1]} : vector<18x18x20xf32> to vector<16x16x20xf32>
    %60 = vector.shape_cast %59 : vector<16x16x20xf32> to vector<256x20xf32>
    %61 = vector.extract_strided_slice %58 {offsets = [0, 1, 0], sizes = [16, 16, 20], strides = [1, 1, 1]} : vector<18x18x20xf32> to vector<16x16x20xf32>
    %62 = vector.shape_cast %61 : vector<16x16x20xf32> to vector<256x20xf32>
    %63 = vector.extract_strided_slice %58 {offsets = [0, 2, 0], sizes = [16, 16, 20], strides = [1, 1, 1]} : vector<18x18x20xf32> to vector<16x16x20xf32>
    %64 = vector.shape_cast %63 : vector<16x16x20xf32> to vector<256x20xf32>
    %65 = vector.extract_strided_slice %58 {offsets = [1, 0, 0], sizes = [16, 16, 20], strides = [1, 1, 1]} : vector<18x18x20xf32> to vector<16x16x20xf32>
    %66 = vector.shape_cast %65 : vector<16x16x20xf32> to vector<256x20xf32>
    %67 = vector.extract_strided_slice %58 {offsets = [1, 1, 0], sizes = [16, 16, 20], strides = [1, 1, 1]} : vector<18x18x20xf32> to vector<16x16x20xf32>
    %68 = vector.shape_cast %67 : vector<16x16x20xf32> to vector<256x20xf32>
    %69 = vector.extract_strided_slice %58 {offsets = [1, 2, 0], sizes = [16, 16, 20], strides = [1, 1, 1]} : vector<18x18x20xf32> to vector<16x16x20xf32>
    %70 = vector.shape_cast %69 : vector<16x16x20xf32> to vector<256x20xf32>
    %71 = vector.extract_strided_slice %58 {offsets = [2, 0, 0], sizes = [16, 16, 20], strides = [1, 1, 1]} : vector<18x18x20xf32> to vector<16x16x20xf32>
    %72 = vector.shape_cast %71 : vector<16x16x20xf32> to vector<256x20xf32>
    %73 = vector.extract_strided_slice %58 {offsets = [2, 1, 0], sizes = [16, 16, 20], strides = [1, 1, 1]} : vector<18x18x20xf32> to vector<16x16x20xf32>
    %74 = vector.shape_cast %73 : vector<16x16x20xf32> to vector<256x20xf32>
    %75 = vector.extract_strided_slice %58 {offsets = [2, 2, 0], sizes = [16, 16, 20], strides = [1, 1, 1]} : vector<18x18x20xf32> to vector<16x16x20xf32>
    %76 = vector.shape_cast %75 : vector<16x16x20xf32> to vector<256x20xf32>
    %77 = tpu.concatenate %60, %62, %64, %66, %68, %70, %72, %74, %76 in 1 : vector<256x20xf32>, vector<256x20xf32>, vector<256x20xf32>, vector<256x20xf32>, vector<256x20xf32>, vector<256x20xf32>, vector<256x20xf32>, vector<256x20xf32>, vector<256x20xf32> -> vector<256x180xf32>
    %c0_17 = arith.constant 0 : index
    %c0_18 = arith.constant 0 : index
    %78 = vector.load %arg4[%c0_17, %c0_18] : memref<180x16xf32, #tpu.memory_space<vmem>>, vector<180x16xf32>
    %cst_19 = arith.constant dense<0.000000e+00> : vector<256x16xf32>
    %79 = tpu.matmul %77, %78, %cst_19 {dimension_numbers = #tpu.dot_dimension_numbers<[1], [0], [0], [1], [0, 0, 1, 1], [], []>} : vector<256x180xf32>, vector<180x16xf32>, vector<256x16xf32> -> vector<256x16xf32>
    %c0_20 = arith.constant 0 : index
    %c0_21 = arith.constant 0 : index
    %80 = vector.load %arg5[%c0_20, %c0_21] : memref<1x16xf32, #tpu.memory_space<vmem>>, vector<1x16xf32>
    %81 = vector.broadcast %80 : vector<1x16xf32> to vector<256x16xf32>
    %82 = arith.addf %79, %81 : vector<256x16xf32>
    %cst_22 = arith.constant 0.000000e+00 : f32
    %83 = vector.broadcast %cst_22 : f32 to vector<256x16xf32>
    %84 = arith.maximumf %82, %83 : vector<256x16xf32>
    %cst_23 = arith.constant 0.000000e+00 : f32
    %85 = vector.broadcast %cst_23 : f32 to vector<256x112xf32>
    %86 = tpu.concatenate %84, %85 in 1 : vector<256x16xf32>, vector<256x112xf32> -> vector<256x128xf32>
    %87 = tpu.transpose %86, [1, 0] : vector<256x128xf32> -> vector<128x256xf32>
    %88 = vector.extract_strided_slice %87 {offsets = [0, 0], sizes = [16, 256], strides = [1, 1]} : vector<128x256xf32> to vector<16x256xf32>
    %c0_24 = arith.constant 0 : index
    %c20 = arith.constant 20 : index
    %c0_25 = arith.constant 0 : index
    %89 = vector.load %arg8[%c0_24, %c20, %c0_25] : memref<1x52x256xf32, #tpu.memory_space<vmem>>, vector<1x16x256xf32>
    %90 = vector.shape_cast %89 : vector<1x16x256xf32> to vector<16x256xf32>
    %91 = vector.shape_cast %88 : vector<16x256xf32> to vector<1x16x256xf32>
    tpu.vector_store %arg8[%c0_24, %c20, %c0_25], %91 {strides = array<i32>} : memref<1x52x256xf32, #tpu.memory_space<vmem>>, vector<1x16x256xf32>,
    %92 = tpu.concatenate %51, %84 in 1 : vector<256x20xf32>, vector<256x16xf32> -> vector<256x36xf32>
    %93 = vector.shape_cast %92 : vector<256x36xf32> to vector<16x16x36xf32>
    %94 = vector.extract_strided_slice %93 {offsets = [1, 0, 0], sizes = [1, 16, 36], strides = [1, 1, 1]} : vector<16x16x36xf32> to vector<1x16x36xf32>
    %95 = vector.extract_strided_slice %93 {offsets = [14, 0, 0], sizes = [1, 16, 36], strides = [1, 1, 1]} : vector<16x16x36xf32> to vector<1x16x36xf32>
    %96 = tpu.concatenate %94, %93, %95 in 0 : vector<1x16x36xf32>, vector<16x16x36xf32>, vector<1x16x36xf32> -> vector<18x16x36xf32>
    %97 = vector.extract_strided_slice %96 {offsets = [0, 1, 0], sizes = [18, 1, 36], strides = [1, 1, 1]} : vector<18x16x36xf32> to vector<18x1x36xf32>
    %98 = vector.extract_strided_slice %96 {offsets = [0, 14, 0], sizes = [18, 1, 36], strides = [1, 1, 1]} : vector<18x16x36xf32> to vector<18x1x36xf32>
    %99 = tpu.concatenate %97, %96, %98 in 1 : vector<18x1x36xf32>, vector<18x16x36xf32>, vector<18x1x36xf32> -> vector<18x18x36xf32>
    %100 = vector.extract_strided_slice %99 {offsets = [0, 0, 0], sizes = [16, 16, 36], strides = [1, 1, 1]} : vector<18x18x36xf32> to vector<16x16x36xf32>
    %101 = vector.shape_cast %100 : vector<16x16x36xf32> to vector<256x36xf32>
    %102 = vector.extract_strided_slice %99 {offsets = [0, 1, 0], sizes = [16, 16, 36], strides = [1, 1, 1]} : vector<18x18x36xf32> to vector<16x16x36xf32>
    %103 = vector.shape_cast %102 : vector<16x16x36xf32> to vector<256x36xf32>
    %104 = vector.extract_strided_slice %99 {offsets = [0, 2, 0], sizes = [16, 16, 36], strides = [1, 1, 1]} : vector<18x18x36xf32> to vector<16x16x36xf32>
    %105 = vector.shape_cast %104 : vector<16x16x36xf32> to vector<256x36xf32>
    %106 = vector.extract_strided_slice %99 {offsets = [1, 0, 0], sizes = [16, 16, 36], strides = [1, 1, 1]} : vector<18x18x36xf32> to vector<16x16x36xf32>
    %107 = vector.shape_cast %106 : vector<16x16x36xf32> to vector<256x36xf32>
    %108 = vector.extract_strided_slice %99 {offsets = [1, 1, 0], sizes = [16, 16, 36], strides = [1, 1, 1]} : vector<18x18x36xf32> to vector<16x16x36xf32>
    %109 = vector.shape_cast %108 : vector<16x16x36xf32> to vector<256x36xf32>
    %110 = vector.extract_strided_slice %99 {offsets = [1, 2, 0], sizes = [16, 16, 36], strides = [1, 1, 1]} : vector<18x18x36xf32> to vector<16x16x36xf32>
    %111 = vector.shape_cast %110 : vector<16x16x36xf32> to vector<256x36xf32>
    %112 = vector.extract_strided_slice %99 {offsets = [2, 0, 0], sizes = [16, 16, 36], strides = [1, 1, 1]} : vector<18x18x36xf32> to vector<16x16x36xf32>
    %113 = vector.shape_cast %112 : vector<16x16x36xf32> to vector<256x36xf32>
    %114 = vector.extract_strided_slice %99 {offsets = [2, 1, 0], sizes = [16, 16, 36], strides = [1, 1, 1]} : vector<18x18x36xf32> to vector<16x16x36xf32>
    %115 = vector.shape_cast %114 : vector<16x16x36xf32> to vector<256x36xf32>
    %116 = vector.extract_strided_slice %99 {offsets = [2, 2, 0], sizes = [16, 16, 36], strides = [1, 1, 1]} : vector<18x18x36xf32> to vector<16x16x36xf32>
    %117 = vector.shape_cast %116 : vector<16x16x36xf32> to vector<256x36xf32>
    %118 = tpu.concatenate %101, %103, %105, %107, %109, %111, %113, %115, %117 in 1 : vector<256x36xf32>, vector<256x36xf32>, vector<256x36xf32>, vector<256x36xf32>, vector<256x36xf32>, vector<256x36xf32>, vector<256x36xf32>, vector<256x36xf32>, vector<256x36xf32> -> vector<256x324xf32>
    %c0_26 = arith.constant 0 : index
    %c0_27 = arith.constant 0 : index
    %119 = vector.load %arg6[%c0_26, %c0_27] : memref<324x16xf32, #tpu.memory_space<vmem>>, vector<324x16xf32>
    %cst_28 = arith.constant dense<0.000000e+00> : vector<256x16xf32>
    %120 = tpu.matmul %118, %119, %cst_28 {dimension_numbers = #tpu.dot_dimension_numbers<[1], [0], [0], [1], [0, 0, 1, 1], [], []>} : vector<256x324xf32>, vector<324x16xf32>, vector<256x16xf32> -> vector<256x16xf32>
    %c0_29 = arith.constant 0 : index
    %c0_30 = arith.constant 0 : index
    %121 = vector.load %arg7[%c0_29, %c0_30] : memref<1x16xf32, #tpu.memory_space<vmem>>, vector<1x16xf32>
    %122 = vector.broadcast %121 : vector<1x16xf32> to vector<256x16xf32>
    %123 = arith.addf %120, %122 : vector<256x16xf32>
    %cst_31 = arith.constant 0.000000e+00 : f32
    %124 = vector.broadcast %cst_31 : f32 to vector<256x16xf32>
    %125 = arith.maximumf %123, %124 : vector<256x16xf32>
    %cst_32 = arith.constant 0.000000e+00 : f32
    %126 = vector.broadcast %cst_32 : f32 to vector<256x112xf32>
    %127 = tpu.concatenate %125, %126 in 1 : vector<256x16xf32>, vector<256x112xf32> -> vector<256x128xf32>
    %128 = tpu.transpose %127, [1, 0] : vector<256x128xf32> -> vector<128x256xf32>
    %129 = vector.extract_strided_slice %128 {offsets = [0, 0], sizes = [16, 256], strides = [1, 1]} : vector<128x256xf32> to vector<16x256xf32>
    %c0_33 = arith.constant 0 : index
    %c36 = arith.constant 36 : index
    %c0_34 = arith.constant 0 : index
    %130 = vector.load %arg8[%c0_33, %c36, %c0_34] : memref<1x52x256xf32, #tpu.memory_space<vmem>>, vector<1x16x256xf32>
    %131 = vector.shape_cast %130 : vector<1x16x256xf32> to vector<16x256xf32>
    %132 = vector.shape_cast %129 : vector<16x256xf32> to vector<1x16x256xf32>
    tpu.vector_store %arg8[%c0_33, %c36, %c0_34], %132 {strides = array<i32>} : memref<1x52x256xf32, #tpu.memory_space<vmem>>, vector<1x16x256xf32>,
    return
  }
  func.func @transform_0(%arg0: i32) -> (i32, i32, i32) {
    %c0_i32 = arith.constant 0 : i32
    %c0_i32_0 = arith.constant 0 : i32
    %c0_i32_1 = arith.constant 0 : i32
    return %arg0, %c0_i32, %c0_i32_0 : i32, i32, i32
  }
  func.func @transform_1(%arg0: i32) -> (i32, i32) {
    %c0_i32 = arith.constant 0 : i32
    %c0_i32_0 = arith.constant 0 : i32
    %c0_i32_1 = arith.constant 0 : i32
    return %c0_i32, %c0_i32_0 : i32, i32
  }
  func.func @transform_2(%arg0: i32) -> (i32, i32) {
    %c0_i32 = arith.constant 0 : i32
    %c0_i32_0 = arith.constant 0 : i32
    %c0_i32_1 = arith.constant 0 : i32
    return %c0_i32, %c0_i32_0 : i32, i32
  }
  func.func @transform_3(%arg0: i32) -> (i32, i32) {
    %c0_i32 = arith.constant 0 : i32
    %c0_i32_0 = arith.constant 0 : i32
    %c0_i32_1 = arith.constant 0 : i32
    return %c0_i32, %c0_i32_0 : i32, i32
  }
  func.func @transform_4(%arg0: i32) -> (i32, i32) {
    %c0_i32 = arith.constant 0 : i32
    %c0_i32_0 = arith.constant 0 : i32
    %c0_i32_1 = arith.constant 0 : i32
    return %c0_i32, %c0_i32_0 : i32, i32
  }
  func.func @transform_5(%arg0: i32) -> (i32, i32) {
    %c0_i32 = arith.constant 0 : i32
    %c0_i32_0 = arith.constant 0 : i32
    %c0_i32_1 = arith.constant 0 : i32
    return %c0_i32, %c0_i32_0 : i32, i32
  }
  func.func @transform_6(%arg0: i32) -> (i32, i32) {
    %c0_i32 = arith.constant 0 : i32
    %c0_i32_0 = arith.constant 0 : i32
    %c0_i32_1 = arith.constant 0 : i32
    return %c0_i32, %c0_i32_0 : i32, i32
  }
  func.func @transform_7(%arg0: i32) -> (i32, i32, i32) {
    %c0_i32 = arith.constant 0 : i32
    %c0_i32_0 = arith.constant 0 : i32
    %c0_i32_1 = arith.constant 0 : i32
    return %arg0, %c0_i32, %c0_i32_0 : i32, i32, i32
  }
}

</mosaic_0001>

<llo_original>
// kernel: dense_block.1
$region0: #{dense_block.1}
  #allocation0 [shape = 'u32[]', space=smem, size = 0x4, offset = 0x4, fixed_abs, tag = 'smem constant byte address 0x4 - core index']
  #allocation1 [shape = 'u32[144,128]{1,0:T(1,128)}', space=vmem, size = 0x12000, scoped, tag = 'internal scratch']
  %s0 = inlined_call_operand.vmem [shape: f32[2,4,256], index: 0, kind: input, shape index: {}]
  %s1 = inlined_call_operand.vmem [shape: f32[36,16], index: 1, kind: input, shape index: {}]
  %s2 = inlined_call_operand.vmem [shape: f32[1,16], index: 2, kind: input, shape index: {}]
  %s3 = inlined_call_operand.vmem [shape: f32[180,16], index: 3, kind: input, shape index: {}]
  %s4 = inlined_call_operand.vmem [shape: f32[1,16], index: 4, kind: input, shape index: {}]
  %s5 = inlined_call_operand.vmem [shape: f32[324,16], index: 5, kind: input, shape index: {}]
  %s6 = inlined_call_operand.vmem [shape: f32[1,16], index: 6, kind: input, shape index: {}]
  %s7 = inlined_call_operand.vmem [shape: f32[2,52,256], index: 7, kind: output, shape index: {}]
  %s8 = sld [smem:[#allocation0]]
  $region61: #{dense_block.1} parent=0
    _
  %s10 = ssub.s32 1, %s8
  %s11 = scalar_select 0, %s10, %s8
  loop: start=0, step=1, limit=4
  $region2: #{dense_block.1} parent=0 // loop_pre_header
    _
  $region3: #{dense_block.1} parent=0 // loop_header
    %s13 = sphi 0, %s17
    %p14 = scmp.ge.s32.totalorder %s13, 4
    %s23 = sphi 0, %s25
    %s26 = sphi 0, %s23
    %s27 = sphi 0, %s26
    %s43 = sphi 0, %s27
    %s47 = sphi 0, %s47
    %s49 = sphi 0, %s47
    %s50 = sphi 0, %s49
    %s64 = sphi 0, %s50
    %s68 = sphi 0, %s68
    %s70 = sphi 0, %s68
    %s71 = sphi 0, %s70
    %s85 = sphi 0, %s71
    %s89 = sphi 0, %s89
    %s91 = sphi 0, %s89
    %s92 = sphi 0, %s91
    %s106 = sphi 0, %s92
    %s110 = sphi 0, %s110
    %s112 = sphi 0, %s110
    %s113 = sphi 0, %s112
    %s127 = sphi 0, %s113
    %s131 = sphi 0, %s131
    %s133 = sphi 0, %s131
    %s134 = sphi 0, %s133
    %s148 = sphi 0, %s134
    %s152 = sphi 0, %s152
    %s154 = sphi 0, %s152
    %s155 = sphi 0, %s154
    %s169 = sphi 0, %s155
    %s175 = sphi 0, %s177
    %s178 = sphi 0, %s175
    %s179 = sphi 0, %s178
    %s195 = sphi 0, %s179
  $region4: #{dense_block.1} parent=0 // loop_header_branch
    %16 = sbr.rel (%p14) target = $region8
  $region5: #{dense_block.1} parent=0 // loop_body
    %s18 = ssub.s32 %s13, 1
    %s19 = ssub.s32 %s13, 2
    %s20 = sadd.s32 %s13, 1
    %s21 = ssub.s32 %s13, %s20
    %p22 = scmp.eq.s32.totalorder %s21, 0
    %s24 = sadd.s32 %s23, 1
    %s25 = scalar_select %p22, %s23, %s24
    %p28 = pneg %p22
    %p29 = scmp.eq.s32.totalorder %s13, 1
    %p30 = por %p28, %p29
    %p31 = scmp.ne.s32.totalorder %s23, %s26
    %p32 = scmp.eq.s32.totalorder %s13, 0
    %p33 = por %p31, %p32
    %p34 = scmp.ne.s32.totalorder %s23, %s26
    %p35 = scmp.eq.s32.totalorder %s18, 1
    %p36 = por %p34, %p35
    %p37 = scmp.ne.s32.totalorder %s26, %s27
    %p38 = scmp.eq.s32.totalorder %s18, 0
    %p39 = por %p37, %p38
    %p40 = scmp.ne.s32.totalorder %s26, %s27
    %p41 = scmp.eq.s32.totalorder %s19, 1
    %p42 = por %p40, %p41
    %p44 = scmp.ne.s32.totalorder %s27, %s43
    %p45 = scmp.eq.s32.totalorder %s19, 0
    %p46 = por %p44, %p45
    %s48 = sadd.s32 %s47, 1
    %p51 = scmp.eq.s32.totalorder %s13, 1
    %p52 = scmp.ne.s32.totalorder %s47, %s49
    %p53 = scmp.eq.s32.totalorder %s13, 0
    %p54 = por %p52, %p53
    %p55 = scmp.ne.s32.totalorder %s47, %s49
    %p56 = scmp.eq.s32.totalorder %s18, 1
    %p57 = por %p55, %p56
    %p58 = scmp.ne.s32.totalorder %s49, %s50
    %p59 = scmp.eq.s32.totalorder %s18, 0
    %p60 = por %p58, %p59
    %p61 = scmp.ne.s32.totalorder %s49, %s50
    %p62 = scmp.eq.s32.totalorder %s19, 1
    %p63 = por %p61, %p62
    %p65 = scmp.ne.s32.totalorder %s50, %s64
    %p66 = scmp.eq.s32.totalorder %s19, 0
    %p67 = por %p65, %p66
    %s69 = sadd.s32 %s68, 1
    %p72 = scmp.eq.s32.totalorder %s13, 1
    %p73 = scmp.ne.s32.totalorder %s68, %s70
    %p74 = scmp.eq.s32.totalorder %s13, 0
    %p75 = por %p73, %p74
    %p76 = scmp.ne.s32.totalorder %s68, %s70
    %p77 = scmp.eq.s32.totalorder %s18, 1
    %p78 = por %p76, %p77
    %p79 = scmp.ne.s32.totalorder %s70, %s71
    %p80 = scmp.eq.s32.totalorder %s18, 0
    %p81 = por %p79, %p80
    %p82 = scmp.ne.s32.totalorder %s70, %s71
    %p83 = scmp.eq.s32.totalorder %s19, 1
    %p84 = por %p82, %p83
    %p86 = scmp.ne.s32.totalorder %s71, %s85
    %p87 = scmp.eq.s32.totalorder %s19, 0
    %p88 = por %p86, %p87
    %s90 = sadd.s32 %s89, 1
    %p93 = scmp.eq.s32.totalorder %s13, 1
    %p94 = scmp.ne.s32.totalorder %s89, %s91
    %p95 = scmp.eq.s32.totalorder %s13, 0
    %p96 = por %p94, %p95
    %p97 = scmp.ne.s32.totalorder %s89, %s91
    %p98 = scmp.eq.s32.totalorder %s18, 1
    %p99 = por %p97, %p98
    %p100 = scmp.ne.s32.totalorder %s91, %s92
    %p101 = scmp.eq.s32.totalorder %s18, 0
    %p102 = por %p100, %p101
    %p103 = scmp.ne.s32.totalorder %s91, %s92
    %p104 = scmp.eq.s32.totalorder %s19, 1
    %p105 = por %p103, %p104
    %p107 = scmp.ne.s32.totalorder %s92, %s106
    %p108 = scmp.eq.s32.totalorder %s19, 0
    %p109 = por %p107, %p108
    %s111 = sadd.s32 %s110, 1
    %p114 = scmp.eq.s32.totalorder %s13, 1
    %p115 = scmp.ne.s32.totalorder %s110, %s112
    %p116 = scmp.eq.s32.totalorder %s13, 0
    %p117 = por %p115, %p116
    %p118 = scmp.ne.s32.totalorder %s110, %s112
    %p119 = scmp.eq.s32.totalorder %s18, 1
    %p120 = por %p118, %p119
    %p121 = scmp.ne.s32.totalorder %s112, %s113
    %p122 = scmp.eq.s32.totalorder %s18, 0
    %p123 = por %p121, %p122
    %p124 = scmp.ne.s32.totalorder %s112, %s113
    %p125 = scmp.eq.s32.totalorder %s19, 1
    %p126 = por %p124, %p125
    %p128 = scmp.ne.s32.totalorder %s113, %s127
    %p129 = scmp.eq.s32.totalorder %s19, 0
    %p130 = por %p128, %p129
    %s132 = sadd.s32 %s131, 1
    %p135 = scmp.eq.s32.totalorder %s13, 1
    %p136 = scmp.ne.s32.totalorder %s131, %s133
    %p137 = scmp.eq.s32.totalorder %s13, 0
    %p138 = por %p136, %p137
    %p139 = scmp.ne.s32.totalorder %s131, %s133
    %p140 = scmp.eq.s32.totalorder %s18, 1
    %p141 = por %p139, %p140
    %p142 = scmp.ne.s32.totalorder %s133, %s134
    %p143 = scmp.eq.s32.totalorder %s18, 0
    %p144 = por %p142, %p143
    %p145 = scmp.ne.s32.totalorder %s133, %s134
    %p146 = scmp.eq.s32.totalorder %s19, 1
    %p147 = por %p145, %p146
    %p149 = scmp.ne.s32.totalorder %s134, %s148
    %p150 = scmp.eq.s32.totalorder %s19, 0
    %p151 = por %p149, %p150
    %s153 = sadd.s32 %s152, 1
    %p156 = scmp.eq.s32.totalorder %s13, 1
    %p157 = scmp.ne.s32.totalorder %s152, %s154
    %p158 = scmp.eq.s32.totalorder %s13, 0
    %p159 = por %p157, %p158
    %p160 = scmp.ne.s32.totalorder %s152, %s154
    %p161 = scmp.eq.s32.totalorder %s18, 1
    %p162 = por %p160, %p161
    %p163 = scmp.ne.s32.totalorder %s154, %s155
    %p164 = scmp.eq.s32.totalorder %s18, 0
    %p165 = por %p163, %p164
    %p166 = scmp.ne.s32.totalorder %s154, %s155
    %p167 = scmp.eq.s32.totalorder %s19, 1
    %p168 = por %p166, %p167
    %p170 = scmp.ne.s32.totalorder %s155, %s169
    %p171 = scmp.eq.s32.totalorder %s19, 0
    %p172 = por %p170, %p171
    %s173 = ssub.s32 %s13, %s20
    %p174 = scmp.eq.s32.totalorder %s173, 0
    %s176 = sadd.s32 %s175, 1
    %s177 = scalar_select %p174, %s175, %s176
    %p180 = pneg %p174
    %p181 = scmp.eq.s32.totalorder %s13, 1
    %p182 = por %p180, %p181
    %p183 = scmp.ne.s32.totalorder %s175, %s178
    %p184 = scmp.eq.s32.totalorder %s13, 0
    %p185 = por %p183, %p184
    %p186 = scmp.ne.s32.totalorder %s175, %s178
    %p187 = scmp.eq.s32.totalorder %s18, 1
    %p188 = por %p186, %p187
    %p189 = scmp.ne.s32.totalorder %s178, %s179
    %p190 = scmp.eq.s32.totalorder %s18, 0
    %p191 = por %p189, %p190
    %p192 = scmp.ne.s32.totalorder %s178, %s179
    %p193 = scmp.eq.s32.totalorder %s19, 1
    %p194 = por %p192, %p193
    %p196 = scmp.ne.s32.totalorder %s179, %s195
    %p197 = scmp.eq.s32.totalorder %s19, 0
    %p198 = por %p196, %p197
    %p199 = scmp.le.s32.totalorder 1, %s13
    %p200 = scmp.lt.s32.totalorder %s13, 3
    %p201 = pnand %p199, %p200
    %p202 = pneg %p201
    // Predicated region
    $region9: #{dense_block.1} parent=5 // pred_check
      _
    $region10: #{dense_block.1} parent=5 // pred_check_branch
      %204 = sbr.rel (%p201) target = $region12
    $region11: #{dense_block.1} parent=5 // pred_region
      %s205 = ssub.s32 %s13, 1
      // Predicated region
      $region13: #{dense_block.1} parent=11 // pred_check
        %p206 = pneg %p60
      $region14: #{dense_block.1} parent=11 // pred_check_branch
        %208 = sbr.rel (%p206) target = $region16
      $region15: #{dense_block.1} parent=11 // pred_region
        _
      $region16: #{dense_block.1} parent=11 // pred_fallthru
        _
      // Predicated region
      $region17: #{dense_block.1} parent=11 // pred_check
        %p209 = pneg %p81
      $region18: #{dense_block.1} parent=11 // pred_check_branch
        %211 = sbr.rel (%p209) target = $region20
      $region19: #{dense_block.1} parent=11 // pred_region
        _
      $region20: #{dense_block.1} parent=11 // pred_fallthru
        _
      // Predicated region
      $region21: #{dense_block.1} parent=11 // pred_check
        %p212 = pneg %p102
      $region22: #{dense_block.1} parent=11 // pred_check_branch
        %214 = sbr.rel (%p212) target = $region24
      $region23: #{dense_block.1} parent=11 // pred_region
        _
      $region24: #{dense_block.1} parent=11 // pred_fallthru
        _
      // Predicated region
      $region25: #{dense_block.1} parent=11 // pred_check
        %p215 = pneg %p123
      $region26: #{dense_block.1} parent=11 // pred_check_branch
        %217 = sbr.rel (%p215) target = $region28
      $region27: #{dense_block.1} parent=11 // pred_region
        _
      $region28: #{dense_block.1} parent=11 // pred_fallthru
        _
      // Predicated region
      $region29: #{dense_block.1} parent=11 // pred_check
        %p218 = pneg %p144
      $region30: #{dense_block.1} parent=11 // pred_check_branch
        %220 = sbr.rel (%p218) target = $region32
      $region31: #{dense_block.1} parent=11 // pred_region
        _
      $region32: #{dense_block.1} parent=11 // pred_fallthru
        _
      // Predicated region
      $region33: #{dense_block.1} parent=11 // pred_check
        %p221 = pneg %p165
      $region34: #{dense_block.1} parent=11 // pred_check_branch
        %223 = sbr.rel (%p221) target = $region36
      $region35: #{dense_block.1} parent=11 // pred_region
        _
      $region36: #{dense_block.1} parent=11 // pred_fallthru
        _
    $region12: #{dense_block.1} parent=5 // pred_fallthru
      _
    %p224 = scmp.lt.s32.totalorder %s13, 2
    // Predicated region
    $region37: #{dense_block.1} parent=5 // pred_check
      %p225 = pneg %p224
    $region38: #{dense_block.1} parent=5 // pred_check_branch
      %227 = sbr.rel (%p225) target = $region40
    $region39: #{dense_block.1} parent=5 // pred_region
      // Predicated region
      $region41: #{dense_block.1} parent=39 // pred_check
        %p228 = pneg %p33
      $region42: #{dense_block.1} parent=39 // pred_check_branch
        %230 = sbr.rel (%p228) target = $region44
      $region43: #{dense_block.1} parent=39 // pred_region
        %p231 = scmp.lt.s32.totalorder %s13, 1
        %s232 = scalar_select %p231, %s13, 1
        %s233 = smul.addr %s232, 2
        %s234 = smul.addr %s233, 4
        %s235 = scalar_lea.vmem %s0, %s234
      $region44: #{dense_block.1} parent=39 // pred_fallthru
        _
    $region40: #{dense_block.1} parent=5 // pred_fallthru
      _
    %p236 = scmp.le.s32.totalorder 1, %s13
    %p237 = scmp.lt.s32.totalorder %s13, 3
    %p238 = pnand %p236, %p237
    %p239 = pneg %p238
    // Predicated region
    $region45: #{dense_block.1} parent=5 // pred_check
      _
    $region46: #{dense_block.1} parent=5 // pred_check_branch
      %241 = sbr.rel (%p238) target = $region48
    $region47: #{dense_block.1} parent=5 // pred_region
      %s242 = ssub.s32 %s13, 1
      %p243 = scmp.lt.s32.totalorder %s18, 1
      %s244 = scalar_select %p243, %s18, 1
      %s245 = smul.addr %s244, 2
      %s246 = smul.addr %s245, 4
      %s247 = scalar_lea.vmem %s0, %s246
      %p248 = pneg %p39
      %p249 = pneg %p36
      %p250 = pneg %p60
      %p251 = pneg %p57
      %p252 = pneg %p81
      %p253 = pneg %p78
      %p254 = pneg %p102
      %p255 = pneg %p99
      %p256 = pneg %p123
      %p257 = pneg %p120
      %p258 = pneg %p144
      %p259 = pneg %p141
      %p260 = pneg %p165
      %p261 = pneg %p162
      %p262 = pneg %p191
      %p263 = pneg %p188
      %p264 = scmp.lt.s32.totalorder %s18, 1
      %s265 = scalar_select %p264, %s18, 1
      %s266 = smul.addr %s265, 14
      %s267 = smul.addr %s266, 8
      %s268 = scalar_lea.vmem %s7, %s267
      %p269 = scmp.lt.s32.totalorder %s18, 1
      %s270 = scalar_select %p269, %s18, 1
      %s271 = smul.addr %s270, 2
      %s272 = smul.addr %s271, 4
      %s273 = scalar_lea.vmem %s0, %s272
      %p274 = scmp.lt.s32.totalorder %s18, 1
      %s275 = scalar_select %p274, %s18, 1
      %s276 = smul.addr %s275, 14
      %s277 = smul.addr %s276, 8
      %s278 = scalar_lea.vmem %s7, %s277
      %v279 = vld [vmem:[%s273] sm:$0xff]
      %v281 = vcombine.high %v279, %v279
      %283 = vst [vmem:[%s278] sm:$0xf] %v279
      %284 = vst [vmem:[%s278 + $0x8] sm:$0xf] %v281
      %v285 = vld [vmem:[%s273] sm:$0xff]
      %v287 = vcombine.high %v285, %v285
      %vm289 = vcmask 1043456
      %v290 = vsel %vm289, %v285, 0.0
      %v291 = vsel %vm289, %v287, 0.0
      %292 = vxpose.xlu0.b32.start [1/16] %v290, 128
      %293 = vxpose.xlu0.b32.cont [2/16] 0.0, 128
      %294 = vxpose.xlu0.b32.cont [3/16] 0.0, 128
      %295 = vxpose.xlu0.b32.cont [4/16] 0.0, 128
      %296 = vxpose.xlu0.b32.cont [5/16] 0.0, 128
      %297 = vxpose.xlu0.b32.cont [6/16] 0.0, 128
      %298 = vxpose.xlu0.b32.cont [7/16] 0.0, 128
      %299 = vxpose.xlu0.b32.cont [8/16] 0.0, 128
      %300 = vxpose.xlu0.b32.cont [9/16] 0.0, 128
      %301 = vxpose.xlu0.b32.cont [10/16] 0.0, 128
      %302 = vxpose.xlu0.b32.cont [11/16] 0.0, 128
      %303 = vxpose.xlu0.b32.cont [12/16] 0.0, 128
      %304 = vxpose.xlu0.b32.cont [13/16] 0.0, 128
      %305 = vxpose.xlu0.b32.cont [14/16] 0.0, 128
      %306 = vxpose.xlu0.b32.cont [15/16] 0.0, 128
      %307 = vxpose.xlu0.b32.end [16/16] 0.0, 128
      %v308 = vpop.trf.xlu0
      %v309 = vpop.trf.xlu0
      %v310 = vpop.trf.xlu0
      %v311 = vpop.trf.xlu0
      %v312 = vpop.trf.xlu0
      %v313 = vpop.trf.xlu0
      %v314 = vpop.trf.xlu0
      %v315 = vpop.trf.xlu0
      %v316 = vpop.trf.xlu0
      %v317 = vpop.trf.xlu0
      %v318 = vpop.trf.xlu0
      %v319 = vpop.trf.xlu0
      %v320 = vpop.trf.xlu0
      %v321 = vpop.trf.xlu0
      %v322 = vpop.trf.xlu0
      %v323 = vpop.trf.xlu0
      %324 = vxpose.xlu0.b32.start [1/16] %v291, 128
      %325 = vxpose.xlu0.b32.cont [2/16] 0.0, 128
      %326 = vxpose.xlu0.b32.cont [3/16] 0.0, 128
      %327 = vxpose.xlu0.b32.cont [4/16] 0.0, 128
      %328 = vxpose.xlu0.b32.cont [5/16] 0.0, 128
      %329 = vxpose.xlu0.b32.cont [6/16] 0.0, 128
      %330 = vxpose.xlu0.b32.cont [7/16] 0.0, 128
      %331 = vxpose.xlu0.b32.cont [8/16] 0.0, 128
      %332 = vxpose.xlu0.b32.cont [9/16] 0.0, 128
      %333 = vxpose.xlu0.b32.cont [10/16] 0.0, 128
      %334 = vxpose.xlu0.b32.cont [11/16] 0.0, 128
      %335 = vxpose.xlu0.b32.cont [12/16] 0.0, 128
      %336 = vxpose.xlu0.b32.cont [13/16] 0.0, 128
      %337 = vxpose.xlu0.b32.cont [14/16] 0.0, 128
      %338 = vxpose.xlu0.b32.cont [15/16] 0.0, 128
      %339 = vxpose.xlu0.b32.end [16/16] 0.0, 128
      %v340 = vpop.trf.xlu0
      %v341 = vpop.trf.xlu0
      %v342 = vpop.trf.xlu0
      %v343 = vpop.trf.xlu0
      %v344 = vpop.trf.xlu0
      %v345 = vpop.trf.xlu0
      %v346 = vpop.trf.xlu0
      %v347 = vpop.trf.xlu0
      %v348 = vpop.trf.xlu0
      %v349 = vpop.trf.xlu0
      %v350 = vpop.trf.xlu0
      %v351 = vpop.trf.xlu0
      %v352 = vpop.trf.xlu0
      %v353 = vpop.trf.xlu0
      %v354 = vpop.trf.xlu0
      %v355 = vpop.trf.xlu0
      %v372 = vrot.slane %v310, 1
      %v373 = vrot.slane %v308, 1
      %v374 = vrot.slane %v312, 1
      %v375 = vrot.slane %v314, 1
      %v376 = vrot.slane %v316, 1
      %v377 = vrot.slane %v318, 1
      %v378 = vrot.slane %v320, 1
      %v379 = vrot.slane %v322, 1
      %v380 = vrot.slane %v340, 1
      %v381 = vrot.slane %v342, 1
      %v382 = vrot.slane %v344, 1
      %v383 = vrot.slane %v346, 1
      %v384 = vrot.slane %v348, 1
      %v385 = vrot.slane %v350, 1
      %v386 = vrot.slane %v352, 1
      %v387 = vrot.slane %v354, 1
      %vm420 = vcmask 1040384
      %v421 = vrot.slane %v310, 7
      %v422 = vrot.slane %v311, 7
      %v423 = vsel %vm420, %v421, %v422
      %v424 = vrot.slane %v308, 7
      %v425 = vrot.slane %v309, 7
      %v426 = vsel %vm420, %v424, %v425
      %v427 = vrot.slane %v312, 7
      %v428 = vrot.slane %v313, 7
      %v429 = vsel %vm420, %v427, %v428
      %v430 = vrot.slane %v314, 7
      %v431 = vrot.slane %v315, 7
      %v432 = vsel %vm420, %v430, %v431
      %v433 = vrot.slane %v316, 7
      %v434 = vrot.slane %v317, 7
      %v435 = vsel %vm420, %v433, %v434
      %v436 = vrot.slane %v318, 7
      %v437 = vrot.slane %v319, 7
      %v438 = vsel %vm420, %v436, %v437
      %v439 = vrot.slane %v320, 7
      %v440 = vrot.slane %v321, 7
      %v441 = vsel %vm420, %v439, %v440
      %v442 = vrot.slane %v322, 7
      %v443 = vrot.slane %v323, 7
      %v444 = vsel %vm420, %v442, %v443
      %v445 = vrot.slane %v340, 7
      %v446 = vrot.slane %v341, 7
      %v447 = vsel %vm420, %v445, %v446
      %v448 = vrot.slane %v342, 7
      %v449 = vrot.slane %v343, 7
      %v450 = vsel %vm420, %v448, %v449
      %v451 = vrot.slane %v344, 7
      %v452 = vrot.slane %v345, 7
      %v453 = vsel %vm420, %v451, %v452
      %v454 = vrot.slane %v346, 7
      %v455 = vrot.slane %v347, 7
      %v456 = vsel %vm420, %v454, %v455
      %v457 = vrot.slane %v348, 7
      %v458 = vrot.slane %v349, 7
      %v459 = vsel %vm420, %v457, %v458
      %v460 = vrot.slane %v350, 7
      %v461 = vrot.slane %v351, 7
      %v462 = vsel %vm420, %v460, %v461
      %v463 = vrot.slane %v352, 7
      %v464 = vrot.slane %v353, 7
      %v465 = vsel %vm420, %v463, %v464
      %v466 = vrot.slane %v354, 7
      %v467 = vrot.slane %v355, 7
      %v468 = vsel %vm420, %v466, %v467
      %v516 = vrot.slane %v311, 5
      %v517 = vrot.slane %v309, 5
      %v518 = vrot.slane %v313, 5
      %v519 = vrot.slane %v315, 5
      %v520 = vrot.slane %v317, 5
      %v521 = vrot.slane %v319, 5
      %v522 = vrot.slane %v321, 5
      %v523 = vrot.slane %v323, 5
      %v524 = vrot.slane %v341, 5
      %v525 = vrot.slane %v343, 5
      %v526 = vrot.slane %v345, 5
      %v527 = vrot.slane %v347, 5
      %v528 = vrot.slane %v349, 5
      %v529 = vrot.slane %v351, 5
      %v530 = vrot.slane %v353, 5
      %v531 = vrot.slane %v355, 5
      %v548 = vsel %vm420, %v372, %v421
      %v549 = vsel %vm420, %v373, %v424
      %v550 = vsel %vm420, %v374, %v427
      %v551 = vsel %vm420, %v375, %v430
      %v552 = vsel %vm420, %v376, %v433
      %v553 = vsel %vm420, %v377, %v436
      %v554 = vsel %vm420, %v378, %v439
      %v555 = vsel %vm420, %v379, %v442
      %v556 = vsel %vm420, %v380, %v445
      %v557 = vsel %vm420, %v381, %v448
      %v558 = vsel %vm420, %v382, %v451
      %v559 = vsel %vm420, %v383, %v454
      %v560 = vsel %vm420, %v384, %v457
      %v561 = vsel %vm420, %v385, %v460
      %v562 = vsel %vm420, %v386, %v463
      %v563 = vsel %vm420, %v387, %v466
      %v564 = vsel %vm420, %v422, %v516
      %v565 = vsel %vm420, %v425, %v517
      %v566 = vsel %vm420, %v428, %v518
      %v567 = vsel %vm420, %v431, %v519
      %v568 = vsel %vm420, %v434, %v520
      %v569 = vsel %vm420, %v437, %v521
      %v570 = vsel %vm420, %v440, %v522
      %v571 = vsel %vm420, %v443, %v523
      %v572 = vsel %vm420, %v446, %v524
      %v573 = vsel %vm420, %v449, %v525
      %v574 = vsel %vm420, %v452, %v526
      %v575 = vsel %vm420, %v455, %v527
      %v576 = vsel %vm420, %v458, %v528
      %v577 = vsel %vm420, %v461, %v529
      %v578 = vsel %vm420, %v464, %v530
      %v579 = vsel %vm420, %v467, %v531
      %vm610 = vcmask 1046528
      %v611 = vrot.slane %v548, 1
      %v612 = vrot.slane %v423, 1
      %v613 = vsel %vm610, %v611, %v612
      %v614 = vrot.slane %v564, 1
      %v615 = vsel %vm610, %v612, %v614
      %v616 = vrot.slane %v549, 1
      %v617 = vrot.slane %v426, 1
      %v618 = vsel %vm610, %v616, %v617
      %v619 = vrot.slane %v565, 1
      %v620 = vsel %vm610, %v617, %v619
      %v621 = vrot.slane %v550, 1
      %v622 = vrot.slane %v429, 1
      %v623 = vsel %vm610, %v621, %v622
      %v624 = vrot.slane %v566, 1
      %v625 = vsel %vm610, %v622, %v624
      %v626 = vrot.slane %v551, 1
      %v627 = vrot.slane %v432, 1
      %v628 = vsel %vm610, %v626, %v627
      %v629 = vrot.slane %v567, 1
      %v630 = vsel %vm610, %v627, %v629
      %v631 = vrot.slane %v552, 1
      %v632 = vrot.slane %v435, 1
      %v633 = vsel %vm610, %v631, %v632
      %v634 = vrot.slane %v568, 1
      %v635 = vsel %vm610, %v632, %v634
      %v636 = vrot.slane %v553, 1
      %v637 = vrot.slane %v438, 1
      %v638 = vsel %vm610, %v636, %v637
      %v639 = vrot.slane %v569, 1
      %v640 = vsel %vm610, %v637, %v639
      %v641 = vrot.slane %v554, 1
      %v642 = vrot.slane %v441, 1
      %v643 = vsel %vm610, %v641, %v642
      %v644 = vrot.slane %v570, 1
      %v645 = vsel %vm610, %v642, %v644
      %v646 = vrot.slane %v555, 1
      %v647 = vrot.slane %v444, 1
      %v648 = vsel %vm610, %v646, %v647
      %v649 = vrot.slane %v571, 1
      %v650 = vsel %vm610, %v647, %v649
      %v651 = vrot.slane %v556, 1
      %v652 = vrot.slane %v447, 1
      %v653 = vsel %vm610, %v651, %v652
      %v654 = vrot.slane %v572, 1
      %v655 = vsel %vm610, %v652, %v654
      %v656 = vrot.slane %v557, 1
      %v657 = vrot.slane %v450, 1
      %v658 = vsel %vm610, %v656, %v657
      %v659 = vrot.slane %v573, 1
      %v660 = vsel %vm610, %v657, %v659
      %v661 = vrot.slane %v558, 1
      %v662 = vrot.slane %v453, 1
      %v663 = vsel %vm610, %v661, %v662
      %v664 = vrot.slane %v574, 1
      %v665 = vsel %vm610, %v662, %v664
      %v666 = vrot.slane %v559, 1
      %v667 = vrot.slane %v456, 1
      %v668 = vsel %vm610, %v666, %v667
      %v669 = vrot.slane %v575, 1
      %v670 = vsel %vm610, %v667, %v669
      %v671 = vrot.slane %v560, 1
      %v672 = vrot.slane %v459, 1
      %v673 = vsel %vm610, %v671, %v672
      %v674 = vrot.slane %v576, 1
      %v675 = vsel %vm610, %v672, %v674
      %v676 = vrot.slane %v561, 1
      %v677 = vrot.slane %v462, 1
      %v678 = vsel %vm610, %v676, %v677
      %v679 = vrot.slane %v577, 1
      %v680 = vsel %vm610, %v677, %v679
      %v681 = vrot.slane %v562, 1
      %v682 = vrot.slane %v465, 1
      %v683 = vsel %vm610, %v681, %v682
      %v684 = vrot.slane %v578, 1
      %v685 = vsel %vm610, %v682, %v684
      %vm686 = vcmask 1045504
      %v687 = vrot.slane %v548, 2
      %v688 = vrot.slane %v423, 2
      %v689 = vsel %vm686, %v687, %v688
      %v690 = vrot.slane %v564, 2
      %v691 = vsel %vm686, %v688, %v690
      %v692 = vrot.slane %v549, 2
      %v693 = vrot.slane %v426, 2
      %v694 = vsel %vm686, %v692, %v693
      %v695 = vrot.slane %v565, 2
      %v696 = vsel %vm686, %v693, %v695
      %v697 = vrot.slane %v550, 2
      %v698 = vrot.slane %v429, 2
      %v699 = vsel %vm686, %v697, %v698
      %v700 = vrot.slane %v566, 2
      %v701 = vsel %vm686, %v698, %v700
      %v702 = vrot.slane %v551, 2
      %v703 = vrot.slane %v432, 2
      %v704 = vsel %vm686, %v702, %v703
      %v705 = vrot.slane %v567, 2
      %v706 = vsel %vm686, %v703, %v705
      %v707 = vrot.slane %v552, 2
      %v708 = vrot.slane %v435, 2
      %v709 = vsel %vm686, %v707, %v708
      %v710 = vrot.slane %v568, 2
      %v711 = vsel %vm686, %v708, %v710
      %v712 = vrot.slane %v553, 2
      %v713 = vrot.slane %v438, 2
      %v714 = vsel %vm686, %v712, %v713
      %v715 = vrot.slane %v569, 2
      %v716 = vsel %vm686, %v713, %v715
      %v717 = vrot.slane %v554, 2
      %v718 = vrot.slane %v441, 2
      %v719 = vsel %vm686, %v717, %v718
      %v720 = vrot.slane %v570, 2
      %v721 = vsel %vm686, %v718, %v720
      %v722 = vrot.slane %v555, 2
      %v723 = vrot.slane %v444, 2
      %v724 = vsel %vm686, %v722, %v723
      %v725 = vrot.slane %v571, 2
      %v726 = vsel %vm686, %v723, %v725
      %v727 = vrot.slane %v556, 2
      %v728 = vrot.slane %v447, 2
      %v729 = vsel %vm686, %v727, %v728
      %v730 = vrot.slane %v572, 2
      %v731 = vsel %vm686, %v728, %v730
      %v732 = vrot.slane %v557, 2
      %v733 = vrot.slane %v450, 2
      %v734 = vsel %vm686, %v732, %v733
      %v735 = vrot.slane %v573, 2
      %v736 = vsel %vm686, %v733, %v735
      %v737 = vrot.slane %v558, 2
      %v738 = vrot.slane %v453, 2
      %v739 = vsel %vm686, %v737, %v738
      %v740 = vrot.slane %v574, 2
      %v741 = vsel %vm686, %v738, %v740
      %v742 = vrot.slane %v559, 2
      %v743 = vrot.slane %v456, 2
      %v744 = vsel %vm686, %v742, %v743
      %v745 = vrot.slane %v575, 2
      %v746 = vsel %vm686, %v743, %v745
      %v747 = vrot.slane %v560, 2
      %v748 = vrot.slane %v459, 2
      %v749 = vsel %vm686, %v747, %v748
      %v750 = vrot.slane %v576, 2
      %v751 = vsel %vm686, %v748, %v750
      %v752 = vrot.slane %v561, 2
      %v753 = vrot.slane %v462, 2
      %v754 = vsel %vm686, %v752, %v753
      %v755 = vrot.slane %v577, 2
      %v756 = vsel %vm686, %v753, %v755
      %v757 = vrot.slane %v562, 2
      %v758 = vrot.slane %v465, 2
      %v759 = vsel %vm686, %v757, %v758
      %v760 = vrot.slane %v578, 2
      %v761 = vsel %vm686, %v758, %v760
      %v764 = vrot.slane %v563, 1
      %v765 = vrot.slane %v468, 1
      %v766 = vsel %vm610, %v764, %v765
      %v767 = vrot.slane %v579, 1
      %v768 = vsel %vm610, %v765, %v767
      %v769 = vrot.slane %v563, 2
      %v770 = vrot.slane %v468, 2
      %v771 = vsel %vm686, %v769, %v770
      %v772 = vrot.slane %v579, 2
      %v773 = vsel %vm686, %v770, %v772
      %774 = vrot.lane.b32.xlu0 %v613, 4
      %v775 = vpop.permute.xlu0 %774
      %776 = vrot.lane.b32.xlu0 %v615, 4
      %v777 = vpop.permute.xlu0 %776
      %778 = vrot.lane.b32.xlu0 %v618, 4
      %v779 = vpop.permute.xlu0 %778
      %780 = vrot.lane.b32.xlu0 %v620, 4
      %v781 = vpop.permute.xlu0 %780
      %782 = vrot.lane.b32.xlu0 %v623, 4
      %v783 = vpop.permute.xlu0 %782
      %784 = vrot.lane.b32.xlu0 %v625, 4
      %v785 = vpop.permute.xlu0 %784
      %786 = vrot.lane.b32.xlu0 %v628, 4
      %v787 = vpop.permute.xlu0 %786
      %788 = vrot.lane.b32.xlu0 %v630, 4
      %v789 = vpop.permute.xlu0 %788
      %790 = vrot.lane.b32.xlu0 %v633, 4
      %v791 = vpop.permute.xlu0 %790
      %792 = vrot.lane.b32.xlu0 %v635, 4
      %v793 = vpop.permute.xlu0 %792
      %794 = vrot.lane.b32.xlu0 %v638, 4
      %v795 = vpop.permute.xlu0 %794
      %796 = vrot.lane.b32.xlu0 %v640, 4
      %v797 = vpop.permute.xlu0 %796
      %798 = vrot.lane.b32.xlu0 %v643, 4
      %v799 = vpop.permute.xlu0 %798
      %800 = vrot.lane.b32.xlu0 %v645, 4
      %v801 = vpop.permute.xlu0 %800
      %802 = vrot.lane.b32.xlu0 %v648, 4
      %v803 = vpop.permute.xlu0 %802
      %804 = vrot.lane.b32.xlu0 %v650, 4
      %v805 = vpop.permute.xlu0 %804
      %806 = vrot.lane.b32.xlu0 %v653, 4
      %v807 = vpop.permute.xlu0 %806
      %808 = vrot.lane.b32.xlu0 %v655, 4
      %v809 = vpop.permute.xlu0 %808
      %810 = vrot.lane.b32.xlu0 %v658, 4
      %v811 = vpop.permute.xlu0 %810
      %812 = vrot.lane.b32.xlu0 %v660, 4
      %v813 = vpop.permute.xlu0 %812
      %814 = vrot.lane.b32.xlu0 %v663, 4
      %v815 = vpop.permute.xlu0 %814
      %816 = vrot.lane.b32.xlu0 %v665, 4
      %v817 = vpop.permute.xlu0 %816
      %818 = vrot.lane.b32.xlu0 %v668, 4
      %v819 = vpop.permute.xlu0 %818
      %820 = vrot.lane.b32.xlu0 %v670, 4
      %v821 = vpop.permute.xlu0 %820
      %822 = vrot.lane.b32.xlu0 %v673, 4
      %v823 = vpop.permute.xlu0 %822
      %824 = vrot.lane.b32.xlu0 %v675, 4
      %v825 = vpop.permute.xlu0 %824
      %826 = vrot.lane.b32.xlu0 %v678, 4
      %v827 = vpop.permute.xlu0 %826
      %828 = vrot.lane.b32.xlu0 %v680, 4
      %v829 = vpop.permute.xlu0 %828
      %830 = vrot.lane.b32.xlu0 %v683, 4
      %v831 = vpop.permute.xlu0 %830
      %832 = vrot.lane.b32.xlu0 %v685, 4
      %v833 = vpop.permute.xlu0 %832
      %864 = vrot.lane.b32.xlu0 %v689, 8
      %v865 = vpop.permute.xlu0 %864
      %866 = vrot.lane.b32.xlu0 %v691, 8
      %v867 = vpop.permute.xlu0 %866
      %868 = vrot.lane.b32.xlu0 %v694, 8
      %v869 = vpop.permute.xlu0 %868
      %870 = vrot.lane.b32.xlu0 %v696, 8
      %v871 = vpop.permute.xlu0 %870
      %872 = vrot.lane.b32.xlu0 %v699, 8
      %v873 = vpop.permute.xlu0 %872
      %874 = vrot.lane.b32.xlu0 %v701, 8
      %v875 = vpop.permute.xlu0 %874
      %876 = vrot.lane.b32.xlu0 %v704, 8
      %v877 = vpop.permute.xlu0 %876
      %878 = vrot.lane.b32.xlu0 %v706, 8
      %v879 = vpop.permute.xlu0 %878
      %880 = vrot.lane.b32.xlu0 %v709, 8
      %v881 = vpop.permute.xlu0 %880
      %882 = vrot.lane.b32.xlu0 %v711, 8
      %v883 = vpop.permute.xlu0 %882
      %884 = vrot.lane.b32.xlu0 %v714, 8
      %v885 = vpop.permute.xlu0 %884
      %886 = vrot.lane.b32.xlu0 %v716, 8
      %v887 = vpop.permute.xlu0 %886
      %888 = vrot.lane.b32.xlu0 %v719, 8
      %v889 = vpop.permute.xlu0 %888
      %890 = vrot.lane.b32.xlu0 %v721, 8
      %v891 = vpop.permute.xlu0 %890
      %892 = vrot.lane.b32.xlu0 %v724, 8
      %v893 = vpop.permute.xlu0 %892
      %894 = vrot.lane.b32.xlu0 %v726, 8
      %v895 = vpop.permute.xlu0 %894
      %896 = vrot.lane.b32.xlu0 %v729, 8
      %v897 = vpop.permute.xlu0 %896
      %898 = vrot.lane.b32.xlu0 %v731, 8
      %v899 = vpop.permute.xlu0 %898
      %900 = vrot.lane.b32.xlu0 %v734, 8
      %v901 = vpop.permute.xlu0 %900
      %902 = vrot.lane.b32.xlu0 %v736, 8
      %v903 = vpop.permute.xlu0 %902
      %904 = vrot.lane.b32.xlu0 %v739, 8
      %v905 = vpop.permute.xlu0 %904
      %906 = vrot.lane.b32.xlu0 %v741, 8
      %v907 = vpop.permute.xlu0 %906
      %908 = vrot.lane.b32.xlu0 %v744, 8
      %v909 = vpop.permute.xlu0 %908
      %910 = vrot.lane.b32.xlu0 %v746, 8
      %v911 = vpop.permute.xlu0 %910
      %912 = vrot.lane.b32.xlu0 %v749, 8
      %v913 = vpop.permute.xlu0 %912
      %914 = vrot.lane.b32.xlu0 %v751, 8
      %v915 = vpop.permute.xlu0 %914
      %916 = vrot.lane.b32.xlu0 %v754, 8
      %v917 = vpop.permute.xlu0 %916
      %918 = vrot.lane.b32.xlu0 %v756, 8
      %v919 = vpop.permute.xlu0 %918
      %920 = vrot.lane.b32.xlu0 %v759, 8
      %v921 = vpop.permute.xlu0 %920
      %922 = vrot.lane.b32.xlu0 %v761, 8
      %v923 = vpop.permute.xlu0 %922
      %954 = vrot.lane.b32.xlu0 %v549, 12
      %v955 = vpop.permute.xlu0 %954
      %956 = vrot.lane.b32.xlu0 %v426, 12
      %v957 = vpop.permute.xlu0 %956
      %958 = vrot.lane.b32.xlu0 %v548, 12
      %v959 = vpop.permute.xlu0 %958
      %960 = vrot.lane.b32.xlu0 %v423, 12
      %v961 = vpop.permute.xlu0 %960
      %962 = vrot.lane.b32.xlu0 %v550, 12
      %v963 = vpop.permute.xlu0 %962
      %964 = vrot.lane.b32.xlu0 %v429, 12
      %v965 = vpop.permute.xlu0 %964
      %966 = vrot.lane.b32.xlu0 %v551, 12
      %v967 = vpop.permute.xlu0 %966
      %968 = vrot.lane.b32.xlu0 %v432, 12
      %v969 = vpop.permute.xlu0 %968
      %970 = vrot.lane.b32.xlu0 %v552, 12
      %v971 = vpop.permute.xlu0 %970
      %972 = vrot.lane.b32.xlu0 %v435, 12
      %v973 = vpop.permute.xlu0 %972
      %974 = vrot.lane.b32.xlu0 %v553, 12
      %v975 = vpop.permute.xlu0 %974
      %976 = vrot.lane.b32.xlu0 %v438, 12
      %v977 = vpop.permute.xlu0 %976
      %978 = vrot.lane.b32.xlu0 %v554, 12
      %v979 = vpop.permute.xlu0 %978
      %980 = vrot.lane.b32.xlu0 %v441, 12
      %v981 = vpop.permute.xlu0 %980
      %982 = vrot.lane.b32.xlu0 %v555, 12
      %v983 = vpop.permute.xlu0 %982
      %984 = vrot.lane.b32.xlu0 %v444, 12
      %v985 = vpop.permute.xlu0 %984
      %986 = vrot.lane.b32.xlu0 %v556, 12
      %v987 = vpop.permute.xlu0 %986
      %988 = vrot.lane.b32.xlu0 %v447, 12
      %v989 = vpop.permute.xlu0 %988
      %990 = vrot.lane.b32.xlu0 %v557, 12
      %v991 = vpop.permute.xlu0 %990
      %992 = vrot.lane.b32.xlu0 %v450, 12
      %v993 = vpop.permute.xlu0 %992
      %994 = vrot.lane.b32.xlu0 %v558, 12
      %v995 = vpop.permute.xlu0 %994
      %996 = vrot.lane.b32.xlu0 %v453, 12
      %v997 = vpop.permute.xlu0 %996
      %998 = vrot.lane.b32.xlu0 %v559, 12
      %v999 = vpop.permute.xlu0 %998
      %1000 = vrot.lane.b32.xlu0 %v456, 12
      %v1001 = vpop.permute.xlu0 %1000
      %1002 = vrot.lane.b32.xlu0 %v560, 12
      %v1003 = vpop.permute.xlu0 %1002
      %1004 = vrot.lane.b32.xlu0 %v459, 12
      %v1005 = vpop.permute.xlu0 %1004
      %1006 = vrot.lane.b32.xlu0 %v561, 12
      %v1007 = vpop.permute.xlu0 %1006
      %1008 = vrot.lane.b32.xlu0 %v462, 12
      %v1009 = vpop.permute.xlu0 %1008
      %1010 = vrot.lane.b32.xlu0 %v562, 12
      %v1011 = vpop.permute.xlu0 %1010
      %1012 = vrot.lane.b32.xlu0 %v465, 12
      %v1013 = vpop.permute.xlu0 %1012
      %1014 = vrot.lane.b32.xlu0 %v563, 12
      %v1015 = vpop.permute.xlu0 %1014
      %1016 = vrot.lane.b32.xlu0 %v468, 12
      %v1017 = vpop.permute.xlu0 %1016
      %1050 = vrot.lane.b32.xlu0 %v618, 16
      %v1051 = vpop.permute.xlu0 %1050
      %1052 = vrot.lane.b32.xlu0 %v620, 16
      %v1053 = vpop.permute.xlu0 %1052
      %1054 = vrot.lane.b32.xlu0 %v613, 16
      %v1055 = vpop.permute.xlu0 %1054
      %1056 = vrot.lane.b32.xlu0 %v615, 16
      %v1057 = vpop.permute.xlu0 %1056
      %1058 = vrot.lane.b32.xlu0 %v623, 16
      %v1059 = vpop.permute.xlu0 %1058
      %1060 = vrot.lane.b32.xlu0 %v625, 16
      %v1061 = vpop.permute.xlu0 %1060
      %1062 = vrot.lane.b32.xlu0 %v628, 16
      %v1063 = vpop.permute.xlu0 %1062
      %1064 = vrot.lane.b32.xlu0 %v630, 16
      %v1065 = vpop.permute.xlu0 %1064
      %1066 = vrot.lane.b32.xlu0 %v633, 16
      %v1067 = vpop.permute.xlu0 %1066
      %1068 = vrot.lane.b32.xlu0 %v635, 16
      %v1069 = vpop.permute.xlu0 %1068
      %1070 = vrot.lane.b32.xlu0 %v638, 16
      %v1071 = vpop.permute.xlu0 %1070
      %1072 = vrot.lane.b32.xlu0 %v640, 16
      %v1073 = vpop.permute.xlu0 %1072
      %1074 = vrot.lane.b32.xlu0 %v643, 16
      %v1075 = vpop.permute.xlu0 %1074
      %1076 = vrot.lane.b32.xlu0 %v645, 16
      %v1077 = vpop.permute.xlu0 %1076
      %1078 = vrot.lane.b32.xlu0 %v648, 16
      %v1079 = vpop.permute.xlu0 %1078
      %1080 = vrot.lane.b32.xlu0 %v650, 16
      %v1081 = vpop.permute.xlu0 %1080
      %1082 = vrot.lane.b32.xlu0 %v653, 16
      %v1083 = vpop.permute.xlu0 %1082
      %1084 = vrot.lane.b32.xlu0 %v655, 16
      %v1085 = vpop.permute.xlu0 %1084
      %1086 = vrot.lane.b32.xlu0 %v658, 16
      %v1087 = vpop.permute.xlu0 %1086
      %1088 = vrot.lane.b32.xlu0 %v660, 16
      %v1089 = vpop.permute.xlu0 %1088
      %1090 = vrot.lane.b32.xlu0 %v663, 16
      %v1091 = vpop.permute.xlu0 %1090
      %1092 = vrot.lane.b32.xlu0 %v665, 16
      %v1093 = vpop.permute.xlu0 %1092
      %1094 = vrot.lane.b32.xlu0 %v668, 16
      %v1095 = vpop.permute.xlu0 %1094
      %1096 = vrot.lane.b32.xlu0 %v670, 16
      %v1097 = vpop.permute.xlu0 %1096
      %1098 = vrot.lane.b32.xlu0 %v673, 16
      %v1099 = vpop.permute.xlu0 %1098
      %1100 = vrot.lane.b32.xlu0 %v675, 16
      %v1101 = vpop.permute.xlu0 %1100
      %1102 = vrot.lane.b32.xlu0 %v678, 16
      %v1103 = vpop.permute.xlu0 %1102
      %1104 = vrot.lane.b32.xlu0 %v680, 16
      %v1105 = vpop.permute.xlu0 %1104
      %1106 = vrot.lane.b32.xlu0 %v683, 16
      %v1107 = vpop.permute.xlu0 %1106
      %1108 = vrot.lane.b32.xlu0 %v685, 16
      %v1109 = vpop.permute.xlu0 %1108
      %1110 = vrot.lane.b32.xlu0 %v766, 16
      %v1111 = vpop.permute.xlu0 %1110
      %1112 = vrot.lane.b32.xlu0 %v768, 16
      %v1113 = vpop.permute.xlu0 %1112
      %1146 = vrot.lane.b32.xlu0 %v694, 20
      %v1147 = vpop.permute.xlu0 %1146
      %1148 = vrot.lane.b32.xlu0 %v696, 20
      %v1149 = vpop.permute.xlu0 %1148
      %1150 = vrot.lane.b32.xlu0 %v689, 20
      %v1151 = vpop.permute.xlu0 %1150
      %1152 = vrot.lane.b32.xlu0 %v691, 20
      %v1153 = vpop.permute.xlu0 %1152
      %1154 = vrot.lane.b32.xlu0 %v699, 20
      %v1155 = vpop.permute.xlu0 %1154
      %1156 = vrot.lane.b32.xlu0 %v701, 20
      %v1157 = vpop.permute.xlu0 %1156
      %1158 = vrot.lane.b32.xlu0 %v704, 20
      %v1159 = vpop.permute.xlu0 %1158
      %1160 = vrot.lane.b32.xlu0 %v706, 20
      %v1161 = vpop.permute.xlu0 %1160
      %1162 = vrot.lane.b32.xlu0 %v709, 20
      %v1163 = vpop.permute.xlu0 %1162
      %1164 = vrot.lane.b32.xlu0 %v711, 20
      %v1165 = vpop.permute.xlu0 %1164
      %1166 = vrot.lane.b32.xlu0 %v714, 20
      %v1167 = vpop.permute.xlu0 %1166
      %1168 = vrot.lane.b32.xlu0 %v716, 20
      %v1169 = vpop.permute.xlu0 %1168
      %1170 = vrot.lane.b32.xlu0 %v719, 20
      %v1171 = vpop.permute.xlu0 %1170
      %1172 = vrot.lane.b32.xlu0 %v721, 20
      %v1173 = vpop.permute.xlu0 %1172
      %1174 = vrot.lane.b32.xlu0 %v724, 20
      %v1175 = vpop.permute.xlu0 %1174
      %1176 = vrot.lane.b32.xlu0 %v726, 20
      %v1177 = vpop.permute.xlu0 %1176
      %1178 = vrot.lane.b32.xlu0 %v729, 20
      %v1179 = vpop.permute.xlu0 %1178
      %1180 = vrot.lane.b32.xlu0 %v731, 20
      %v1181 = vpop.permute.xlu0 %1180
      %1182 = vrot.lane.b32.xlu0 %v734, 20
      %v1183 = vpop.permute.xlu0 %1182
      %1184 = vrot.lane.b32.xlu0 %v736, 20
      %v1185 = vpop.permute.xlu0 %1184
      %1186 = vrot.lane.b32.xlu0 %v739, 20
      %v1187 = vpop.permute.xlu0 %1186
      %1188 = vrot.lane.b32.xlu0 %v741, 20
      %v1189 = vpop.permute.xlu0 %1188
      %1190 = vrot.lane.b32.xlu0 %v744, 20
      %v1191 = vpop.permute.xlu0 %1190
      %1192 = vrot.lane.b32.xlu0 %v746, 20
      %v1193 = vpop.permute.xlu0 %1192
      %1194 = vrot.lane.b32.xlu0 %v749, 20
      %v1195 = vpop.permute.xlu0 %1194
      %1196 = vrot.lane.b32.xlu0 %v751, 20
      %v1197 = vpop.permute.xlu0 %1196
      %1198 = vrot.lane.b32.xlu0 %v754, 20
      %v1199 = vpop.permute.xlu0 %1198
      %1200 = vrot.lane.b32.xlu0 %v756, 20
      %v1201 = vpop.permute.xlu0 %1200
      %1202 = vrot.lane.b32.xlu0 %v759, 20
      %v1203 = vpop.permute.xlu0 %1202
      %1204 = vrot.lane.b32.xlu0 %v761, 20
      %v1205 = vpop.permute.xlu0 %1204
      %1206 = vrot.lane.b32.xlu0 %v771, 20
      %v1207 = vpop.permute.xlu0 %1206
      %1208 = vrot.lane.b32.xlu0 %v773, 20
      %v1209 = vpop.permute.xlu0 %1208
      %1242 = vrot.lane.b32.xlu0 %v548, 24
      %v1243 = vpop.permute.xlu0 %1242
      %1244 = vrot.lane.b32.xlu0 %v423, 24
      %v1245 = vpop.permute.xlu0 %1244
      %1246 = vrot.lane.b32.xlu0 %v550, 24
      %v1247 = vpop.permute.xlu0 %1246
      %1248 = vrot.lane.b32.xlu0 %v429, 24
      %v1249 = vpop.permute.xlu0 %1248
      %1250 = vrot.lane.b32.xlu0 %v551, 24
      %v1251 = vpop.permute.xlu0 %1250
      %1252 = vrot.lane.b32.xlu0 %v432, 24
      %v1253 = vpop.permute.xlu0 %1252
      %1254 = vrot.lane.b32.xlu0 %v552, 24
      %v1255 = vpop.permute.xlu0 %1254
      %1256 = vrot.lane.b32.xlu0 %v435, 24
      %v1257 = vpop.permute.xlu0 %1256
      %1258 = vrot.lane.b32.xlu0 %v553, 24
      %v1259 = vpop.permute.xlu0 %1258
      %1260 = vrot.lane.b32.xlu0 %v438, 24
      %v1261 = vpop.permute.xlu0 %1260
      %1262 = vrot.lane.b32.xlu0 %v554, 24
      %v1263 = vpop.permute.xlu0 %1262
      %1264 = vrot.lane.b32.xlu0 %v441, 24
      %v1265 = vpop.permute.xlu0 %1264
      %1266 = vrot.lane.b32.xlu0 %v555, 24
      %v1267 = vpop.permute.xlu0 %1266
      %1268 = vrot.lane.b32.xlu0 %v444, 24
      %v1269 = vpop.permute.xlu0 %1268
      %1270 = vrot.lane.b32.xlu0 %v556, 24
      %v1271 = vpop.permute.xlu0 %1270
      %1272 = vrot.lane.b32.xlu0 %v447, 24
      %v1273 = vpop.permute.xlu0 %1272
      %1274 = vrot.lane.b32.xlu0 %v557, 24
      %v1275 = vpop.permute.xlu0 %1274
      %1276 = vrot.lane.b32.xlu0 %v450, 24
      %v1277 = vpop.permute.xlu0 %1276
      %1278 = vrot.lane.b32.xlu0 %v558, 24
      %v1279 = vpop.permute.xlu0 %1278
      %1280 = vrot.lane.b32.xlu0 %v453, 24
      %v1281 = vpop.permute.xlu0 %1280
      %1282 = vrot.lane.b32.xlu0 %v559, 24
      %v1283 = vpop.permute.xlu0 %1282
      %1284 = vrot.lane.b32.xlu0 %v456, 24
      %v1285 = vpop.permute.xlu0 %1284
      %1286 = vrot.lane.b32.xlu0 %v560, 24
      %v1287 = vpop.permute.xlu0 %1286
      %1288 = vrot.lane.b32.xlu0 %v459, 24
      %v1289 = vpop.permute.xlu0 %1288
      %1290 = vrot.lane.b32.xlu0 %v561, 24
      %v1291 = vpop.permute.xlu0 %1290
      %1292 = vrot.lane.b32.xlu0 %v462, 24
      %v1293 = vpop.permute.xlu0 %1292
      %1294 = vrot.lane.b32.xlu0 %v562, 24
      %v1295 = vpop.permute.xlu0 %1294
      %1296 = vrot.lane.b32.xlu0 %v465, 24
      %v1297 = vpop.permute.xlu0 %1296
      %1298 = vrot.lane.b32.xlu0 %v563, 24
      %v1299 = vpop.permute.xlu0 %1298
      %1300 = vrot.lane.b32.xlu0 %v468, 24
      %v1301 = vpop.permute.xlu0 %1300
      %1332 = vrot.lane.b32.xlu0 %v613, 28
      %v1333 = vpop.permute.xlu0 %1332
      %1334 = vrot.lane.b32.xlu0 %v615, 28
      %v1335 = vpop.permute.xlu0 %1334
      %1336 = vrot.lane.b32.xlu0 %v623, 28
      %v1337 = vpop.permute.xlu0 %1336
      %1338 = vrot.lane.b32.xlu0 %v625, 28
      %v1339 = vpop.permute.xlu0 %1338
      %1340 = vrot.lane.b32.xlu0 %v628, 28
      %v1341 = vpop.permute.xlu0 %1340
      %1342 = vrot.lane.b32.xlu0 %v630, 28
      %v1343 = vpop.permute.xlu0 %1342
      %1344 = vrot.lane.b32.xlu0 %v633, 28
      %v1345 = vpop.permute.xlu0 %1344
      %1346 = vrot.lane.b32.xlu0 %v635, 28
      %v1347 = vpop.permute.xlu0 %1346
      %1348 = vrot.lane.b32.xlu0 %v638, 28
      %v1349 = vpop.permute.xlu0 %1348
      %1350 = vrot.lane.b32.xlu0 %v640, 28
      %v1351 = vpop.permute.xlu0 %1350
      %1352 = vrot.lane.b32.xlu0 %v643, 28
      %v1353 = vpop.permute.xlu0 %1352
      %1354 = vrot.lane.b32.xlu0 %v645, 28
      %v1355 = vpop.permute.xlu0 %1354
      %1356 = vrot.lane.b32.xlu0 %v648, 28
      %v1357 = vpop.permute.xlu0 %1356
      %1358 = vrot.lane.b32.xlu0 %v650, 28
      %v1359 = vpop.permute.xlu0 %1358
      %1360 = vrot.lane.b32.xlu0 %v653, 28
      %v1361 = vpop.permute.xlu0 %1360
      %1362 = vrot.lane.b32.xlu0 %v655, 28
      %v1363 = vpop.permute.xlu0 %1362
      %1364 = vrot.lane.b32.xlu0 %v658, 28
      %v1365 = vpop.permute.xlu0 %1364
      %1366 = vrot.lane.b32.xlu0 %v660, 28
      %v1367 = vpop.permute.xlu0 %1366
      %1368 = vrot.lane.b32.xlu0 %v663, 28
      %v1369 = vpop.permute.xlu0 %1368
      %1370 = vrot.lane.b32.xlu0 %v665, 28
      %v1371 = vpop.permute.xlu0 %1370
      %1372 = vrot.lane.b32.xlu0 %v668, 28
      %v1373 = vpop.permute.xlu0 %1372
      %1374 = vrot.lane.b32.xlu0 %v670, 28
      %v1375 = vpop.permute.xlu0 %1374
      %1376 = vrot.lane.b32.xlu0 %v673, 28
      %v1377 = vpop.permute.xlu0 %1376
      %1378 = vrot.lane.b32.xlu0 %v675, 28
      %v1379 = vpop.permute.xlu0 %1378
      %1380 = vrot.lane.b32.xlu0 %v678, 28
      %v1381 = vpop.permute.xlu0 %1380
      %1382 = vrot.lane.b32.xlu0 %v680, 28
      %v1383 = vpop.permute.xlu0 %1382
      %1384 = vrot.lane.b32.xlu0 %v683, 28
      %v1385 = vpop.permute.xlu0 %1384
      %1386 = vrot.lane.b32.xlu0 %v685, 28
      %v1387 = vpop.permute.xlu0 %1386
      %1388 = vrot.lane.b32.xlu0 %v766, 28
      %v1389 = vpop.permute.xlu0 %1388
      %1390 = vrot.lane.b32.xlu0 %v768, 28
      %v1391 = vpop.permute.xlu0 %1390
      %1422 = vrot.lane.b32.xlu0 %v689, 32
      %v1423 = vpop.permute.xlu0 %1422
      %1424 = vrot.lane.b32.xlu0 %v691, 32
      %v1425 = vpop.permute.xlu0 %1424
      %1426 = vrot.lane.b32.xlu0 %v699, 32
      %v1427 = vpop.permute.xlu0 %1426
      %1428 = vrot.lane.b32.xlu0 %v701, 32
      %v1429 = vpop.permute.xlu0 %1428
      %1430 = vrot.lane.b32.xlu0 %v704, 32
      %v1431 = vpop.permute.xlu0 %1430
      %1432 = vrot.lane.b32.xlu0 %v706, 32
      %v1433 = vpop.permute.xlu0 %1432
      %1434 = vrot.lane.b32.xlu0 %v709, 32
      %v1435 = vpop.permute.xlu0 %1434
      %1436 = vrot.lane.b32.xlu0 %v711, 32
      %v1437 = vpop.permute.xlu0 %1436
      %1438 = vrot.lane.b32.xlu0 %v714, 32
      %v1439 = vpop.permute.xlu0 %1438
      %1440 = vrot.lane.b32.xlu0 %v716, 32
      %v1441 = vpop.permute.xlu0 %1440
      %1442 = vrot.lane.b32.xlu0 %v719, 32
      %v1443 = vpop.permute.xlu0 %1442
      %1444 = vrot.lane.b32.xlu0 %v721, 32
      %v1445 = vpop.permute.xlu0 %1444
      %1446 = vrot.lane.b32.xlu0 %v724, 32
      %v1447 = vpop.permute.xlu0 %1446
      %1448 = vrot.lane.b32.xlu0 %v726, 32
      %v1449 = vpop.permute.xlu0 %1448
      %1450 = vrot.lane.b32.xlu0 %v729, 32
      %v1451 = vpop.permute.xlu0 %1450
      %1452 = vrot.lane.b32.xlu0 %v731, 32
      %v1453 = vpop.permute.xlu0 %1452
      %1454 = vrot.lane.b32.xlu0 %v734, 32
      %v1455 = vpop.permute.xlu0 %1454
      %1456 = vrot.lane.b32.xlu0 %v736, 32
      %v1457 = vpop.permute.xlu0 %1456
      %1458 = vrot.lane.b32.xlu0 %v739, 32
      %v1459 = vpop.permute.xlu0 %1458
      %1460 = vrot.lane.b32.xlu0 %v741, 32
      %v1461 = vpop.permute.xlu0 %1460
      %1462 = vrot.lane.b32.xlu0 %v744, 32
      %v1463 = vpop.permute.xlu0 %1462
      %1464 = vrot.lane.b32.xlu0 %v746, 32
      %v1465 = vpop.permute.xlu0 %1464
      %1466 = vrot.lane.b32.xlu0 %v749, 32
      %v1467 = vpop.permute.xlu0 %1466
      %1468 = vrot.lane.b32.xlu0 %v751, 32
      %v1469 = vpop.permute.xlu0 %1468
      %1470 = vrot.lane.b32.xlu0 %v754, 32
      %v1471 = vpop.permute.xlu0 %1470
      %1472 = vrot.lane.b32.xlu0 %v756, 32
      %v1473 = vpop.permute.xlu0 %1472
      %1474 = vrot.lane.b32.xlu0 %v759, 32
      %v1475 = vpop.permute.xlu0 %1474
      %1476 = vrot.lane.b32.xlu0 %v761, 32
      %v1477 = vpop.permute.xlu0 %1476
      %1478 = vrot.lane.b32.xlu0 %v771, 32
      %v1479 = vpop.permute.xlu0 %1478
      %1480 = vrot.lane.b32.xlu0 %v773, 32
      %v1481 = vpop.permute.xlu0 %1480
      %vm1512 = vcmask 31744
      %v1513 = vsel %vm1512, %v548, %v775
      %v1514 = vsel %vm1512, %v423, %v777
      %v1515 = vsel %vm1512, %v549, %v779
      %v1516 = vsel %vm1512, %v426, %v781
      %v1517 = vsel %vm1512, %v550, %v783
      %v1518 = vsel %vm1512, %v429, %v785
      %v1519 = vsel %vm1512, %v551, %v787
      %v1520 = vsel %vm1512, %v432, %v789
      %v1521 = vsel %vm1512, %v552, %v791
      %v1522 = vsel %vm1512, %v435, %v793
      %v1523 = vsel %vm1512, %v553, %v795
      %v1524 = vsel %vm1512, %v438, %v797
      %v1525 = vsel %vm1512, %v554, %v799
      %v1526 = vsel %vm1512, %v441, %v801
      %v1527 = vsel %vm1512, %v555, %v803
      %v1528 = vsel %vm1512, %v444, %v805
      %v1529 = vsel %vm1512, %v556, %v807
      %v1530 = vsel %vm1512, %v447, %v809
      %v1531 = vsel %vm1512, %v557, %v811
      %v1532 = vsel %vm1512, %v450, %v813
      %v1533 = vsel %vm1512, %v558, %v815
      %v1534 = vsel %vm1512, %v453, %v817
      %v1535 = vsel %vm1512, %v559, %v819
      %v1536 = vsel %vm1512, %v456, %v821
      %v1537 = vsel %vm1512, %v560, %v823
      %v1538 = vsel %vm1512, %v459, %v825
      %v1539 = vsel %vm1512, %v561, %v827
      %v1540 = vsel %vm1512, %v462, %v829
      %v1541 = vsel %vm1512, %v562, %v831
      %v1542 = vsel %vm1512, %v465, %v833
      %vm1543 = vcmask 64512
      %v1544 = vsel %vm1543, %v1513, %v865
      %v1545 = vsel %vm1543, %v1514, %v867
      %v1546 = vsel %vm1543, %v1515, %v869
      %v1547 = vsel %vm1543, %v1516, %v871
      %v1548 = vsel %vm1543, %v1517, %v873
      %v1549 = vsel %vm1543, %v1518, %v875
      %v1550 = vsel %vm1543, %v1519, %v877
      %v1551 = vsel %vm1543, %v1520, %v879
      %v1552 = vsel %vm1543, %v1521, %v881
      %v1553 = vsel %vm1543, %v1522, %v883
      %v1554 = vsel %vm1543, %v1523, %v885
      %v1555 = vsel %vm1543, %v1524, %v887
      %v1556 = vsel %vm1543, %v1525, %v889
      %v1557 = vsel %vm1543, %v1526, %v891
      %v1558 = vsel %vm1543, %v1527, %v893
      %v1559 = vsel %vm1543, %v1528, %v895
      %v1560 = vsel %vm1543, %v1529, %v897
      %v1561 = vsel %vm1543, %v1530, %v899
      %v1562 = vsel %vm1543, %v1531, %v901
      %v1563 = vsel %vm1543, %v1532, %v903
      %v1564 = vsel %vm1543, %v1533, %v905
      %v1565 = vsel %vm1543, %v1534, %v907
      %v1566 = vsel %vm1543, %v1535, %v909
      %v1567 = vsel %vm1543, %v1536, %v911
      %v1568 = vsel %vm1543, %v1537, %v913
      %v1569 = vsel %vm1543, %v1538, %v915
      %v1570 = vsel %vm1543, %v1539, %v917
      %v1571 = vsel %vm1543, %v1540, %v919
      %v1572 = vsel %vm1543, %v1541, %v921
      %v1573 = vsel %vm1543, %v1542, %v923
      %vm1574 = vcmask 97280
      %v1575 = vsel %vm1574, %v1544, %v955
      %v1576 = vsel %vm1574, %v1545, %v957
      %v1577 = vsel %vm1574, %v1546, %v959
      %v1578 = vsel %vm1574, %v1547, %v961
      %v1579 = vsel %vm1574, %v1544, %v963
      %v1580 = vsel %vm1574, %v1545, %v965
      %v1581 = vsel %vm1574, %v1548, %v967
      %v1582 = vsel %vm1574, %v1549, %v969
      %v1583 = vsel %vm1574, %v1550, %v971
      %v1584 = vsel %vm1574, %v1551, %v973
      %v1585 = vsel %vm1574, %v1552, %v975
      %v1586 = vsel %vm1574, %v1553, %v977
      %v1587 = vsel %vm1574, %v1554, %v979
      %v1588 = vsel %vm1574, %v1555, %v981
      %v1589 = vsel %vm1574, %v1556, %v983
      %v1590 = vsel %vm1574, %v1557, %v985
      %v1591 = vsel %vm1574, %v1558, %v987
      %v1592 = vsel %vm1574, %v1559, %v989
      %v1593 = vsel %vm1574, %v1560, %v991
      %v1594 = vsel %vm1574, %v1561, %v993
      %v1595 = vsel %vm1574, %v1562, %v995
      %v1596 = vsel %vm1574, %v1563, %v997
      %v1597 = vsel %vm1574, %v1564, %v999
      %v1598 = vsel %vm1574, %v1565, %v1001
      %v1599 = vsel %vm1574, %v1566, %v1003
      %v1600 = vsel %vm1574, %v1567, %v1005
      %v1601 = vsel %vm1574, %v1568, %v1007
      %v1602 = vsel %vm1574, %v1569, %v1009
      %v1603 = vsel %vm1574, %v1570, %v1011
      %v1604 = vsel %vm1574, %v1571, %v1013
      %v1605 = vsel %vm1574, %v1572, %v1015
      %v1606 = vsel %vm1574, %v1573, %v1017
      %vm1607 = vcmask 130048
      %v1608 = vsel %vm1607, %v1575, %v1051
      %v1609 = vsel %vm1607, %v1576, %v1053
      %v1610 = vsel %vm1607, %v1577, %v1055
      %v1611 = vsel %vm1607, %v1578, %v1057
      %v1612 = vsel %vm1607, %v1579, %v1059
      %v1613 = vsel %vm1607, %v1580, %v1061
      %v1614 = vsel %vm1607, %v1581, %v1063
      %v1615 = vsel %vm1607, %v1582, %v1065
      %v1616 = vsel %vm1607, %v1583, %v1067
      %v1617 = vsel %vm1607, %v1584, %v1069
      %v1618 = vsel %vm1607, %v1585, %v1071
      %v1619 = vsel %vm1607, %v1586, %v1073
      %v1620 = vsel %vm1607, %v1587, %v1075
      %v1621 = vsel %vm1607, %v1588, %v1077
      %v1622 = vsel %vm1607, %v1589, %v1079
      %v1623 = vsel %vm1607, %v1590, %v1081
      %v1624 = vsel %vm1607, %v1591, %v1083
      %v1625 = vsel %vm1607, %v1592, %v1085
      %v1626 = vsel %vm1607, %v1593, %v1087
      %v1627 = vsel %vm1607, %v1594, %v1089
      %v1628 = vsel %vm1607, %v1595, %v1091
      %v1629 = vsel %vm1607, %v1596, %v1093
      %v1630 = vsel %vm1607, %v1597, %v1095
      %v1631 = vsel %vm1607, %v1598, %v1097
      %v1632 = vsel %vm1607, %v1599, %v1099
      %v1633 = vsel %vm1607, %v1600, %v1101
      %v1634 = vsel %vm1607, %v1601, %v1103
      %v1635 = vsel %vm1607, %v1602, %v1105
      %v1636 = vsel %vm1607, %v1603, %v1107
      %v1637 = vsel %vm1607, %v1604, %v1109
      %v1638 = vsel %vm1607, %v1605, %v1111
      %v1639 = vsel %vm1607, %v1606, %v1113
      %vm1640 = vcmask 162816
      %v1641 = vsel %vm1640, %v1608, %v1147
      %v1642 = vsel %vm1640, %v1609, %v1149
      %v1643 = vsel %vm1640, %v1610, %v1151
      %v1644 = vsel %vm1640, %v1611, %v1153
      %v1645 = vsel %vm1640, %v1612, %v1155
      %v1646 = vsel %vm1640, %v1613, %v1157
      %v1647 = vsel %vm1640, %v1614, %v1159
      %v1648 = vsel %vm1640, %v1615, %v1161
      %v1649 = vsel %vm1640, %v1616, %v1163
      %v1650 = vsel %vm1640, %v1617, %v1165
      %v1651 = vsel %vm1640, %v1618, %v1167
      %v1652 = vsel %vm1640, %v1619, %v1169
      %v1653 = vsel %vm1640, %v1620, %v1171
      %v1654 = vsel %vm1640, %v1621, %v1173
      %v1655 = vsel %vm1640, %v1622, %v1175
      %v1656 = vsel %vm1640, %v1623, %v1177
      %v1657 = vsel %vm1640, %v1624, %v1179
      %v1658 = vsel %vm1640, %v1625, %v1181
      %v1659 = vsel %vm1640, %v1626, %v1183
      %v1660 = vsel %vm1640, %v1627, %v1185
      %v1661 = vsel %vm1640, %v1628, %v1187
      %v1662 = vsel %vm1640, %v1629, %v1189
      %v1663 = vsel %vm1640, %v1630, %v1191
      %v1664 = vsel %vm1640, %v1631, %v1193
      %v1665 = vsel %vm1640, %v1632, %v1195
      %v1666 = vsel %vm1640, %v1633, %v1197
      %v1667 = vsel %vm1640, %v1634, %v1199
      %v1668 = vsel %vm1640, %v1635, %v1201
      %v1669 = vsel %vm1640, %v1636, %v1203
      %v1670 = vsel %vm1640, %v1637, %v1205
      %v1671 = vsel %vm1640, %v1638, %v1207
      %v1672 = vsel %vm1640, %v1639, %v1209
      %vm1673 = vcmask 195584
      %v1674 = vsel %vm1673, %v1641, %v1243
      %v1675 = vsel %vm1673, %v1642, %v1245
      %v1676 = vsel %vm1673, %v1643, %v1247
      %v1677 = vsel %vm1673, %v1644, %v1249
      %v1678 = vsel %vm1673, %v1645, %v1251
      %v1679 = vsel %vm1673, %v1646, %v1253
      %v1680 = vsel %vm1673, %v1647, %v1255
      %v1681 = vsel %vm1673, %v1648, %v1257
      %v1682 = vsel %vm1673, %v1649, %v1259
      %v1683 = vsel %vm1673, %v1650, %v1261
      %v1684 = vsel %vm1673, %v1651, %v1263
      %v1685 = vsel %vm1673, %v1652, %v1265
      %v1686 = vsel %vm1673, %v1653, %v1267
      %v1687 = vsel %vm1673, %v1654, %v1269
      %v1688 = vsel %vm1673, %v1655, %v1271
      %v1689 = vsel %vm1673, %v1656, %v1273
      %v1690 = vsel %vm1673, %v1657, %v1275
      %v1691 = vsel %vm1673, %v1658, %v1277
      %v1692 = vsel %vm1673, %v1659, %v1279
      %v1693 = vsel %vm1673, %v1660, %v1281
      %v1694 = vsel %vm1673, %v1661, %v1283
      %v1695 = vsel %vm1673, %v1662, %v1285
      %v1696 = vsel %vm1673, %v1663, %v1287
      %v1697 = vsel %vm1673, %v1664, %v1289
      %v1698 = vsel %vm1673, %v1665, %v1291
      %v1699 = vsel %vm1673, %v1666, %v1293
      %v1700 = vsel %vm1673, %v1667, %v1295
      %v1701 = vsel %vm1673, %v1668, %v1297
      %v1702 = vsel %vm1673, %v1669, %v1299
      %v1703 = vsel %vm1673, %v1670, %v1301
      %v1704 = vsel %vm1673, %v1671, %v1295
      %v1705 = vsel %vm1673, %v1672, %v1297
      %vm1706 = vcmask 228352
      %v1707 = vsel %vm1706, %v1674, %v1333
      %v1708 = vsel %vm1706, %v1675, %v1335
      %v1709 = vsel %vm1706, %v1676, %v1337
      %v1710 = vsel %vm1706, %v1677, %v1339
      %v1711 = vsel %vm1706, %v1678, %v1341
      %v1712 = vsel %vm1706, %v1679, %v1343
      %v1713 = vsel %vm1706, %v1680, %v1345
      %v1714 = vsel %vm1706, %v1681, %v1347
      %v1715 = vsel %vm1706, %v1682, %v1349
      %v1716 = vsel %vm1706, %v1683, %v1351
      %v1717 = vsel %vm1706, %v1684, %v1353
      %v1718 = vsel %vm1706, %v1685, %v1355
      %v1719 = vsel %vm1706, %v1686, %v1357
      %v1720 = vsel %vm1706, %v1687, %v1359
      %v1721 = vsel %vm1706, %v1688, %v1361
      %v1722 = vsel %vm1706, %v1689, %v1363
      %v1723 = vsel %vm1706, %v1690, %v1365
      %v1724 = vsel %vm1706, %v1691, %v1367
      %v1725 = vsel %vm1706, %v1692, %v1369
      %v1726 = vsel %vm1706, %v1693, %v1371
      %v1727 = vsel %vm1706, %v1694, %v1373
      %v1728 = vsel %vm1706, %v1695, %v1375
      %v1729 = vsel %vm1706, %v1696, %v1377
      %v1730 = vsel %vm1706, %v1697, %v1379
      %v1731 = vsel %vm1706, %v1698, %v1381
      %v1732 = vsel %vm1706, %v1699, %v1383
      %v1733 = vsel %vm1706, %v1700, %v1385
      %v1734 = vsel %vm1706, %v1701, %v1387
      %v1735 = vsel %vm1706, %v1702, %v1389
      %v1736 = vsel %vm1706, %v1703, %v1391
      %v1737 = vsel %vm1706, %v1704, %v1385
      %v1738 = vsel %vm1706, %v1705, %v1387
      %vm1739 = vcmask 261120
      %v1740 = vsel %vm1739, %v1707, %v1423
      %v1741 = vsel %vm1739, %v1708, %v1425
      %v1742 = vsel %vm1739, %v1709, %v1427
      %v1743 = vsel %vm1739, %v1710, %v1429
      %v1744 = vsel %vm1739, %v1711, %v1431
      %v1745 = vsel %vm1739, %v1712, %v1433
      %v1746 = vsel %vm1739, %v1713, %v1435
      %v1747 = vsel %vm1739, %v1714, %v1437
      %v1748 = vsel %vm1739, %v1715, %v1439
      %v1749 = vsel %vm1739, %v1716, %v1441
      %v1750 = vsel %vm1739, %v1717, %v1443
      %v1751 = vsel %vm1739, %v1718, %v1445
      %v1752 = vsel %vm1739, %v1719, %v1447
      %v1753 = vsel %vm1739, %v1720, %v1449
      %v1754 = vsel %vm1739, %v1721, %v1451
      %v1755 = vsel %vm1739, %v1722, %v1453
      %v1756 = vsel %vm1739, %v1723, %v1455
      %v1757 = vsel %vm1739, %v1724, %v1457
      %v1758 = vsel %vm1739, %v1725, %v1459
      %v1759 = vsel %vm1739, %v1726, %v1461
      %v1760 = vsel %vm1739, %v1727, %v1463
      %v1761 = vsel %vm1739, %v1728, %v1465
      %v1762 = vsel %vm1739, %v1729, %v1467
      %v1763 = vsel %vm1739, %v1730, %v1469
      %v1764 = vsel %vm1739, %v1731, %v1471
      %v1765 = vsel %vm1739, %v1732, %v1473
      %v1766 = vsel %vm1739, %v1733, %v1475
      %v1767 = vsel %vm1739, %v1734, %v1477
      %v1768 = vsel %vm1739, %v1735, %v1479
      %v1769 = vsel %vm1739, %v1736, %v1481
      %v1770 = vsel %vm1739, %v1737, %v1475
      %v1771 = vsel %vm1739, %v1738, %v1477
      %v1772 = vld [vmem:[%s1] sm:$0xff]
      %v1773 = vld [vmem:[%s1 + $0x8] sm:$0xff]
      %v1774 = vld [vmem:[%s1 + $0x10] sm:$0xff]
      %v1775 = vld [vmem:[%s1 + $0x18] sm:$0xff]
      %v1776 = vld [vmem:[%s1 + $0x20] sm:$0xf]
      %v1777 = vld [vmem:[%s2] sm:$0x1]
      %v1779 = vlaneseq
      %v1780 = vshrl.u32 %v1779, 7
      %v1781 = vsub.s32 0, %v1780
      %v1782 = vrot.slane %v1777, %v1781
      %vm1784 = vcmask 293888
      %v1786 = vsel %vm1784, %v1740, 0
      %v1789 = vsel %vm1784, %v1741, 0
      %v1792 = vsel %vm1784, %v1742, 0
      %v1795 = vsel %vm1784, %v1743, 0
      %v1798 = vsel %vm1784, %v1744, 0
      %v1801 = vsel %vm1784, %v1745, 0
      %v1804 = vsel %vm1784, %v1746, 0
      %v1807 = vsel %vm1784, %v1747, 0
      %v1810 = vsel %vm1784, %v1748, 0
      %v1813 = vsel %vm1784, %v1749, 0
      %v1816 = vsel %vm1784, %v1750, 0
      %v1819 = vsel %vm1784, %v1751, 0
      %v1822 = vsel %vm1784, %v1752, 0
      %v1825 = vsel %vm1784, %v1753, 0
      %v1828 = vsel %vm1784, %v1754, 0
      %v1831 = vsel %vm1784, %v1755, 0
      %v1834 = vsel %vm1784, %v1756, 0
      %v1837 = vsel %vm1784, %v1757, 0
      %v1840 = vsel %vm1784, %v1758, 0
      %v1843 = vsel %vm1784, %v1759, 0
      %v1846 = vsel %vm1784, %v1760, 0
      %v1849 = vsel %vm1784, %v1761, 0
      %v1852 = vsel %vm1784, %v1762, 0
      %v1855 = vsel %vm1784, %v1763, 0
      %v1858 = vsel %vm1784, %v1764, 0
      %v1861 = vsel %vm1784, %v1765, 0
      %v1864 = vsel %vm1784, %v1766, 0
      %v1867 = vsel %vm1784, %v1767, 0
      %v1870 = vsel %vm1784, %v1768, 0
      %v1873 = vsel %vm1784, %v1769, 0
      %v1876 = vsel %vm1784, %v1770, 0
      %v1879 = vsel %vm1784, %v1771, 0
      %v1882 = vsel %vm289, %v1776, 0
      %1884 = vmatprep.subr.mxu0 0.0
      %1885 = vmatpush1.msra.mxu0 0.0
      %1886 = vmatprep.subr.mxu0 0.0
      %1887 = vmatpush1.msra.mxu0 0.0
      %1888 = vmatprep.subr.mxu0 0.0
      %1889 = vmatpush1.msra.mxu0 0.0
      %1890 = vmatprep.subr.mxu0 0.0
      %1891 = vmatpush1.msra.mxu0 0.0
      %1892 = vmatprep.subr.mxu0 0.0
      %1893 = vmatpush1.msra.mxu0 0.0
      %1894 = vmatprep.subr.mxu0 0.0
      %1895 = vmatpush1.msra.mxu0 0.0
      %1896 = vmatprep.subr.mxu0 0.0
      %1897 = vmatpush1.msra.mxu0 0.0
      %1898 = vmatprep.subr.mxu0 0.0
      %1899 = vmatpush1.msra.mxu0 0.0
      %1900 = vmatprep.subr.mxu0 0.0
      %1901 = vmatpush1.msra.mxu0 0.0
      %1902 = vmatprep.subr.mxu0 0.0
      %1903 = vmatpush1.msra.mxu0 0.0
      %1904 = vmatprep.subr.mxu0 0.0
      %1905 = vmatpush1.msra.mxu0 0.0
      %1906 = vmatprep.subr.mxu0 0.0
      %1907 = vmatpush1.msra.mxu0 %v1882
      %1908 = vmatprep.subr.mxu0 0.0
      %1909 = vmatpush1.msra.mxu0 %v1775
      %1910 = vmatprep.subr.mxu0 0.0
      %1911 = vmatpush1.msra.mxu0 %v1774
      %1912 = vmatprep.subr.mxu0 0.0
      %1913 = vmatpush1.msra.mxu0 %v1773
      %1914 = vmatprep.subr.mxu0 0.0
      %1915 = vmatpush1.msra.mxu0 %v1772
      %1916 = vmatprep.subr.mxu0 0.0
      %1917 = vmatpush2.msra.mxu0 0.0
      %1918 = vmatprep.subr.mxu0 0.0
      %1919 = vmatpush2.msra.mxu0 0.0
      %1920 = vmatprep.subr.mxu0 0.0
      %1921 = vmatpush2.msra.mxu0 0.0
      %1922 = vmatprep.subr.mxu0 0.0
      %1923 = vmatpush2.msra.mxu0 0.0
      %1924 = vmatprep.subr.mxu0 0.0
      %1925 = vmatpush2.msra.mxu0 0.0
      %1926 = vmatprep.subr.mxu0 0.0
      %1927 = vmatpush2.msra.mxu0 0.0
      %1928 = vmatprep.subr.mxu0 0.0
      %1929 = vmatpush2.msra.mxu0 0.0
      %1930 = vmatprep.subr.mxu0 0.0
      %1931 = vmatpush2.msra.mxu0 0.0
      %1932 = vmatprep.subr.mxu0 0.0
      %1933 = vmatpush2.msra.mxu0 0.0
      %1934 = vmatprep.subr.mxu0 0.0
      %1935 = vmatpush2.msra.mxu0 0.0
      %1936 = vmatprep.subr.mxu0 0.0
      %1937 = vmatpush2.msra.mxu0 0.0
      %1938 = vmatprep.subr.mxu0 0.0
      %1939 = vmatpush2.msra.mxu0 0.0
      %1940 = vmatprep.subr.mxu0 0.0
      %1941 = vmatpush2.msra.mxu0 0.0
      %1942 = vmatprep.subr.mxu0 0.0
      %1943 = vmatpush2.msra.mxu0 0.0
      %1944 = vmatprep.subr.mxu0 0.0
      %1945 = vmatpush2.msra.mxu0 0.0
      %1946 = vmatprep.subr.mxu0 0.0
      %1947 = vmatpush2.msra.mxu0 0.0
      %1948 = vmatprep.mubr.f32.mxu0 0.0
      %1949 = vmatmul.mubr.f32.gmra.mxu0 %v1786
      %v1950 = vpop.f32.mrf.mxu0
      %v1951 = vadd.f32 %v1782, %v1950
      %v1952 = vpop.f32.mrf.mxu0
      %1953 = vmatprep.mubr.f32.mxu0 0.0
      %1954 = vmatmul.mubr.f32.gmra.mxu0 %v1789
      %v1955 = vpop.f32.mrf.mxu0
      %v1956 = vadd.f32 %v1782, %v1955
      %v1957 = vpop.f32.mrf.mxu0
      %1958 = vmatprep.mubr.f32.mxu0 0.0
      %1959 = vmatmul.mubr.f32.gmra.mxu0 %v1792
      %v1960 = vpop.f32.mrf.mxu0
      %v1961 = vadd.f32 %v1782, %v1960
      %v1962 = vpop.f32.mrf.mxu0
      %1963 = vmatprep.mubr.f32.mxu0 0.0
      %1964 = vmatmul.mubr.f32.gmra.mxu0 %v1795
      %v1965 = vpop.f32.mrf.mxu0
      %v1966 = vadd.f32 %v1782, %v1965
      %v1967 = vpop.f32.mrf.mxu0
      %1968 = vmatprep.mubr.f32.mxu0 0.0
      %1969 = vmatmul.mubr.f32.gmra.mxu0 %v1798
      %v1970 = vpop.f32.mrf.mxu0
      %v1971 = vadd.f32 %v1782, %v1970
      %v1972 = vpop.f32.mrf.mxu0
      %1973 = vmatprep.mubr.f32.mxu0 0.0
      %1974 = vmatmul.mubr.f32.gmra.mxu0 %v1801
      %v1975 = vpop.f32.mrf.mxu0
      %v1976 = vadd.f32 %v1782, %v1975
      %v1977 = vpop.f32.mrf.mxu0
      %1978 = vmatprep.mubr.f32.mxu0 0.0
      %1979 = vmatmul.mubr.f32.gmra.mxu0 %v1804
      %v1980 = vpop.f32.mrf.mxu0
      %v1981 = vadd.f32 %v1782, %v1980
      %v1982 = vpop.f32.mrf.mxu0
      %1983 = vmatprep.mubr.f32.mxu0 0.0
      %1984 = vmatmul.mubr.f32.gmra.mxu0 %v1807
      %v1985 = vpop.f32.mrf.mxu0
      %v1986 = vadd.f32 %v1782, %v1985
      %v1987 = vpop.f32.mrf.mxu0
      %1988 = vmatprep.mubr.f32.mxu0 0.0
      %1989 = vmatmul.mubr.f32.gmra.mxu0 %v1810
      %v1990 = vpop.f32.mrf.mxu0
      %v1991 = vadd.f32 %v1782, %v1990
      %v1992 = vpop.f32.mrf.mxu0
      %1993 = vmatprep.mubr.f32.mxu0 0.0
      %1994 = vmatmul.mubr.f32.gmra.mxu0 %v1813
      %v1995 = vpop.f32.mrf.mxu0
      %v1996 = vadd.f32 %v1782, %v1995
      %v1997 = vpop.f32.mrf.mxu0
      %1998 = vmatprep.mubr.f32.mxu0 0.0
      %1999 = vmatmul.mubr.f32.gmra.mxu0 %v1816
      %v2000 = vpop.f32.mrf.mxu0
      %v2001 = vadd.f32 %v1782, %v2000
      %v2002 = vpop.f32.mrf.mxu0
      %2003 = vmatprep.mubr.f32.mxu0 0.0
      %2004 = vmatmul.mubr.f32.gmra.mxu0 %v1819
      %v2005 = vpop.f32.mrf.mxu0
      %v2006 = vadd.f32 %v1782, %v2005
      %v2007 = vpop.f32.mrf.mxu0
      %2008 = vmatprep.mubr.f32.mxu0 0.0
      %2009 = vmatmul.mubr.f32.gmra.mxu0 %v1822
      %v2010 = vpop.f32.mrf.mxu0
      %v2011 = vadd.f32 %v1782, %v2010
      %v2012 = vpop.f32.mrf.mxu0
      %2013 = vmatprep.mubr.f32.mxu0 0.0
      %2014 = vmatmul.mubr.f32.gmra.mxu0 %v1825
      %v2015 = vpop.f32.mrf.mxu0
      %v2016 = vadd.f32 %v1782, %v2015
      %v2017 = vpop.f32.mrf.mxu0
      %2018 = vmatprep.mubr.f32.mxu0 0.0
      %2019 = vmatmul.mubr.f32.gmra.mxu0 %v1828
      %v2020 = vpop.f32.mrf.mxu0
      %v2021 = vadd.f32 %v1782, %v2020
      %v2022 = vpop.f32.mrf.mxu0
      %2023 = vmatprep.mubr.f32.mxu0 0.0
      %2024 = vmatmul.mubr.f32.gmra.mxu0 %v1831
      %v2025 = vpop.f32.mrf.mxu0
      %v2026 = vadd.f32 %v1782, %v2025
      %v2027 = vpop.f32.mrf.mxu0
      %2028 = vmatprep.mubr.f32.mxu0 0.0
      %2029 = vmatmul.mubr.f32.gmra.mxu0 %v1834
      %v2030 = vpop.f32.mrf.mxu0
      %v2031 = vadd.f32 %v1782, %v2030
      %v2032 = vpop.f32.mrf.mxu0
      %2033 = vmatprep.mubr.f32.mxu0 0.0
      %2034 = vmatmul.mubr.f32.gmra.mxu0 %v1837
      %v2035 = vpop.f32.mrf.mxu0
      %v2036 = vadd.f32 %v1782, %v2035
      %v2037 = vpop.f32.mrf.mxu0
      %2038 = vmatprep.mubr.f32.mxu0 0.0
      %2039 = vmatmul.mubr.f32.gmra.mxu0 %v1840
      %v2040 = vpop.f32.mrf.mxu0
      %v2041 = vadd.f32 %v1782, %v2040
      %v2042 = vpop.f32.mrf.mxu0
      %2043 = vmatprep.mubr.f32.mxu0 0.0
      %2044 = vmatmul.mubr.f32.gmra.mxu0 %v1843
      %v2045 = vpop.f32.mrf.mxu0
      %v2046 = vadd.f32 %v1782, %v2045
      %v2047 = vpop.f32.mrf.mxu0
      %2048 = vmatprep.mubr.f32.mxu0 0.0
      %2049 = vmatmul.mubr.f32.gmra.mxu0 %v1846
      %v2050 = vpop.f32.mrf.mxu0
      %v2051 = vadd.f32 %v1782, %v2050
      %v2052 = vpop.f32.mrf.mxu0
      %2053 = vmatprep.mubr.f32.mxu0 0.0
      %2054 = vmatmul.mubr.f32.gmra.mxu0 %v1849
      %v2055 = vpop.f32.mrf.mxu0
      %v2056 = vadd.f32 %v1782, %v2055
      %v2057 = vpop.f32.mrf.mxu0
      %2058 = vmatprep.mubr.f32.mxu0 0.0
      %2059 = vmatmul.mubr.f32.gmra.mxu0 %v1852
      %v2060 = vpop.f32.mrf.mxu0
      %v2061 = vadd.f32 %v1782, %v2060
      %v2062 = vpop.f32.mrf.mxu0
      %2063 = vmatprep.mubr.f32.mxu0 0.0
      %2064 = vmatmul.mubr.f32.gmra.mxu0 %v1855
      %v2065 = vpop.f32.mrf.mxu0
      %v2066 = vadd.f32 %v1782, %v2065
      %v2067 = vpop.f32.mrf.mxu0
      %2068 = vmatprep.mubr.f32.mxu0 0.0
      %2069 = vmatmul.mubr.f32.gmra.mxu0 %v1858
      %v2070 = vpop.f32.mrf.mxu0
      %v2071 = vadd.f32 %v1782, %v2070
      %v2072 = vpop.f32.mrf.mxu0
      %2073 = vmatprep.mubr.f32.mxu0 0.0
      %2074 = vmatmul.mubr.f32.gmra.mxu0 %v1861
      %v2075 = vpop.f32.mrf.mxu0
      %v2076 = vadd.f32 %v1782, %v2075
      %v2077 = vpop.f32.mrf.mxu0
      %2078 = vmatprep.mubr.f32.mxu0 0.0
      %2079 = vmatmul.mubr.f32.gmra.mxu0 %v1864
      %v2080 = vpop.f32.mrf.mxu0
      %v2081 = vadd.f32 %v1782, %v2080
      %v2082 = vpop.f32.mrf.mxu0
      %2083 = vmatprep.mubr.f32.mxu0 0.0
      %2084 = vmatmul.mubr.f32.gmra.mxu0 %v1867
      %v2085 = vpop.f32.mrf.mxu0
      %v2086 = vadd.f32 %v1782, %v2085
      %v2087 = vpop.f32.mrf.mxu0
      %2088 = vmatprep.mubr.f32.mxu0 0.0
      %2089 = vmatmul.mubr.f32.gmra.mxu0 %v1870
      %v2090 = vpop.f32.mrf.mxu0
      %v2091 = vadd.f32 %v1782, %v2090
      %v2092 = vpop.f32.mrf.mxu0
      %2093 = vmatprep.mubr.f32.mxu0 0.0
      %2094 = vmatmul.mubr.f32.gmra.mxu0 %v1873
      %v2095 = vpop.f32.mrf.mxu0
      %v2096 = vadd.f32 %v1782, %v2095
      %v2097 = vpop.f32.mrf.mxu0
      %2098 = vmatprep.mubr.f32.mxu0 0.0
      %2099 = vmatmul.mubr.f32.gmra.mxu0 %v1876
      %v2100 = vpop.f32.mrf.mxu0
      %v2101 = vadd.f32 %v1782, %v2100
      %v2102 = vpop.f32.mrf.mxu0
      %2103 = vmatprep.mubr.f32.mxu0 0.0
      %2104 = vmatmul.mubr.f32.gmra.mxu0 %v1879
      %v2105 = vpop.f32.mrf.mxu0
      %v2106 = vadd.f32 %v1782, %v2105
      %v2107 = vpop.f32.mrf.mxu0
      %2108 = vdwg.mxu0
      %v2109 = vmax.f32 %v1951, 0.0
      %v2110 = vmax.f32 %v1956, 0.0
      %v2111 = vmax.f32 %v1961, 0.0
      %v2112 = vmax.f32 %v1966, 0.0
      %v2113 = vmax.f32 %v1971, 0.0
      %v2114 = vmax.f32 %v1976, 0.0
      %v2115 = vmax.f32 %v1981, 0.0
      %v2116 = vmax.f32 %v1986, 0.0
      %v2117 = vmax.f32 %v1991, 0.0
      %v2118 = vmax.f32 %v1996, 0.0
      %v2119 = vmax.f32 %v2001, 0.0
      %v2120 = vmax.f32 %v2006, 0.0
      %v2121 = vmax.f32 %v2011, 0.0
      %v2122 = vmax.f32 %v2016, 0.0
      %v2123 = vmax.f32 %v2021, 0.0
      %v2124 = vmax.f32 %v2026, 0.0
      %v2125 = vmax.f32 %v2031, 0.0
      %v2126 = vmax.f32 %v2036, 0.0
      %v2127 = vmax.f32 %v2041, 0.0
      %v2128 = vmax.f32 %v2046, 0.0
      %v2129 = vmax.f32 %v2051, 0.0
      %v2130 = vmax.f32 %v2056, 0.0
      %v2131 = vmax.f32 %v2061, 0.0
      %v2132 = vmax.f32 %v2066, 0.0
      %v2133 = vmax.f32 %v2071, 0.0
      %v2134 = vmax.f32 %v2076, 0.0
      %v2135 = vmax.f32 %v2081, 0.0
      %v2136 = vmax.f32 %v2086, 0.0
      %v2137 = vmax.f32 %v2091, 0.0
      %v2138 = vmax.f32 %v2096, 0.0
      %v2139 = vmax.f32 %v2101, 0.0
      %v2140 = vmax.f32 %v2106, 0.0
      %v2141 = vsel %vm1607, %v2109, 0.0
      %v2142 = vsel %vm1607, %v2110, 0.0
      %v2143 = vsel %vm1607, %v2111, 0.0
      %v2144 = vsel %vm1607, %v2112, 0.0
      %v2145 = vsel %vm1607, %v2113, 0.0
      %v2146 = vsel %vm1607, %v2114, 0.0
      %v2147 = vsel %vm1607, %v2115, 0.0
      %v2148 = vsel %vm1607, %v2116, 0.0
      %v2149 = vsel %vm1607, %v2117, 0.0
      %v2150 = vsel %vm1607, %v2118, 0.0
      %v2151 = vsel %vm1607, %v2119, 0.0
      %v2152 = vsel %vm1607, %v2120, 0.0
      %v2153 = vsel %vm1607, %v2121, 0.0
      %v2154 = vsel %vm1607, %v2122, 0.0
      %v2155 = vsel %vm1607, %v2123, 0.0
      %v2156 = vsel %vm1607, %v2124, 0.0
      %v2157 = vsel %vm1607, %v2125, 0.0
      %v2158 = vsel %vm1607, %v2126, 0.0
      %v2159 = vsel %vm1607, %v2127, 0.0
      %v2160 = vsel %vm1607, %v2128, 0.0
      %v2161 = vsel %vm1607, %v2129, 0.0
      %v2162 = vsel %vm1607, %v2130, 0.0
      %v2163 = vsel %vm1607, %v2131, 0.0
      %v2164 = vsel %vm1607, %v2132, 0.0
      %v2165 = vsel %vm1607, %v2133, 0.0
      %v2166 = vsel %vm1607, %v2134, 0.0
      %v2167 = vsel %vm1607, %v2135, 0.0
      %v2168 = vsel %vm1607, %v2136, 0.0
      %v2169 = vsel %vm1607, %v2137, 0.0
      %v2170 = vsel %vm1607, %v2138, 0.0
      %v2171 = vsel %vm1607, %v2139, 0.0
      %v2172 = vsel %vm1607, %v2140, 0.0
      %2173 = vxpose.xlu0.b32.start [1/16] %v2141, 128
      %2174 = vxpose.xlu0.b32.cont [2/16] %v2142, 128
      %2175 = vxpose.xlu0.b32.cont [3/16] %v2143, 128
      %2176 = vxpose.xlu0.b32.cont [4/16] %v2144, 128
      %2177 = vxpose.xlu0.b32.cont [5/16] %v2145, 128
      %2178 = vxpose.xlu0.b32.cont [6/16] %v2146, 128
      %2179 = vxpose.xlu0.b32.cont [7/16] %v2147, 128
      %2180 = vxpose.xlu0.b32.cont [8/16] %v2148, 128
      %2181 = vxpose.xlu0.b32.cont [9/16] %v2149, 128
      %2182 = vxpose.xlu0.b32.cont [10/16] %v2150, 128
      %2183 = vxpose.xlu0.b32.cont [11/16] %v2151, 128
      %2184 = vxpose.xlu0.b32.cont [12/16] %v2152, 128
      %2185 = vxpose.xlu0.b32.cont [13/16] %v2153, 128
      %2186 = vxpose.xlu0.b32.cont [14/16] %v2154, 128
      %2187 = vxpose.xlu0.b32.cont [15/16] %v2155, 128
      %2188 = vxpose.xlu0.b32.end [16/16] %v2156, 128
      %v2189 = vpop.trf.xlu0
      %v2190 = vpop.trf.xlu0
      %v2191 = vpop.trf.xlu0
      %v2192 = vpop.trf.xlu0
      %v2193 = vpop.trf.xlu0
      %v2194 = vpop.trf.xlu0
      %v2195 = vpop.trf.xlu0
      %v2196 = vpop.trf.xlu0
      %v2197 = vpop.trf.xlu0
      %v2198 = vpop.trf.xlu0
      %v2199 = vpop.trf.xlu0
      %v2200 = vpop.trf.xlu0
      %v2201 = vpop.trf.xlu0
      %v2202 = vpop.trf.xlu0
      %v2203 = vpop.trf.xlu0
      %v2204 = vpop.trf.xlu0
      %2205 = vxpose.xlu0.b32.start [1/16] %v2157, 128
      %2206 = vxpose.xlu0.b32.cont [2/16] %v2158, 128
      %2207 = vxpose.xlu0.b32.cont [3/16] %v2159, 128
      %2208 = vxpose.xlu0.b32.cont [4/16] %v2160, 128
      %2209 = vxpose.xlu0.b32.cont [5/16] %v2161, 128
      %2210 = vxpose.xlu0.b32.cont [6/16] %v2162, 128
      %2211 = vxpose.xlu0.b32.cont [7/16] %v2163, 128
      %2212 = vxpose.xlu0.b32.cont [8/16] %v2164, 128
      %2213 = vxpose.xlu0.b32.cont [9/16] %v2165, 128
      %2214 = vxpose.xlu0.b32.cont [10/16] %v2166, 128
      %2215 = vxpose.xlu0.b32.cont [11/16] %v2167, 128
      %2216 = vxpose.xlu0.b32.cont [12/16] %v2168, 128
      %2217 = vxpose.xlu0.b32.cont [13/16] %v2169, 128
      %2218 = vxpose.xlu0.b32.cont [14/16] %v2170, 128
      %2219 = vxpose.xlu0.b32.cont [15/16] %v2171, 128
      %2220 = vxpose.xlu0.b32.end [16/16] %v2172, 128
      %v2221 = vpop.trf.xlu0
      %v2222 = vpop.trf.xlu0
      %v2223 = vpop.trf.xlu0
      %v2224 = vpop.trf.xlu0
      %v2225 = vpop.trf.xlu0
      %v2226 = vpop.trf.xlu0
      %v2227 = vpop.trf.xlu0
      %v2228 = vpop.trf.xlu0
      %v2229 = vpop.trf.xlu0
      %v2230 = vpop.trf.xlu0
      %v2231 = vpop.trf.xlu0
      %v2232 = vpop.trf.xlu0
      %v2233 = vpop.trf.xlu0
      %v2234 = vpop.trf.xlu0
      %v2235 = vpop.trf.xlu0
      %v2236 = vpop.trf.xlu0
      %v2241 = vrot.slane %v2189, 4
      %v2242 = vrot.slane %v2221, 4
      %v2243 = vrot.slane %v2190, 4
      %v2244 = vsel %vm289, %v2241, %v2243
      %v2245 = vrot.slane %v2222, 4
      %v2246 = vsel %vm289, %v2242, %v2245
      %2253 = vst [vmem:[%s278] sm:$0xf0] %v2241
      %2254 = vst [vmem:[%s278 + $0x8] sm:$0xf0] %v2242
      %2255 = vst [vmem:[%s278 + $0x10] sm:$0xff] %v2244
      %2256 = vst [vmem:[%s278 + $0x18] sm:$0xff] %v2246
      %2257 = vst [vmem:[%s278 + $0x20] sm:$0xf] %v2243
      %2258 = vst [vmem:[%s278 + $0x28] sm:$0xf] %v2245
      %2291 = vrot.lane.b32.xlu0 %v2109, 4
      %v2292 = vpop.permute.xlu0 %2291
      %2293 = vrot.lane.b32.xlu0 %v2110, 4
      %v2294 = vpop.permute.xlu0 %2293
      %2295 = vrot.lane.b32.xlu0 %v2111, 4
      %v2296 = vpop.permute.xlu0 %2295
      %2297 = vrot.lane.b32.xlu0 %v2112, 4
      %v2298 = vpop.permute.xlu0 %2297
      %2299 = vrot.lane.b32.xlu0 %v2113, 4
      %v2300 = vpop.permute.xlu0 %2299
      %2301 = vrot.lane.b32.xlu0 %v2114, 4
      %v2302 = vpop.permute.xlu0 %2301
      %2303 = vrot.lane.b32.xlu0 %v2115, 4
      %v2304 = vpop.permute.xlu0 %2303
      %2305 = vrot.lane.b32.xlu0 %v2116, 4
      %v2306 = vpop.permute.xlu0 %2305
      %2307 = vrot.lane.b32.xlu0 %v2117, 4
      %v2308 = vpop.permute.xlu0 %2307
      %2309 = vrot.lane.b32.xlu0 %v2118, 4
      %v2310 = vpop.permute.xlu0 %2309
      %2311 = vrot.lane.b32.xlu0 %v2119, 4
      %v2312 = vpop.permute.xlu0 %2311
      %2313 = vrot.lane.b32.xlu0 %v2120, 4
      %v2314 = vpop.permute.xlu0 %2313
      %2315 = vrot.lane.b32.xlu0 %v2121, 4
      %v2316 = vpop.permute.xlu0 %2315
      %2317 = vrot.lane.b32.xlu0 %v2122, 4
      %v2318 = vpop.permute.xlu0 %2317
      %2319 = vrot.lane.b32.xlu0 %v2123, 4
      %v2320 = vpop.permute.xlu0 %2319
      %2321 = vrot.lane.b32.xlu0 %v2124, 4
      %v2322 = vpop.permute.xlu0 %2321
      %2323 = vrot.lane.b32.xlu0 %v2125, 4
      %v2324 = vpop.permute.xlu0 %2323
      %2325 = vrot.lane.b32.xlu0 %v2126, 4
      %v2326 = vpop.permute.xlu0 %2325
      %2327 = vrot.lane.b32.xlu0 %v2127, 4
      %v2328 = vpop.permute.xlu0 %2327
      %2329 = vrot.lane.b32.xlu0 %v2128, 4
      %v2330 = vpop.permute.xlu0 %2329
      %2331 = vrot.lane.b32.xlu0 %v2129, 4
      %v2332 = vpop.permute.xlu0 %2331
      %2333 = vrot.lane.b32.xlu0 %v2130, 4
      %v2334 = vpop.permute.xlu0 %2333
      %2335 = vrot.lane.b32.xlu0 %v2131, 4
      %v2336 = vpop.permute.xlu0 %2335
      %2337 = vrot.lane.b32.xlu0 %v2132, 4
      %v2338 = vpop.permute.xlu0 %2337
      %2339 = vrot.lane.b32.xlu0 %v2133, 4
      %v2340 = vpop.permute.xlu0 %2339
      %2341 = vrot.lane.b32.xlu0 %v2134, 4
      %v2342 = vpop.permute.xlu0 %2341
      %2343 = vrot.lane.b32.xlu0 %v2135, 4
      %v2344 = vpop.permute.xlu0 %2343
      %2345 = vrot.lane.b32.xlu0 %v2136, 4
      %v2346 = vpop.permute.xlu0 %2345
      %2347 = vrot.lane.b32.xlu0 %v2137, 4
      %v2348 = vpop.permute.xlu0 %2347
      %2349 = vrot.lane.b32.xlu0 %v2138, 4
      %v2350 = vpop.permute.xlu0 %2349
      %2351 = vrot.lane.b32.xlu0 %v2139, 4
      %v2352 = vpop.permute.xlu0 %2351
      %2353 = vrot.lane.b32.xlu0 %v2140, 4
      %v2354 = vpop.permute.xlu0 %2353
      %v2387 = vsel %vm1512, %v308, %v2292
      %v2388 = vsel %vm1512, %v309, %v2294
      %v2389 = vsel %vm1512, %v310, %v2296
      %v2390 = vsel %vm1512, %v311, %v2298
      %v2391 = vsel %vm1512, %v312, %v2300
      %v2392 = vsel %vm1512, %v313, %v2302
      %v2393 = vsel %vm1512, %v314, %v2304
      %v2394 = vsel %vm1512, %v315, %v2306
      %v2395 = vsel %vm1512, %v316, %v2308
      %v2396 = vsel %vm1512, %v317, %v2310
      %v2397 = vsel %vm1512, %v318, %v2312
      %v2398 = vsel %vm1512, %v319, %v2314
      %v2399 = vsel %vm1512, %v320, %v2316
      %v2400 = vsel %vm1512, %v321, %v2318
      %v2401 = vsel %vm1512, %v322, %v2320
      %v2402 = vsel %vm1512, %v323, %v2322
      %v2403 = vsel %vm1512, %v340, %v2324
      %v2404 = vsel %vm1512, %v341, %v2326
      %v2405 = vsel %vm1512, %v342, %v2328
      %v2406 = vsel %vm1512, %v343, %v2330
      %v2407 = vsel %vm1512, %v344, %v2332
      %v2408 = vsel %vm1512, %v345, %v2334
      %v2409 = vsel %vm1512, %v346, %v2336
      %v2410 = vsel %vm1512, %v347, %v2338
      %v2411 = vsel %vm1512, %v348, %v2340
      %v2412 = vsel %vm1512, %v349, %v2342
      %v2413 = vsel %vm1512, %v350, %v2344
      %v2414 = vsel %vm1512, %v351, %v2346
      %v2415 = vsel %vm1512, %v352, %v2348
      %v2416 = vsel %vm1512, %v353, %v2350
      %v2417 = vsel %vm1512, %v354, %v2352
      %v2418 = vsel %vm1512, %v355, %v2354
      %v2435 = vrot.slane %v2389, 1
      %v2436 = vrot.slane %v2387, 1
      %v2437 = vrot.slane %v2391, 1
      %v2438 = vrot.slane %v2393, 1
      %v2439 = vrot.slane %v2395, 1
      %v2440 = vrot.slane %v2397, 1
      %v2441 = vrot.slane %v2399, 1
      %v2442 = vrot.slane %v2401, 1
      %v2443 = vrot.slane %v2403, 1
      %v2444 = vrot.slane %v2405, 1
      %v2445 = vrot.slane %v2407, 1
      %v2446 = vrot.slane %v2409, 1
      %v2447 = vrot.slane %v2411, 1
      %v2448 = vrot.slane %v2413, 1
      %v2449 = vrot.slane %v2415, 1
      %v2450 = vrot.slane %v2417, 1
      %v2483 = vrot.slane %v2389, 7
      %v2484 = vrot.slane %v2390, 7
      %v2485 = vsel %vm420, %v2483, %v2484
      %v2486 = vrot.slane %v2387, 7
      %v2487 = vrot.slane %v2388, 7
      %v2488 = vsel %vm420, %v2486, %v2487
      %v2489 = vrot.slane %v2391, 7
      %v2490 = vrot.slane %v2392, 7
      %v2491 = vsel %vm420, %v2489, %v2490
      %v2492 = vrot.slane %v2393, 7
      %v2493 = vrot.slane %v2394, 7
      %v2494 = vsel %vm420, %v2492, %v2493
      %v2495 = vrot.slane %v2395, 7
      %v2496 = vrot.slane %v2396, 7
      %v2497 = vsel %vm420, %v2495, %v2496
      %v2498 = vrot.slane %v2397, 7
      %v2499 = vrot.slane %v2398, 7
      %v2500 = vsel %vm420, %v2498, %v2499
      %v2501 = vrot.slane %v2399, 7
      %v2502 = vrot.slane %v2400, 7
      %v2503 = vsel %vm420, %v2501, %v2502
      %v2504 = vrot.slane %v2401, 7
      %v2505 = vrot.slane %v2402, 7
      %v2506 = vsel %vm420, %v2504, %v2505
      %v2507 = vrot.slane %v2403, 7
      %v2508 = vrot.slane %v2404, 7
      %v2509 = vsel %vm420, %v2507, %v2508
      %v2510 = vrot.slane %v2405, 7
      %v2511 = vrot.slane %v2406, 7
      %v2512 = vsel %vm420, %v2510, %v2511
      %v2513 = vrot.slane %v2407, 7
      %v2514 = vrot.slane %v2408, 7
      %v2515 = vsel %vm420, %v2513, %v2514
      %v2516 = vrot.slane %v2409, 7
      %v2517 = vrot.slane %v2410, 7
      %v2518 = vsel %vm420, %v2516, %v2517
      %v2519 = vrot.slane %v2411, 7
      %v2520 = vrot.slane %v2412, 7
      %v2521 = vsel %vm420, %v2519, %v2520
      %v2522 = vrot.slane %v2413, 7
      %v2523 = vrot.slane %v2414, 7
      %v2524 = vsel %vm420, %v2522, %v2523
      %v2525 = vrot.slane %v2415, 7
      %v2526 = vrot.slane %v2416, 7
      %v2527 = vsel %vm420, %v2525, %v2526
      %v2528 = vrot.slane %v2417, 7
      %v2529 = vrot.slane %v2418, 7
      %v2530 = vsel %vm420, %v2528, %v2529
      %v2578 = vrot.slane %v2390, 5
      %v2579 = vrot.slane %v2388, 5
      %v2580 = vrot.slane %v2392, 5
      %v2581 = vrot.slane %v2394, 5
      %v2582 = vrot.slane %v2396, 5
      %v2583 = vrot.slane %v2398, 5
      %v2584 = vrot.slane %v2400, 5
      %v2585 = vrot.slane %v2402, 5
      %v2586 = vrot.slane %v2404, 5
      %v2587 = vrot.slane %v2406, 5
      %v2588 = vrot.slane %v2408, 5
      %v2589 = vrot.slane %v2410, 5
      %v2590 = vrot.slane %v2412, 5
      %v2591 = vrot.slane %v2414, 5
      %v2592 = vrot.slane %v2416, 5
      %v2593 = vrot.slane %v2418, 5
      %v2610 = vsel %vm420, %v2435, %v2483
      %v2611 = vsel %vm420, %v2436, %v2486
      %v2612 = vsel %vm420, %v2437, %v2489
      %v2613 = vsel %vm420, %v2438, %v2492
      %v2614 = vsel %vm420, %v2439, %v2495
      %v2615 = vsel %vm420, %v2440, %v2498
      %v2616 = vsel %vm420, %v2441, %v2501
      %v2617 = vsel %vm420, %v2442, %v2504
      %v2618 = vsel %vm420, %v2443, %v2507
      %v2619 = vsel %vm420, %v2444, %v2510
      %v2620 = vsel %vm420, %v2445, %v2513
      %v2621 = vsel %vm420, %v2446, %v2516
      %v2622 = vsel %vm420, %v2447, %v2519
      %v2623 = vsel %vm420, %v2448, %v2522
      %v2624 = vsel %vm420, %v2449, %v2525
      %v2625 = vsel %vm420, %v2450, %v2528
      %v2626 = vsel %vm420, %v2484, %v2578
      %v2627 = vsel %vm420, %v2487, %v2579
      %v2628 = vsel %vm420, %v2490, %v2580
      %v2629 = vsel %vm420, %v2493, %v2581
      %v2630 = vsel %vm420, %v2496, %v2582
      %v2631 = vsel %vm420, %v2499, %v2583
      %v2632 = vsel %vm420, %v2502, %v2584
      %v2633 = vsel %vm420, %v2505, %v2585
      %v2634 = vsel %vm420, %v2508, %v2586
      %v2635 = vsel %vm420, %v2511, %v2587
      %v2636 = vsel %vm420, %v2514, %v2588
      %v2637 = vsel %vm420, %v2517, %v2589
      %v2638 = vsel %vm420, %v2520, %v2590
      %v2639 = vsel %vm420, %v2523, %v2591
      %v2640 = vsel %vm420, %v2526, %v2592
      %v2641 = vsel %vm420, %v2529, %v2593
      %v2672 = vrot.slane %v2610, 1
      %v2673 = vrot.slane %v2485, 1
      %v2674 = vsel %vm610, %v2672, %v2673
      %v2675 = vrot.slane %v2626, 1
      %v2676 = vsel %vm610, %v2673, %v2675
      %v2677 = vrot.slane %v2611, 1
      %v2678 = vrot.slane %v2488, 1
      %v2679 = vsel %vm610, %v2677, %v2678
      %v2680 = vrot.slane %v2627, 1
      %v2681 = vsel %vm610, %v2678, %v2680
      %v2682 = vrot.slane %v2612, 1
      %v2683 = vrot.slane %v2491, 1
      %v2684 = vsel %vm610, %v2682, %v2683
      %v2685 = vrot.slane %v2628, 1
      %v2686 = vsel %vm610, %v2683, %v2685
      %v2687 = vrot.slane %v2613, 1
      %v2688 = vrot.slane %v2494, 1
      %v2689 = vsel %vm610, %v2687, %v2688
      %v2690 = vrot.slane %v2629, 1
      %v2691 = vsel %vm610, %v2688, %v2690
      %v2692 = vrot.slane %v2614, 1
      %v2693 = vrot.slane %v2497, 1
      %v2694 = vsel %vm610, %v2692, %v2693
      %v2695 = vrot.slane %v2630, 1
      %v2696 = vsel %vm610, %v2693, %v2695
      %v2697 = vrot.slane %v2615, 1
      %v2698 = vrot.slane %v2500, 1
      %v2699 = vsel %vm610, %v2697, %v2698
      %v2700 = vrot.slane %v2631, 1
      %v2701 = vsel %vm610, %v2698, %v2700
      %v2702 = vrot.slane %v2616, 1
      %v2703 = vrot.slane %v2503, 1
      %v2704 = vsel %vm610, %v2702, %v2703
      %v2705 = vrot.slane %v2632, 1
      %v2706 = vsel %vm610, %v2703, %v2705
      %v2707 = vrot.slane %v2617, 1
      %v2708 = vrot.slane %v2506, 1
      %v2709 = vsel %vm610, %v2707, %v2708
      %v2710 = vrot.slane %v2633, 1
      %v2711 = vsel %vm610, %v2708, %v2710
      %v2712 = vrot.slane %v2618, 1
      %v2713 = vrot.slane %v2509, 1
      %v2714 = vsel %vm610, %v2712, %v2713
      %v2715 = vrot.slane %v2634, 1
      %v2716 = vsel %vm610, %v2713, %v2715
      %v2717 = vrot.slane %v2619, 1
      %v2718 = vrot.slane %v2512, 1
      %v2719 = vsel %vm610, %v2717, %v2718
      %v2720 = vrot.slane %v2635, 1
      %v2721 = vsel %vm610, %v2718, %v2720
      %v2722 = vrot.slane %v2620, 1
      %v2723 = vrot.slane %v2515, 1
      %v2724 = vsel %vm610, %v2722, %v2723
      %v2725 = vrot.slane %v2636, 1
      %v2726 = vsel %vm610, %v2723, %v2725
      %v2727 = vrot.slane %v2621, 1
      %v2728 = vrot.slane %v2518, 1
      %v2729 = vsel %vm610, %v2727, %v2728
      %v2730 = vrot.slane %v2637, 1
      %v2731 = vsel %vm610, %v2728, %v2730
      %v2732 = vrot.slane %v2622, 1
      %v2733 = vrot.slane %v2521, 1
      %v2734 = vsel %vm610, %v2732, %v2733
      %v2735 = vrot.slane %v2638, 1
      %v2736 = vsel %vm610, %v2733, %v2735
      %v2737 = vrot.slane %v2623, 1
      %v2738 = vrot.slane %v2524, 1
      %v2739 = vsel %vm610, %v2737, %v2738
      %v2740 = vrot.slane %v2639, 1
      %v2741 = vsel %vm610, %v2738, %v2740
      %v2742 = vrot.slane %v2624, 1
      %v2743 = vrot.slane %v2527, 1
      %v2744 = vsel %vm610, %v2742, %v2743
      %v2745 = vrot.slane %v2640, 1
      %v2746 = vsel %vm610, %v2743, %v2745
      %v2747 = vrot.slane %v2610, 2
      %v2748 = vrot.slane %v2485, 2
      %v2749 = vsel %vm686, %v2747, %v2748
      %v2750 = vrot.slane %v2626, 2
      %v2751 = vsel %vm686, %v2748, %v2750
      %v2752 = vrot.slane %v2611, 2
      %v2753 = vrot.slane %v2488, 2
      %v2754 = vsel %vm686, %v2752, %v2753
      %v2755 = vrot.slane %v2627, 2
      %v2756 = vsel %vm686, %v2753, %v2755
      %v2757 = vrot.slane %v2612, 2
      %v2758 = vrot.slane %v2491, 2
      %v2759 = vsel %vm686, %v2757, %v2758
      %v2760 = vrot.slane %v2628, 2
      %v2761 = vsel %vm686, %v2758, %v2760
      %v2762 = vrot.slane %v2613, 2
      %v2763 = vrot.slane %v2494, 2
      %v2764 = vsel %vm686, %v2762, %v2763
      %v2765 = vrot.slane %v2629, 2
      %v2766 = vsel %vm686, %v2763, %v2765
      %v2767 = vrot.slane %v2614, 2
      %v2768 = vrot.slane %v2497, 2
      %v2769 = vsel %vm686, %v2767, %v2768
      %v2770 = vrot.slane %v2630, 2
      %v2771 = vsel %vm686, %v2768, %v2770
      %v2772 = vrot.slane %v2615, 2
      %v2773 = vrot.slane %v2500, 2
      %v2774 = vsel %vm686, %v2772, %v2773
      %v2775 = vrot.slane %v2631, 2
      %v2776 = vsel %vm686, %v2773, %v2775
      %v2777 = vrot.slane %v2616, 2
      %v2778 = vrot.slane %v2503, 2
      %v2779 = vsel %vm686, %v2777, %v2778
      %v2780 = vrot.slane %v2632, 2
      %v2781 = vsel %vm686, %v2778, %v2780
      %v2782 = vrot.slane %v2617, 2
      %v2783 = vrot.slane %v2506, 2
      %v2784 = vsel %vm686, %v2782, %v2783
      %v2785 = vrot.slane %v2633, 2
      %v2786 = vsel %vm686, %v2783, %v2785
      %v2787 = vrot.slane %v2618, 2
      %v2788 = vrot.slane %v2509, 2
      %v2789 = vsel %vm686, %v2787, %v2788
      %v2790 = vrot.slane %v2634, 2
      %v2791 = vsel %vm686, %v2788, %v2790
      %v2792 = vrot.slane %v2619, 2
      %v2793 = vrot.slane %v2512, 2
      %v2794 = vsel %vm686, %v2792, %v2793
      %v2795 = vrot.slane %v2635, 2
      %v2796 = vsel %vm686, %v2793, %v2795
      %v2797 = vrot.slane %v2620, 2
      %v2798 = vrot.slane %v2515, 2
      %v2799 = vsel %vm686, %v2797, %v2798
      %v2800 = vrot.slane %v2636, 2
      %v2801 = vsel %vm686, %v2798, %v2800
      %v2802 = vrot.slane %v2621, 2
      %v2803 = vrot.slane %v2518, 2
      %v2804 = vsel %vm686, %v2802, %v2803
      %v2805 = vrot.slane %v2637, 2
      %v2806 = vsel %vm686, %v2803, %v2805
      %v2807 = vrot.slane %v2622, 2
      %v2808 = vrot.slane %v2521, 2
      %v2809 = vsel %vm686, %v2807, %v2808
      %v2810 = vrot.slane %v2638, 2
      %v2811 = vsel %vm686, %v2808, %v2810
      %v2812 = vrot.slane %v2623, 2
      %v2813 = vrot.slane %v2524, 2
      %v2814 = vsel %vm686, %v2812, %v2813
      %v2815 = vrot.slane %v2639, 2
      %v2816 = vsel %vm686, %v2813, %v2815
      %v2817 = vrot.slane %v2624, 2
      %v2818 = vrot.slane %v2527, 2
      %v2819 = vsel %vm686, %v2817, %v2818
      %v2820 = vrot.slane %v2640, 2
      %v2821 = vsel %vm686, %v2818, %v2820
      %v2824 = vrot.slane %v2625, 1
      %v2825 = vrot.slane %v2530, 1
      %v2826 = vsel %vm610, %v2824, %v2825
      %v2827 = vrot.slane %v2641, 1
      %v2828 = vsel %vm610, %v2825, %v2827
      %v2829 = vrot.slane %v2625, 2
      %v2830 = vrot.slane %v2530, 2
      %v2831 = vsel %vm686, %v2829, %v2830
      %v2832 = vrot.slane %v2641, 2
      %v2833 = vsel %vm686, %v2830, %v2832
      %2834 = vrot.lane.b32.xlu0 %v2674, 20
      %v2835 = vpop.permute.xlu0 %2834
      %2836 = vrot.lane.b32.xlu0 %v2676, 20
      %v2837 = vpop.permute.xlu0 %2836
      %2838 = vrot.lane.b32.xlu0 %v2679, 20
      %v2839 = vpop.permute.xlu0 %2838
      %2840 = vrot.lane.b32.xlu0 %v2681, 20
      %v2841 = vpop.permute.xlu0 %2840
      %2842 = vrot.lane.b32.xlu0 %v2684, 20
      %v2843 = vpop.permute.xlu0 %2842
      %2844 = vrot.lane.b32.xlu0 %v2686, 20
      %v2845 = vpop.permute.xlu0 %2844
      %2846 = vrot.lane.b32.xlu0 %v2689, 20
      %v2847 = vpop.permute.xlu0 %2846
      %2848 = vrot.lane.b32.xlu0 %v2691, 20
      %v2849 = vpop.permute.xlu0 %2848
      %2850 = vrot.lane.b32.xlu0 %v2694, 20
      %v2851 = vpop.permute.xlu0 %2850
      %2852 = vrot.lane.b32.xlu0 %v2696, 20
      %v2853 = vpop.permute.xlu0 %2852
      %2854 = vrot.lane.b32.xlu0 %v2699, 20
      %v2855 = vpop.permute.xlu0 %2854
      %2856 = vrot.lane.b32.xlu0 %v2701, 20
      %v2857 = vpop.permute.xlu0 %2856
      %2858 = vrot.lane.b32.xlu0 %v2704, 20
      %v2859 = vpop.permute.xlu0 %2858
      %2860 = vrot.lane.b32.xlu0 %v2706, 20
      %v2861 = vpop.permute.xlu0 %2860
      %2862 = vrot.lane.b32.xlu0 %v2709, 20
      %v2863 = vpop.permute.xlu0 %2862
      %2864 = vrot.lane.b32.xlu0 %v2711, 20
      %v2865 = vpop.permute.xlu0 %2864
      %2866 = vrot.lane.b32.xlu0 %v2714, 20
      %v2867 = vpop.permute.xlu0 %2866
      %2868 = vrot.lane.b32.xlu0 %v2716, 20
      %v2869 = vpop.permute.xlu0 %2868
      %2870 = vrot.lane.b32.xlu0 %v2719, 20
      %v2871 = vpop.permute.xlu0 %2870
      %2872 = vrot.lane.b32.xlu0 %v2721, 20
      %v2873 = vpop.permute.xlu0 %2872
      %2874 = vrot.lane.b32.xlu0 %v2724, 20
      %v2875 = vpop.permute.xlu0 %2874
      %2876 = vrot.lane.b32.xlu0 %v2726, 20
      %v2877 = vpop.permute.xlu0 %2876
      %2878 = vrot.lane.b32.xlu0 %v2729, 20
      %v2879 = vpop.permute.xlu0 %2878
      %2880 = vrot.lane.b32.xlu0 %v2731, 20
      %v2881 = vpop.permute.xlu0 %2880
      %2882 = vrot.lane.b32.xlu0 %v2734, 20
      %v2883 = vpop.permute.xlu0 %2882
      %2884 = vrot.lane.b32.xlu0 %v2736, 20
      %v2885 = vpop.permute.xlu0 %2884
      %2886 = vrot.lane.b32.xlu0 %v2739, 20
      %v2887 = vpop.permute.xlu0 %2886
      %2888 = vrot.lane.b32.xlu0 %v2741, 20
      %v2889 = vpop.permute.xlu0 %2888
      %2890 = vrot.lane.b32.xlu0 %v2744, 20
      %v2891 = vpop.permute.xlu0 %2890
      %2892 = vrot.lane.b32.xlu0 %v2746, 20
      %v2893 = vpop.permute.xlu0 %2892
      %2924 = vrot.lane.b32.xlu0 %v2749, 40
      %v2925 = vpop.permute.xlu0 %2924
      %2926 = vrot.lane.b32.xlu0 %v2751, 40
      %v2927 = vpop.permute.xlu0 %2926
      %2928 = vrot.lane.b32.xlu0 %v2754, 40
      %v2929 = vpop.permute.xlu0 %2928
      %2930 = vrot.lane.b32.xlu0 %v2756, 40
      %v2931 = vpop.permute.xlu0 %2930
      %2932 = vrot.lane.b32.xlu0 %v2759, 40
      %v2933 = vpop.permute.xlu0 %2932
      %2934 = vrot.lane.b32.xlu0 %v2761, 40
      %v2935 = vpop.permute.xlu0 %2934
      %2936 = vrot.lane.b32.xlu0 %v2764, 40
      %v2937 = vpop.permute.xlu0 %2936
      %2938 = vrot.lane.b32.xlu0 %v2766, 40
      %v2939 = vpop.permute.xlu0 %2938
      %2940 = vrot.lane.b32.xlu0 %v2769, 40
      %v2941 = vpop.permute.xlu0 %2940
      %2942 = vrot.lane.b32.xlu0 %v2771, 40
      %v2943 = vpop.permute.xlu0 %2942
      %2944 = vrot.lane.b32.xlu0 %v2774, 40
      %v2945 = vpop.permute.xlu0 %2944
      %2946 = vrot.lane.b32.xlu0 %v2776, 40
      %v2947 = vpop.permute.xlu0 %2946
      %2948 = vrot.lane.b32.xlu0 %v2779, 40
      %v2949 = vpop.permute.xlu0 %2948
      %2950 = vrot.lane.b32.xlu0 %v2781, 40
      %v2951 = vpop.permute.xlu0 %2950
      %2952 = vrot.lane.b32.xlu0 %v2784, 40
      %v2953 = vpop.permute.xlu0 %2952
      %2954 = vrot.lane.b32.xlu0 %v2786, 40
      %v2955 = vpop.permute.xlu0 %2954
      %2956 = vrot.lane.b32.xlu0 %v2789, 40
      %v2957 = vpop.permute.xlu0 %2956
      %2958 = vrot.lane.b32.xlu0 %v2791, 40
      %v2959 = vpop.permute.xlu0 %2958
      %2960 = vrot.lane.b32.xlu0 %v2794, 40
      %v2961 = vpop.permute.xlu0 %2960
      %2962 = vrot.lane.b32.xlu0 %v2796, 40
      %v2963 = vpop.permute.xlu0 %2962
      %2964 = vrot.lane.b32.xlu0 %v2799, 40
      %v2965 = vpop.permute.xlu0 %2964
      %2966 = vrot.lane.b32.xlu0 %v2801, 40
      %v2967 = vpop.permute.xlu0 %2966
      %2968 = vrot.lane.b32.xlu0 %v2804, 40
      %v2969 = vpop.permute.xlu0 %2968
      %2970 = vrot.lane.b32.xlu0 %v2806, 40
      %v2971 = vpop.permute.xlu0 %2970
      %2972 = vrot.lane.b32.xlu0 %v2809, 40
      %v2973 = vpop.permute.xlu0 %2972
      %2974 = vrot.lane.b32.xlu0 %v2811, 40
      %v2975 = vpop.permute.xlu0 %2974
      %2976 = vrot.lane.b32.xlu0 %v2814, 40
      %v2977 = vpop.permute.xlu0 %2976
      %2978 = vrot.lane.b32.xlu0 %v2816, 40
      %v2979 = vpop.permute.xlu0 %2978
      %2980 = vrot.lane.b32.xlu0 %v2819, 40
      %v2981 = vpop.permute.xlu0 %2980
      %2982 = vrot.lane.b32.xlu0 %v2821, 40
      %v2983 = vpop.permute.xlu0 %2982
      %3014 = vrot.lane.b32.xlu0 %v2611, 60
      %v3015 = vpop.permute.xlu0 %3014
      %3016 = vrot.lane.b32.xlu0 %v2488, 60
      %v3017 = vpop.permute.xlu0 %3016
      %3018 = vrot.lane.b32.xlu0 %v2610, 60
      %v3019 = vpop.permute.xlu0 %3018
      %3020 = vrot.lane.b32.xlu0 %v2485, 60
      %v3021 = vpop.permute.xlu0 %3020
      %3022 = vrot.lane.b32.xlu0 %v2612, 60
      %v3023 = vpop.permute.xlu0 %3022
      %3024 = vrot.lane.b32.xlu0 %v2491, 60
      %v3025 = vpop.permute.xlu0 %3024
      %3026 = vrot.lane.b32.xlu0 %v2613, 60
      %v3027 = vpop.permute.xlu0 %3026
      %3028 = vrot.lane.b32.xlu0 %v2494, 60
      %v3029 = vpop.permute.xlu0 %3028
      %3030 = vrot.lane.b32.xlu0 %v2614, 60
      %v3031 = vpop.permute.xlu0 %3030
      %3032 = vrot.lane.b32.xlu0 %v2497, 60
      %v3033 = vpop.permute.xlu0 %3032
      %3034 = vrot.lane.b32.xlu0 %v2615, 60
      %v3035 = vpop.permute.xlu0 %3034
      %3036 = vrot.lane.b32.xlu0 %v2500, 60
      %v3037 = vpop.permute.xlu0 %3036
      %3038 = vrot.lane.b32.xlu0 %v2616, 60
      %v3039 = vpop.permute.xlu0 %3038
      %3040 = vrot.lane.b32.xlu0 %v2503, 60
      %v3041 = vpop.permute.xlu0 %3040
      %3042 = vrot.lane.b32.xlu0 %v2617, 60
      %v3043 = vpop.permute.xlu0 %3042
      %3044 = vrot.lane.b32.xlu0 %v2506, 60
      %v3045 = vpop.permute.xlu0 %3044
      %3046 = vrot.lane.b32.xlu0 %v2618, 60
      %v3047 = vpop.permute.xlu0 %3046
      %3048 = vrot.lane.b32.xlu0 %v2509, 60
      %v3049 = vpop.permute.xlu0 %3048
      %3050 = vrot.lane.b32.xlu0 %v2619, 60
      %v3051 = vpop.permute.xlu0 %3050
      %3052 = vrot.lane.b32.xlu0 %v2512, 60
      %v3053 = vpop.permute.xlu0 %3052
      %3054 = vrot.lane.b32.xlu0 %v2620, 60
      %v3055 = vpop.permute.xlu0 %3054
      %3056 = vrot.lane.b32.xlu0 %v2515, 60
      %v3057 = vpop.permute.xlu0 %3056
      %3058 = vrot.lane.b32.xlu0 %v2621, 60
      %v3059 = vpop.permute.xlu0 %3058
      %3060 = vrot.lane.b32.xlu0 %v2518, 60
      %v3061 = vpop.permute.xlu0 %3060
      %3062 = vrot.lane.b32.xlu0 %v2622, 60
      %v3063 = vpop.permute.xlu0 %3062
      %3064 = vrot.lane.b32.xlu0 %v2521, 60
      %v3065 = vpop.permute.xlu0 %3064
      %3066 = vrot.lane.b32.xlu0 %v2623, 60
      %v3067 = vpop.permute.xlu0 %3066
      %3068 = vrot.lane.b32.xlu0 %v2524, 60
      %v3069 = vpop.permute.xlu0 %3068
      %3070 = vrot.lane.b32.xlu0 %v2624, 60
      %v3071 = vpop.permute.xlu0 %3070
      %3072 = vrot.lane.b32.xlu0 %v2527, 60
      %v3073 = vpop.permute.xlu0 %3072
      %3074 = vrot.lane.b32.xlu0 %v2625, 60
      %v3075 = vpop.permute.xlu0 %3074
      %3076 = vrot.lane.b32.xlu0 %v2530, 60
      %v3077 = vpop.permute.xlu0 %3076
      %3110 = vrot.lane.b32.xlu0 %v2679, 80
      %v3111 = vpop.permute.xlu0 %3110
      %3112 = vrot.lane.b32.xlu0 %v2681, 80
      %v3113 = vpop.permute.xlu0 %3112
      %3114 = vrot.lane.b32.xlu0 %v2674, 80
      %v3115 = vpop.permute.xlu0 %3114
      %3116 = vrot.lane.b32.xlu0 %v2676, 80
      %v3117 = vpop.permute.xlu0 %3116
      %3118 = vrot.lane.b32.xlu0 %v2684, 80
      %v3119 = vpop.permute.xlu0 %3118
      %3120 = vrot.lane.b32.xlu0 %v2686, 80
      %v3121 = vpop.permute.xlu0 %3120
      %3122 = vrot.lane.b32.xlu0 %v2689, 80
      %v3123 = vpop.permute.xlu0 %3122
      %3124 = vrot.lane.b32.xlu0 %v2691, 80
      %v3125 = vpop.permute.xlu0 %3124
      %3126 = vrot.lane.b32.xlu0 %v2694, 80
      %v3127 = vpop.permute.xlu0 %3126
      %3128 = vrot.lane.b32.xlu0 %v2696, 80
      %v3129 = vpop.permute.xlu0 %3128
      %3130 = vrot.lane.b32.xlu0 %v2699, 80
      %v3131 = vpop.permute.xlu0 %3130
      %3132 = vrot.lane.b32.xlu0 %v2701, 80
      %v3133 = vpop.permute.xlu0 %3132
      %3134 = vrot.lane.b32.xlu0 %v2704, 80
      %v3135 = vpop.permute.xlu0 %3134
      %3136 = vrot.lane.b32.xlu0 %v2706, 80
      %v3137 = vpop.permute.xlu0 %3136
      %3138 = vrot.lane.b32.xlu0 %v2709, 80
      %v3139 = vpop.permute.xlu0 %3138
      %3140 = vrot.lane.b32.xlu0 %v2711, 80
      %v3141 = vpop.permute.xlu0 %3140
      %3142 = vrot.lane.b32.xlu0 %v2714, 80
      %v3143 = vpop.permute.xlu0 %3142
      %3144 = vrot.lane.b32.xlu0 %v2716, 80
      %v3145 = vpop.permute.xlu0 %3144
      %3146 = vrot.lane.b32.xlu0 %v2719, 80
      %v3147 = vpop.permute.xlu0 %3146
      %3148 = vrot.lane.b32.xlu0 %v2721, 80
      %v3149 = vpop.permute.xlu0 %3148
      %3150 = vrot.lane.b32.xlu0 %v2724, 80
      %v3151 = vpop.permute.xlu0 %3150
      %3152 = vrot.lane.b32.xlu0 %v2726, 80
      %v3153 = vpop.permute.xlu0 %3152
      %3154 = vrot.lane.b32.xlu0 %v2729, 80
      %v3155 = vpop.permute.xlu0 %3154
      %3156 = vrot.lane.b32.xlu0 %v2731, 80
      %v3157 = vpop.permute.xlu0 %3156
      %3158 = vrot.lane.b32.xlu0 %v2734, 80
      %v3159 = vpop.permute.xlu0 %3158
      %3160 = vrot.lane.b32.xlu0 %v2736, 80
      %v3161 = vpop.permute.xlu0 %3160
      %3162 = vrot.lane.b32.xlu0 %v2739, 80
      %v3163 = vpop.permute.xlu0 %3162
      %3164 = vrot.lane.b32.xlu0 %v2741, 80
      %v3165 = vpop.permute.xlu0 %3164
      %3166 = vrot.lane.b32.xlu0 %v2744, 80
      %v3167 = vpop.permute.xlu0 %3166
      %3168 = vrot.lane.b32.xlu0 %v2746, 80
      %v3169 = vpop.permute.xlu0 %3168
      %3170 = vrot.lane.b32.xlu0 %v2826, 80
      %v3171 = vpop.permute.xlu0 %3170
      %3172 = vrot.lane.b32.xlu0 %v2828, 80
      %v3173 = vpop.permute.xlu0 %3172
      %3206 = vrot.lane.b32.xlu0 %v2754, 100
      %v3207 = vpop.permute.xlu0 %3206
      %3208 = vrot.lane.b32.xlu0 %v2756, 100
      %v3209 = vpop.permute.xlu0 %3208
      %3210 = vrot.lane.b32.xlu0 %v2749, 100
      %v3211 = vpop.permute.xlu0 %3210
      %3212 = vrot.lane.b32.xlu0 %v2751, 100
      %v3213 = vpop.permute.xlu0 %3212
      %3214 = vrot.lane.b32.xlu0 %v2759, 100
      %v3215 = vpop.permute.xlu0 %3214
      %3216 = vrot.lane.b32.xlu0 %v2761, 100
      %v3217 = vpop.permute.xlu0 %3216
      %3218 = vrot.lane.b32.xlu0 %v2764, 100
      %v3219 = vpop.permute.xlu0 %3218
      %3220 = vrot.lane.b32.xlu0 %v2766, 100
      %v3221 = vpop.permute.xlu0 %3220
      %3222 = vrot.lane.b32.xlu0 %v2769, 100
      %v3223 = vpop.permute.xlu0 %3222
      %3224 = vrot.lane.b32.xlu0 %v2771, 100
      %v3225 = vpop.permute.xlu0 %3224
      %3226 = vrot.lane.b32.xlu0 %v2774, 100
      %v3227 = vpop.permute.xlu0 %3226
      %3228 = vrot.lane.b32.xlu0 %v2776, 100
      %v3229 = vpop.permute.xlu0 %3228
      %3230 = vrot.lane.b32.xlu0 %v2779, 100
      %v3231 = vpop.permute.xlu0 %3230
      %3232 = vrot.lane.b32.xlu0 %v2781, 100
      %v3233 = vpop.permute.xlu0 %3232
      %3234 = vrot.lane.b32.xlu0 %v2784, 100
      %v3235 = vpop.permute.xlu0 %3234
      %3236 = vrot.lane.b32.xlu0 %v2786, 100
      %v3237 = vpop.permute.xlu0 %3236
      %3238 = vrot.lane.b32.xlu0 %v2789, 100
      %v3239 = vpop.permute.xlu0 %3238
      %3240 = vrot.lane.b32.xlu0 %v2791, 100
      %v3241 = vpop.permute.xlu0 %3240
      %3242 = vrot.lane.b32.xlu0 %v2794, 100
      %v3243 = vpop.permute.xlu0 %3242
      %3244 = vrot.lane.b32.xlu0 %v2796, 100
      %v3245 = vpop.permute.xlu0 %3244
      %3246 = vrot.lane.b32.xlu0 %v2799, 100
      %v3247 = vpop.permute.xlu0 %3246
      %3248 = vrot.lane.b32.xlu0 %v2801, 100
      %v3249 = vpop.permute.xlu0 %3248
      %3250 = vrot.lane.b32.xlu0 %v2804, 100
      %v3251 = vpop.permute.xlu0 %3250
      %3252 = vrot.lane.b32.xlu0 %v2806, 100
      %v3253 = vpop.permute.xlu0 %3252
      %3254 = vrot.lane.b32.xlu0 %v2809, 100
      %v3255 = vpop.permute.xlu0 %3254
      %3256 = vrot.lane.b32.xlu0 %v2811, 100
      %v3257 = vpop.permute.xlu0 %3256
      %3258 = vrot.lane.b32.xlu0 %v2814, 100
      %v3259 = vpop.permute.xlu0 %3258
      %3260 = vrot.lane.b32.xlu0 %v2816, 100
      %v3261 = vpop.permute.xlu0 %3260
      %3262 = vrot.lane.b32.xlu0 %v2819, 100
      %v3263 = vpop.permute.xlu0 %3262
      %3264 = vrot.lane.b32.xlu0 %v2821, 100
      %v3265 = vpop.permute.xlu0 %3264
      %3266 = vrot.lane.b32.xlu0 %v2831, 100
      %v3267 = vpop.permute.xlu0 %3266
      %3268 = vrot.lane.b32.xlu0 %v2833, 100
      %v3269 = vpop.permute.xlu0 %3268
      %3302 = vrot.lane.b32.xlu0 %v2610, 120
      %v3303 = vpop.permute.xlu0 %3302
      %3304 = vrot.lane.b32.xlu0 %v2485, 120
      %v3305 = vpop.permute.xlu0 %3304
      %3306 = vrot.lane.b32.xlu0 %v2612, 120
      %v3307 = vpop.permute.xlu0 %3306
      %3308 = vrot.lane.b32.xlu0 %v2491, 120
      %v3309 = vpop.permute.xlu0 %3308
      %3310 = vrot.lane.b32.xlu0 %v2613, 120
      %v3311 = vpop.permute.xlu0 %3310
      %3312 = vrot.lane.b32.xlu0 %v2494, 120
      %v3313 = vpop.permute.xlu0 %3312
      %3314 = vrot.lane.b32.xlu0 %v2614, 120
      %v3315 = vpop.permute.xlu0 %3314
      %3316 = vrot.lane.b32.xlu0 %v2497, 120
      %v3317 = vpop.permute.xlu0 %3316
      %3318 = vrot.lane.b32.xlu0 %v2615, 120
      %v3319 = vpop.permute.xlu0 %3318
      %3320 = vrot.lane.b32.xlu0 %v2500, 120
      %v3321 = vpop.permute.xlu0 %3320
      %3322 = vrot.lane.b32.xlu0 %v2616, 120
      %v3323 = vpop.permute.xlu0 %3322
      %3324 = vrot.lane.b32.xlu0 %v2503, 120
      %v3325 = vpop.permute.xlu0 %3324
      %3326 = vrot.lane.b32.xlu0 %v2617, 120
      %v3327 = vpop.permute.xlu0 %3326
      %3328 = vrot.lane.b32.xlu0 %v2506, 120
      %v3329 = vpop.permute.xlu0 %3328
      %3330 = vrot.lane.b32.xlu0 %v2618, 120
      %v3331 = vpop.permute.xlu0 %3330
      %3332 = vrot.lane.b32.xlu0 %v2509, 120
      %v3333 = vpop.permute.xlu0 %3332
      %3334 = vrot.lane.b32.xlu0 %v2619, 120
      %v3335 = vpop.permute.xlu0 %3334
      %3336 = vrot.lane.b32.xlu0 %v2512, 120
      %v3337 = vpop.permute.xlu0 %3336
      %3338 = vrot.lane.b32.xlu0 %v2620, 120
      %v3339 = vpop.permute.xlu0 %3338
      %3340 = vrot.lane.b32.xlu0 %v2515, 120
      %v3341 = vpop.permute.xlu0 %3340
      %3342 = vrot.lane.b32.xlu0 %v2621, 120
      %v3343 = vpop.permute.xlu0 %3342
      %3344 = vrot.lane.b32.xlu0 %v2518, 120
      %v3345 = vpop.permute.xlu0 %3344
      %3346 = vrot.lane.b32.xlu0 %v2622, 120
      %v3347 = vpop.permute.xlu0 %3346
      %3348 = vrot.lane.b32.xlu0 %v2521, 120
      %v3349 = vpop.permute.xlu0 %3348
      %3350 = vrot.lane.b32.xlu0 %v2623, 120
      %v3351 = vpop.permute.xlu0 %3350
      %3352 = vrot.lane.b32.xlu0 %v2524, 120
      %v3353 = vpop.permute.xlu0 %3352
      %3354 = vrot.lane.b32.xlu0 %v2624, 120
      %v3355 = vpop.permute.xlu0 %3354
      %3356 = vrot.lane.b32.xlu0 %v2527, 120
      %v3357 = vpop.permute.xlu0 %3356
      %3358 = vrot.lane.b32.xlu0 %v2625, 120
      %v3359 = vpop.permute.xlu0 %3358
      %3360 = vrot.lane.b32.xlu0 %v2530, 120
      %v3361 = vpop.permute.xlu0 %3360
      %3392 = vrot.lane.b32.xlu0 %v2674, 12
      %v3393 = vpop.permute.xlu0 %3392
      %3394 = vrot.lane.b32.xlu0 %v2676, 12
      %v3395 = vpop.permute.xlu0 %3394
      %3396 = vrot.lane.b32.xlu0 %v2684, 12
      %v3397 = vpop.permute.xlu0 %3396
      %3398 = vrot.lane.b32.xlu0 %v2686, 12
      %v3399 = vpop.permute.xlu0 %3398
      %3400 = vrot.lane.b32.xlu0 %v2689, 12
      %v3401 = vpop.permute.xlu0 %3400
      %3402 = vrot.lane.b32.xlu0 %v2691, 12
      %v3403 = vpop.permute.xlu0 %3402
      %3404 = vrot.lane.b32.xlu0 %v2694, 12
      %v3405 = vpop.permute.xlu0 %3404
      %3406 = vrot.lane.b32.xlu0 %v2696, 12
      %v3407 = vpop.permute.xlu0 %3406
      %3408 = vrot.lane.b32.xlu0 %v2699, 12
      %v3409 = vpop.permute.xlu0 %3408
      %3410 = vrot.lane.b32.xlu0 %v2701, 12
      %v3411 = vpop.permute.xlu0 %3410
      %3412 = vrot.lane.b32.xlu0 %v2704, 12
      %v3413 = vpop.permute.xlu0 %3412
      %3414 = vrot.lane.b32.xlu0 %v2706, 12
      %v3415 = vpop.permute.xlu0 %3414
      %3416 = vrot.lane.b32.xlu0 %v2709, 12
      %v3417 = vpop.permute.xlu0 %3416
      %3418 = vrot.lane.b32.xlu0 %v2711, 12
      %v3419 = vpop.permute.xlu0 %3418
      %3420 = vrot.lane.b32.xlu0 %v2714, 12
      %v3421 = vpop.permute.xlu0 %3420
      %3422 = vrot.lane.b32.xlu0 %v2716, 12
      %v3423 = vpop.permute.xlu0 %3422
      %3424 = vrot.lane.b32.xlu0 %v2719, 12
      %v3425 = vpop.permute.xlu0 %3424
      %3426 = vrot.lane.b32.xlu0 %v2721, 12
      %v3427 = vpop.permute.xlu0 %3426
      %3428 = vrot.lane.b32.xlu0 %v2724, 12
      %v3429 = vpop.permute.xlu0 %3428
      %3430 = vrot.lane.b32.xlu0 %v2726, 12
      %v3431 = vpop.permute.xlu0 %3430
      %3432 = vrot.lane.b32.xlu0 %v2729, 12
      %v3433 = vpop.permute.xlu0 %3432
      %3434 = vrot.lane.b32.xlu0 %v2731, 12
      %v3435 = vpop.permute.xlu0 %3434
      %3436 = vrot.lane.b32.xlu0 %v2734, 12
      %v3437 = vpop.permute.xlu0 %3436
      %3438 = vrot.lane.b32.xlu0 %v2736, 12
      %v3439 = vpop.permute.xlu0 %3438
      %3440 = vrot.lane.b32.xlu0 %v2739, 12
      %v3441 = vpop.permute.xlu0 %3440
      %3442 = vrot.lane.b32.xlu0 %v2741, 12
      %v3443 = vpop.permute.xlu0 %3442
      %3444 = vrot.lane.b32.xlu0 %v2744, 12
      %v3445 = vpop.permute.xlu0 %3444
      %3446 = vrot.lane.b32.xlu0 %v2746, 12
      %v3447 = vpop.permute.xlu0 %3446
      %3448 = vrot.lane.b32.xlu0 %v2826, 12
      %v3449 = vpop.permute.xlu0 %3448
      %3450 = vrot.lane.b32.xlu0 %v2828, 12
      %v3451 = vpop.permute.xlu0 %3450
      %3482 = vrot.lane.b32.xlu0 %v2749, 32
      %v3483 = vpop.permute.xlu0 %3482
      %3484 = vrot.lane.b32.xlu0 %v2751, 32
      %v3485 = vpop.permute.xlu0 %3484
      %3486 = vrot.lane.b32.xlu0 %v2759, 32
      %v3487 = vpop.permute.xlu0 %3486
      %3488 = vrot.lane.b32.xlu0 %v2761, 32
      %v3489 = vpop.permute.xlu0 %3488
      %3490 = vrot.lane.b32.xlu0 %v2764, 32
      %v3491 = vpop.permute.xlu0 %3490
      %3492 = vrot.lane.b32.xlu0 %v2766, 32
      %v3493 = vpop.permute.xlu0 %3492
      %3494 = vrot.lane.b32.xlu0 %v2769, 32
      %v3495 = vpop.permute.xlu0 %3494
      %3496 = vrot.lane.b32.xlu0 %v2771, 32
      %v3497 = vpop.permute.xlu0 %3496
      %3498 = vrot.lane.b32.xlu0 %v2774, 32
      %v3499 = vpop.permute.xlu0 %3498
      %3500 = vrot.lane.b32.xlu0 %v2776, 32
      %v3501 = vpop.permute.xlu0 %3500
      %3502 = vrot.lane.b32.xlu0 %v2779, 32
      %v3503 = vpop.permute.xlu0 %3502
      %3504 = vrot.lane.b32.xlu0 %v2781, 32
      %v3505 = vpop.permute.xlu0 %3504
      %3506 = vrot.lane.b32.xlu0 %v2784, 32
      %v3507 = vpop.permute.xlu0 %3506
      %3508 = vrot.lane.b32.xlu0 %v2786, 32
      %v3509 = vpop.permute.xlu0 %3508
      %3510 = vrot.lane.b32.xlu0 %v2789, 32
      %v3511 = vpop.permute.xlu0 %3510
      %3512 = vrot.lane.b32.xlu0 %v2791, 32
      %v3513 = vpop.permute.xlu0 %3512
      %3514 = vrot.lane.b32.xlu0 %v2794, 32
      %v3515 = vpop.permute.xlu0 %3514
      %3516 = vrot.lane.b32.xlu0 %v2796, 32
      %v3517 = vpop.permute.xlu0 %3516
      %3518 = vrot.lane.b32.xlu0 %v2799, 32
      %v3519 = vpop.permute.xlu0 %3518
      %3520 = vrot.lane.b32.xlu0 %v2801, 32
      %v3521 = vpop.permute.xlu0 %3520
      %3522 = vrot.lane.b32.xlu0 %v2804, 32
      %v3523 = vpop.permute.xlu0 %3522
      %3524 = vrot.lane.b32.xlu0 %v2806, 32
      %v3525 = vpop.permute.xlu0 %3524
      %3526 = vrot.lane.b32.xlu0 %v2809, 32
      %v3527 = vpop.permute.xlu0 %3526
      %3528 = vrot.lane.b32.xlu0 %v2811, 32
      %v3529 = vpop.permute.xlu0 %3528
      %3530 = vrot.lane.b32.xlu0 %v2814, 32
      %v3531 = vpop.permute.xlu0 %3530
      %3532 = vrot.lane.b32.xlu0 %v2816, 32
      %v3533 = vpop.permute.xlu0 %3532
      %3534 = vrot.lane.b32.xlu0 %v2819, 32
      %v3535 = vpop.permute.xlu0 %3534
      %3536 = vrot.lane.b32.xlu0 %v2821, 32
      %v3537 = vpop.permute.xlu0 %3536
      %3538 = vrot.lane.b32.xlu0 %v2831, 32
      %v3539 = vpop.permute.xlu0 %3538
      %3540 = vrot.lane.b32.xlu0 %v2833, 32
      %v3541 = vpop.permute.xlu0 %3540
      %v3572 = vsel %vm1640, %v2610, %v2835
      %v3573 = vsel %vm1640, %v2485, %v2837
      %v3574 = vsel %vm1640, %v2611, %v2839
      %v3575 = vsel %vm1640, %v2488, %v2841
      %v3576 = vsel %vm1640, %v2612, %v2843
      %v3577 = vsel %vm1640, %v2491, %v2845
      %v3578 = vsel %vm1640, %v2613, %v2847
      %v3579 = vsel %vm1640, %v2494, %v2849
      %v3580 = vsel %vm1640, %v2614, %v2851
      %v3581 = vsel %vm1640, %v2497, %v2853
      %v3582 = vsel %vm1640, %v2615, %v2855
      %v3583 = vsel %vm1640, %v2500, %v2857
      %v3584 = vsel %vm1640, %v2616, %v2859
      %v3585 = vsel %vm1640, %v2503, %v2861
      %v3586 = vsel %vm1640, %v2617, %v2863
      %v3587 = vsel %vm1640, %v2506, %v2865
      %v3588 = vsel %vm1640, %v2618, %v2867
      %v3589 = vsel %vm1640, %v2509, %v2869
      %v3590 = vsel %vm1640, %v2619, %v2871
      %v3591 = vsel %vm1640, %v2512, %v2873
      %v3592 = vsel %vm1640, %v2620, %v2875
      %v3593 = vsel %vm1640, %v2515, %v2877
      %v3594 = vsel %vm1640, %v2621, %v2879
      %v3595 = vsel %vm1640, %v2518, %v2881
      %v3596 = vsel %vm1640, %v2622, %v2883
      %v3597 = vsel %vm1640, %v2521, %v2885
      %v3598 = vsel %vm1640, %v2623, %v2887
      %v3599 = vsel %vm1640, %v2524, %v2889
      %v3600 = vsel %vm1640, %v2624, %v2891
      %v3601 = vsel %vm1640, %v2527, %v2893
      %vm3602 = vcmask 326656
      %v3603 = vsel %vm3602, %v3572, %v2925
      %v3604 = vsel %vm3602, %v3573, %v2927
      %v3605 = vsel %vm3602, %v3574, %v2929
      %v3606 = vsel %vm3602, %v3575, %v2931
      %v3607 = vsel %vm3602, %v3576, %v2933
      %v3608 = vsel %vm3602, %v3577, %v2935
      %v3609 = vsel %vm3602, %v3578, %v2937
      %v3610 = vsel %vm3602, %v3579, %v2939
      %v3611 = vsel %vm3602, %v3580, %v2941
      %v3612 = vsel %vm3602, %v3581, %v2943
      %v3613 = vsel %vm3602, %v3582, %v2945
      %v3614 = vsel %vm3602, %v3583, %v2947
      %v3615 = vsel %vm3602, %v3584, %v2949
      %v3616 = vsel %vm3602, %v3585, %v2951
      %v3617 = vsel %vm3602, %v3586, %v2953
      %v3618 = vsel %vm3602, %v3587, %v2955
      %v3619 = vsel %vm3602, %v3588, %v2957
      %v3620 = vsel %vm3602, %v3589, %v2959
      %v3621 = vsel %vm3602, %v3590, %v2961
      %v3622 = vsel %vm3602, %v3591, %v2963
      %v3623 = vsel %vm3602, %v3592, %v2965
      %v3624 = vsel %vm3602, %v3593, %v2967
      %v3625 = vsel %vm3602, %v3594, %v2969
      %v3626 = vsel %vm3602, %v3595, %v2971
      %v3627 = vsel %vm3602, %v3596, %v2973
      %v3628 = vsel %vm3602, %v3597, %v2975
      %v3629 = vsel %vm3602, %v3598, %v2977
      %v3630 = vsel %vm3602, %v3599, %v2979
      %v3631 = vsel %vm3602, %v3600, %v2981
      %v3632 = vsel %vm3602, %v3601, %v2983
      %vm3633 = vcmask 490496
      %v3634 = vsel %vm3633, %v3603, %v3015
      %v3635 = vsel %vm3633, %v3604, %v3017
      %v3636 = vsel %vm3633, %v3605, %v3019
      %v3637 = vsel %vm3633, %v3606, %v3021
      %v3638 = vsel %vm3633, %v3603, %v3023
      %v3639 = vsel %vm3633, %v3604, %v3025
      %v3640 = vsel %vm3633, %v3607, %v3027
      %v3641 = vsel %vm3633, %v3608, %v3029
      %v3642 = vsel %vm3633, %v3609, %v3031
      %v3643 = vsel %vm3633, %v3610, %v3033
      %v3644 = vsel %vm3633, %v3611, %v3035
      %v3645 = vsel %vm3633, %v3612, %v3037
      %v3646 = vsel %vm3633, %v3613, %v3039
      %v3647 = vsel %vm3633, %v3614, %v3041
      %v3648 = vsel %vm3633, %v3615, %v3043
      %v3649 = vsel %vm3633, %v3616, %v3045
      %v3650 = vsel %vm3633, %v3617, %v3047
      %v3651 = vsel %vm3633, %v3618, %v3049
      %v3652 = vsel %vm3633, %v3619, %v3051
      %v3653 = vsel %vm3633, %v3620, %v3053
      %v3654 = vsel %vm3633, %v3621, %v3055
      %v3655 = vsel %vm3633, %v3622, %v3057
      %v3656 = vsel %vm3633, %v3623, %v3059
      %v3657 = vsel %vm3633, %v3624, %v3061
      %v3658 = vsel %vm3633, %v3625, %v3063
      %v3659 = vsel %vm3633, %v3626, %v3065
      %v3660 = vsel %vm3633, %v3627, %v3067
      %v3661 = vsel %vm3633, %v3628, %v3069
      %v3662 = vsel %vm3633, %v3629, %v3071
      %v3663 = vsel %vm3633, %v3630, %v3073
      %v3664 = vsel %vm3633, %v3631, %v3075
      %v3665 = vsel %vm3633, %v3632, %v3077
      %vm3666 = vcmask 654336
      %v3667 = vsel %vm3666, %v3634, %v3111
      %v3668 = vsel %vm3666, %v3635, %v3113
      %v3669 = vsel %vm3666, %v3636, %v3115
      %v3670 = vsel %vm3666, %v3637, %v3117
      %v3671 = vsel %vm3666, %v3638, %v3119
      %v3672 = vsel %vm3666, %v3639, %v3121
      %v3673 = vsel %vm3666, %v3640, %v3123
      %v3674 = vsel %vm3666, %v3641, %v3125
      %v3675 = vsel %vm3666, %v3642, %v3127
      %v3676 = vsel %vm3666, %v3643, %v3129
      %v3677 = vsel %vm3666, %v3644, %v3131
      %v3678 = vsel %vm3666, %v3645, %v3133
      %v3679 = vsel %vm3666, %v3646, %v3135
      %v3680 = vsel %vm3666, %v3647, %v3137
      %v3681 = vsel %vm3666, %v3648, %v3139
      %v3682 = vsel %vm3666, %v3649, %v3141
      %v3683 = vsel %vm3666, %v3650, %v3143
      %v3684 = vsel %vm3666, %v3651, %v3145
      %v3685 = vsel %vm3666, %v3652, %v3147
      %v3686 = vsel %vm3666, %v3653, %v3149
      %v3687 = vsel %vm3666, %v3654, %v3151
      %v3688 = vsel %vm3666, %v3655, %v3153
      %v3689 = vsel %vm3666, %v3656, %v3155
      %v3690 = vsel %vm3666, %v3657, %v3157
      %v3691 = vsel %vm3666, %v3658, %v3159
      %v3692 = vsel %vm3666, %v3659, %v3161
      %v3693 = vsel %vm3666, %v3660, %v3163
      %v3694 = vsel %vm3666, %v3661, %v3165
      %v3695 = vsel %vm3666, %v3662, %v3167
      %v3696 = vsel %vm3666, %v3663, %v3169
      %v3697 = vsel %vm3666, %v3664, %v3171
      %v3698 = vsel %vm3666, %v3665, %v3173
      %vm3699 = vcmask 818176
      %v3700 = vsel %vm3699, %v3667, %v3207
      %v3701 = vsel %vm3699, %v3668, %v3209
      %v3702 = vsel %vm3699, %v3669, %v3211
      %v3703 = vsel %vm3699, %v3670, %v3213
      %v3704 = vsel %vm3699, %v3671, %v3215
      %v3705 = vsel %vm3699, %v3672, %v3217
      %v3706 = vsel %vm3699, %v3673, %v3219
      %v3707 = vsel %vm3699, %v3674, %v3221
      %v3708 = vsel %vm3699, %v3675, %v3223
      %v3709 = vsel %vm3699, %v3676, %v3225
      %v3710 = vsel %vm3699, %v3677, %v3227
      %v3711 = vsel %vm3699, %v3678, %v3229
      %v3712 = vsel %vm3699, %v3679, %v3231
      %v3713 = vsel %vm3699, %v3680, %v3233
      %v3714 = vsel %vm3699, %v3681, %v3235
      %v3715 = vsel %vm3699, %v3682, %v3237
      %v3716 = vsel %vm3699, %v3683, %v3239
      %v3717 = vsel %vm3699, %v3684, %v3241
      %v3718 = vsel %vm3699, %v3685, %v3243
      %v3719 = vsel %vm3699, %v3686, %v3245
      %v3720 = vsel %vm3699, %v3687, %v3247
      %v3721 = vsel %vm3699, %v3688, %v3249
      %v3722 = vsel %vm3699, %v3689, %v3251
      %v3723 = vsel %vm3699, %v3690, %v3253
      %v3724 = vsel %vm3699, %v3691, %v3255
      %v3725 = vsel %vm3699, %v3692, %v3257
      %v3726 = vsel %vm3699, %v3693, %v3259
      %v3727 = vsel %vm3699, %v3694, %v3261
      %v3728 = vsel %vm3699, %v3695, %v3263
      %v3729 = vsel %vm3699, %v3696, %v3265
      %v3730 = vsel %vm3699, %v3697, %v3267
      %v3731 = vsel %vm3699, %v3698, %v3269
      %vm3732 = vcmask 982016
      %v3733 = vsel %vm3732, %v3700, %v3303
      %v3734 = vsel %vm3732, %v3701, %v3305
      %v3735 = vsel %vm3732, %v3702, %v3307
      %v3736 = vsel %vm3732, %v3703, %v3309
      %v3737 = vsel %vm3732, %v3704, %v3311
      %v3738 = vsel %vm3732, %v3705, %v3313
      %v3739 = vsel %vm3732, %v3706, %v3315
      %v3740 = vsel %vm3732, %v3707, %v3317
      %v3741 = vsel %vm3732, %v3708, %v3319
      %v3742 = vsel %vm3732, %v3709, %v3321
      %v3743 = vsel %vm3732, %v3710, %v3323
      %v3744 = vsel %vm3732, %v3711, %v3325
      %v3745 = vsel %vm3732, %v3712, %v3327
      %v3746 = vsel %vm3732, %v3713, %v3329
      %v3747 = vsel %vm3732, %v3714, %v3331
      %v3748 = vsel %vm3732, %v3715, %v3333
      %v3749 = vsel %vm3732, %v3716, %v3335
      %v3750 = vsel %vm3732, %v3717, %v3337
      %v3751 = vsel %vm3732, %v3718, %v3339
      %v3752 = vsel %vm3732, %v3719, %v3341
      %v3753 = vsel %vm3732, %v3720, %v3343
      %v3754 = vsel %vm3732, %v3721, %v3345
      %v3755 = vsel %vm3732, %v3722, %v3347
      %v3756 = vsel %vm3732, %v3723, %v3349
      %v3757 = vsel %vm3732, %v3724, %v3351
      %v3758 = vsel %vm3732, %v3725, %v3353
      %v3759 = vsel %vm3732, %v3726, %v3355
      %v3760 = vsel %vm3732, %v3727, %v3357
      %v3761 = vsel %vm3732, %v3728, %v3359
      %v3762 = vsel %vm3732, %v3729, %v3361
      %v3763 = vsel %vm3732, %v3730, %v3355
      %v3764 = vsel %vm3732, %v3731, %v3357
      %v3765 = vsel %vm1574, %v3303, %v3393
      %v3766 = vsel %vm1574, %v3305, %v3395
      %v3767 = vsel %vm1574, %v3307, %v3397
      %v3768 = vsel %vm1574, %v3309, %v3399
      %v3769 = vsel %vm1574, %v3311, %v3401
      %v3770 = vsel %vm1574, %v3313, %v3403
      %v3771 = vsel %vm1574, %v3315, %v3405
      %v3772 = vsel %vm1574, %v3317, %v3407
      %v3773 = vsel %vm1574, %v3319, %v3409
      %v3774 = vsel %vm1574, %v3321, %v3411
      %v3775 = vsel %vm1574, %v3323, %v3413
      %v3776 = vsel %vm1574, %v3325, %v3415
      %v3777 = vsel %vm1574, %v3327, %v3417
      %v3778 = vsel %vm1574, %v3329, %v3419
      %v3779 = vsel %vm1574, %v3331, %v3421
      %v3780 = vsel %vm1574, %v3333, %v3423
      %v3781 = vsel %vm1574, %v3335, %v3425
      %v3782 = vsel %vm1574, %v3337, %v3427
      %v3783 = vsel %vm1574, %v3339, %v3429
      %v3784 = vsel %vm1574, %v3341, %v3431
      %v3785 = vsel %vm1574, %v3343, %v3433
      %v3786 = vsel %vm1574, %v3345, %v3435
      %v3787 = vsel %vm1574, %v3347, %v3437
      %v3788 = vsel %vm1574, %v3349, %v3439
      %v3789 = vsel %vm1574, %v3351, %v3441
      %v3790 = vsel %vm1574, %v3353, %v3443
      %v3791 = vsel %vm1574, %v3355, %v3445
      %v3792 = vsel %vm1574, %v3357, %v3447
      %v3793 = vsel %vm1574, %v3359, %v3449
      %v3794 = vsel %vm1574, %v3361, %v3451
      %v3795 = vsel %vm1739, %v3765, %v3483
      %v3796 = vsel %vm1739, %v3766, %v3485
      %v3797 = vsel %vm1739, %v3767, %v3487
      %v3798 = vsel %vm1739, %v3768, %v3489
      %v3799 = vsel %vm1739, %v3769, %v3491
      %v3800 = vsel %vm1739, %v3770, %v3493
      %v3801 = vsel %vm1739, %v3771, %v3495
      %v3802 = vsel %vm1739, %v3772, %v3497
      %v3803 = vsel %vm1739, %v3773, %v3499
      %v3804 = vsel %vm1739, %v3774, %v3501
      %v3805 = vsel %vm1739, %v3775, %v3503
      %v3806 = vsel %vm1739, %v3776, %v3505
      %v3807 = vsel %vm1739, %v3777, %v3507
      %v3808 = vsel %vm1739, %v3778, %v3509
      %v3809 = vsel %vm1739, %v3779, %v3511
      %v3810 = vsel %vm1739, %v3780, %v3513
      %v3811 = vsel %vm1739, %v3781, %v3515
      %v3812 = vsel %vm1739, %v3782, %v3517
      %v3813 = vsel %vm1739, %v3783, %v3519
      %v3814 = vsel %vm1739, %v3784, %v3521
      %v3815 = vsel %vm1739, %v3785, %v3523
      %v3816 = vsel %vm1739, %v3786, %v3525
      %v3817 = vsel %vm1739, %v3787, %v3527
      %v3818 = vsel %vm1739, %v3788, %v3529
      %v3819 = vsel %vm1739, %v3789, %v3531
      %v3820 = vsel %vm1739, %v3790, %v3533
      %v3821 = vsel %vm1739, %v3791, %v3535
      %v3822 = vsel %vm1739, %v3792, %v3537
      %v3823 = vsel %vm1739, %v3793, %v3539
      %v3824 = vsel %vm1739, %v3794, %v3541
      %v3825 = vld [vmem:[%s3] sm:$0xff]
      %v3826 = vld [vmem:[%s3 + $0x8] sm:$0xff]
      %v3827 = vld [vmem:[%s3 + $0x10] sm:$0xff]
      %v3828 = vld [vmem:[%s3 + $0x18] sm:$0xff]
      %v3829 = vld [vmem:[%s3 + $0x20] sm:$0xff]
      %v3830 = vld [vmem:[%s3 + $0x28] sm:$0xff]
      %v3831 = vld [vmem:[%s3 + $0x30] sm:$0xff]
      %v3832 = vld [vmem:[%s3 + $0x38] sm:$0xff]
      %v3833 = vld [vmem:[%s3 + $0x40] sm:$0xff]
      %v3834 = vld [vmem:[%s3 + $0x48] sm:$0xff]
      %v3835 = vld [vmem:[%s3 + $0x50] sm:$0xff]
      %v3836 = vld [vmem:[%s3 + $0x58] sm:$0xff]
      %v3837 = vld [vmem:[%s3 + $0x60] sm:$0xff]
      %v3838 = vld [vmem:[%s3 + $0x68] sm:$0xff]
      %v3839 = vld [vmem:[%s3 + $0x70] sm:$0xff]
      %v3840 = vld [vmem:[%s3 + $0x78] sm:$0xff]
      %v3841 = vld [vmem:[%s3 + $0x80] sm:$0xff]
      %v3842 = vld [vmem:[%s3 + $0x88] sm:$0xff]
      %v3843 = vld [vmem:[%s3 + $0x90] sm:$0xff]
      %v3844 = vld [vmem:[%s3 + $0x98] sm:$0xff]
      %v3845 = vld [vmem:[%s3 + $0xa0] sm:$0xff]
      %v3846 = vld [vmem:[%s3 + $0xa8] sm:$0xff]
      %v3847 = vld [vmem:[%s3 + $0xb0] sm:$0xf]
      %v3848 = vld [vmem:[%s4] sm:$0x1]
      %v3850 = vlaneseq
      %v3851 = vshrl.u32 %v3850, 7
      %v3852 = vsub.s32 0, %v3851
      %v3853 = vrot.slane %v3848, %v3852
      %vm3855 = vcmask 424960
      %v3857 = vsel %vm3855, %v3795, 0
      %v3860 = vsel %vm3855, %v3796, 0
      %v3863 = vsel %vm3855, %v3797, 0
      %v3866 = vsel %vm3855, %v3798, 0
      %v3869 = vsel %vm3855, %v3799, 0
      %v3872 = vsel %vm3855, %v3800, 0
      %v3875 = vsel %vm3855, %v3801, 0
      %v3878 = vsel %vm3855, %v3802, 0
      %v3881 = vsel %vm3855, %v3803, 0
      %v3884 = vsel %vm3855, %v3804, 0
      %v3887 = vsel %vm3855, %v3805, 0
      %v3890 = vsel %vm3855, %v3806, 0
      %v3893 = vsel %vm3855, %v3807, 0
      %v3896 = vsel %vm3855, %v3808, 0
      %v3899 = vsel %vm3855, %v3809, 0
      %v3902 = vsel %vm3855, %v3810, 0
      %v3905 = vsel %vm3855, %v3811, 0
      %v3908 = vsel %vm3855, %v3812, 0
      %v3911 = vsel %vm3855, %v3813, 0
      %v3914 = vsel %vm3855, %v3814, 0
      %v3917 = vsel %vm3855, %v3815, 0
      %v3920 = vsel %vm3855, %v3816, 0
      %v3923 = vsel %vm3855, %v3817, 0
      %v3926 = vsel %vm3855, %v3818, 0
      %v3929 = vsel %vm3855, %v3819, 0
      %v3932 = vsel %vm3855, %v3820, 0
      %v3935 = vsel %vm3855, %v3821, 0
      %v3938 = vsel %vm3855, %v3822, 0
      %v3941 = vsel %vm3855, %v3823, 0
      %v3944 = vsel %vm3855, %v3824, 0
      %v3947 = vsel %vm289, %v3847, 0
      %3949 = vmatprep.subr.mxu0 0.0
      %3950 = vmatpush1.msra.mxu0 %v3840
      %3951 = vmatprep.subr.mxu0 0.0
      %3952 = vmatpush1.msra.mxu0 %v3839
      %3953 = vmatprep.subr.mxu0 0.0
      %3954 = vmatpush1.msra.mxu0 %v3838
      %3955 = vmatprep.subr.mxu0 0.0
      %3956 = vmatpush1.msra.mxu0 %v3837
      %3957 = vmatprep.subr.mxu0 0.0
      %3958 = vmatpush1.msra.mxu0 %v3836
      %3959 = vmatprep.subr.mxu0 0.0
      %3960 = vmatpush1.msra.mxu0 %v3835
      %3961 = vmatprep.subr.mxu0 0.0
      %3962 = vmatpush1.msra.mxu0 %v3834
      %3963 = vmatprep.subr.mxu0 0.0
      %3964 = vmatpush1.msra.mxu0 %v3833
      %3965 = vmatprep.subr.mxu0 0.0
      %3966 = vmatpush1.msra.mxu0 %v3832
      %3967 = vmatprep.subr.mxu0 0.0
      %3968 = vmatpush1.msra.mxu0 %v3831
      %3969 = vmatprep.subr.mxu0 0.0
      %3970 = vmatpush1.msra.mxu0 %v3830
      %3971 = vmatprep.subr.mxu0 0.0
      %3972 = vmatpush1.msra.mxu0 %v3829
      %3973 = vmatprep.subr.mxu0 0.0
      %3974 = vmatpush1.msra.mxu0 %v3828
      %3975 = vmatprep.subr.mxu0 0.0
      %3976 = vmatpush1.msra.mxu0 %v3827
      %3977 = vmatprep.subr.mxu0 0.0
      %3978 = vmatpush1.msra.mxu0 %v3826
      %3979 = vmatprep.subr.mxu0 0.0
      %3980 = vmatpush1.msra.mxu0 %v3825
      %3981 = vmatprep.subr.mxu0 0.0
      %3982 = vmatpush2.msra.mxu0 0.0
      %3983 = vmatprep.subr.mxu0 0.0
      %3984 = vmatpush2.msra.mxu0 0.0
      %3985 = vmatprep.subr.mxu0 0.0
      %3986 = vmatpush2.msra.mxu0 0.0
      %3987 = vmatprep.subr.mxu0 0.0
      %3988 = vmatpush2.msra.mxu0 0.0
      %3989 = vmatprep.subr.mxu0 0.0
      %3990 = vmatpush2.msra.mxu0 0.0
      %3991 = vmatprep.subr.mxu0 0.0
      %3992 = vmatpush2.msra.mxu0 0.0
      %3993 = vmatprep.subr.mxu0 0.0
      %3994 = vmatpush2.msra.mxu0 0.0
      %3995 = vmatprep.subr.mxu0 0.0
      %3996 = vmatpush2.msra.mxu0 0.0
      %3997 = vmatprep.subr.mxu0 0.0
      %3998 = vmatpush2.msra.mxu0 0.0
      %3999 = vmatprep.subr.mxu0 0.0
      %4000 = vmatpush2.msra.mxu0 %v3947
      %4001 = vmatprep.subr.mxu0 0.0
      %4002 = vmatpush2.msra.mxu0 %v3846
      %4003 = vmatprep.subr.mxu0 0.0
      %4004 = vmatpush2.msra.mxu0 %v3845
      %4005 = vmatprep.subr.mxu0 0.0
      %4006 = vmatpush2.msra.mxu0 %v3844
      %4007 = vmatprep.subr.mxu0 0.0
      %4008 = vmatpush2.msra.mxu0 %v3843
      %4009 = vmatprep.subr.mxu0 0.0
      %4010 = vmatpush2.msra.mxu0 %v3842
      %4011 = vmatprep.subr.mxu0 0.0
      %4012 = vmatpush2.msra.mxu0 %v3841
      %4013 = vmatprep.mubr.f32.mxu0 %v3857
      %4014 = vmatmul.mubr.f32.gmra.mxu0 %v3733
      %v4015 = vpop.f32.mrf.mxu0
      %v4016 = vadd.f32 %v3853, %v4015
      %v4017 = vpop.f32.mrf.mxu0
      %4018 = vmatprep.mubr.f32.mxu0 %v3860
      %4019 = vmatmul.mubr.f32.gmra.mxu0 %v3734
      %v4020 = vpop.f32.mrf.mxu0
      %v4021 = vadd.f32 %v3853, %v4020
      %v4022 = vpop.f32.mrf.mxu0
      %4023 = vmatprep.mubr.f32.mxu0 %v3863
      %4024 = vmatmul.mubr.f32.gmra.mxu0 %v3735
      %v4025 = vpop.f32.mrf.mxu0
      %v4026 = vadd.f32 %v3853, %v4025
      %v4027 = vpop.f32.mrf.mxu0
      %4028 = vmatprep.mubr.f32.mxu0 %v3866
      %4029 = vmatmul.mubr.f32.gmra.mxu0 %v3736
      %v4030 = vpop.f32.mrf.mxu0
      %v4031 = vadd.f32 %v3853, %v4030
      %v4032 = vpop.f32.mrf.mxu0
      %4033 = vmatprep.mubr.f32.mxu0 %v3869
      %4034 = vmatmul.mubr.f32.gmra.mxu0 %v3737
      %v4035 = vpop.f32.mrf.mxu0
      %v4036 = vadd.f32 %v3853, %v4035
      %v4037 = vpop.f32.mrf.mxu0
      %4038 = vmatprep.mubr.f32.mxu0 %v3872
      %4039 = vmatmul.mubr.f32.gmra.mxu0 %v3738
      %v4040 = vpop.f32.mrf.mxu0
      %v4041 = vadd.f32 %v3853, %v4040
      %v4042 = vpop.f32.mrf.mxu0
      %4043 = vmatprep.mubr.f32.mxu0 %v3875
      %4044 = vmatmul.mubr.f32.gmra.mxu0 %v3739
      %v4045 = vpop.f32.mrf.mxu0
      %v4046 = vadd.f32 %v3853, %v4045
      %v4047 = vpop.f32.mrf.mxu0
      %4048 = vmatprep.mubr.f32.mxu0 %v3878
      %4049 = vmatmul.mubr.f32.gmra.mxu0 %v3740
      %v4050 = vpop.f32.mrf.mxu0
      %v4051 = vadd.f32 %v3853, %v4050
      %v4052 = vpop.f32.mrf.mxu0
      %4053 = vmatprep.mubr.f32.mxu0 %v3881
      %4054 = vmatmul.mubr.f32.gmra.mxu0 %v3741
      %v4055 = vpop.f32.mrf.mxu0
      %v4056 = vadd.f32 %v3853, %v4055
      %v4057 = vpop.f32.mrf.mxu0
      %4058 = vmatprep.mubr.f32.mxu0 %v3884
      %4059 = vmatmul.mubr.f32.gmra.mxu0 %v3742
      %v4060 = vpop.f32.mrf.mxu0
      %v4061 = vadd.f32 %v3853, %v4060
      %v4062 = vpop.f32.mrf.mxu0
      %4063 = vmatprep.mubr.f32.mxu0 %v3887
      %4064 = vmatmul.mubr.f32.gmra.mxu0 %v3743
      %v4065 = vpop.f32.mrf.mxu0
      %v4066 = vadd.f32 %v3853, %v4065
      %v4067 = vpop.f32.mrf.mxu0
      %4068 = vmatprep.mubr.f32.mxu0 %v3890
      %4069 = vmatmul.mubr.f32.gmra.mxu0 %v3744
      %v4070 = vpop.f32.mrf.mxu0
      %v4071 = vadd.f32 %v3853, %v4070
      %v4072 = vpop.f32.mrf.mxu0
      %4073 = vmatprep.mubr.f32.mxu0 %v3893
      %4074 = vmatmul.mubr.f32.gmra.mxu0 %v3745
      %v4075 = vpop.f32.mrf.mxu0
      %v4076 = vadd.f32 %v3853, %v4075
      %v4077 = vpop.f32.mrf.mxu0
      %4078 = vmatprep.mubr.f32.mxu0 %v3896
      %4079 = vmatmul.mubr.f32.gmra.mxu0 %v3746
      %v4080 = vpop.f32.mrf.mxu0
      %v4081 = vadd.f32 %v3853, %v4080
      %v4082 = vpop.f32.mrf.mxu0
      %4083 = vmatprep.mubr.f32.mxu0 %v3899
      %4084 = vmatmul.mubr.f32.gmra.mxu0 %v3747
      %v4085 = vpop.f32.mrf.mxu0
      %v4086 = vadd.f32 %v3853, %v4085
      %v4087 = vpop.f32.mrf.mxu0
      %4088 = vmatprep.mubr.f32.mxu0 %v3902
      %4089 = vmatmul.mubr.f32.gmra.mxu0 %v3748
      %v4090 = vpop.f32.mrf.mxu0
      %v4091 = vadd.f32 %v3853, %v4090
      %v4092 = vpop.f32.mrf.mxu0
      %4093 = vmatprep.mubr.f32.mxu0 %v3905
      %4094 = vmatmul.mubr.f32.gmra.mxu0 %v3749
      %v4095 = vpop.f32.mrf.mxu0
      %v4096 = vadd.f32 %v3853, %v4095
      %v4097 = vpop.f32.mrf.mxu0
      %4098 = vmatprep.mubr.f32.mxu0 %v3908
      %4099 = vmatmul.mubr.f32.gmra.mxu0 %v3750
      %v4100 = vpop.f32.mrf.mxu0
      %v4101 = vadd.f32 %v3853, %v4100
      %v4102 = vpop.f32.mrf.mxu0
      %4103 = vmatprep.mubr.f32.mxu0 %v3911
      %4104 = vmatmul.mubr.f32.gmra.mxu0 %v3751
      %v4105 = vpop.f32.mrf.mxu0
      %v4106 = vadd.f32 %v3853, %v4105
      %v4107 = vpop.f32.mrf.mxu0
      %4108 = vmatprep.mubr.f32.mxu0 %v3914
      %4109 = vmatmul.mubr.f32.gmra.mxu0 %v3752
      %v4110 = vpop.f32.mrf.mxu0
      %v4111 = vadd.f32 %v3853, %v4110
      %v4112 = vpop.f32.mrf.mxu0
      %4113 = vmatprep.mubr.f32.mxu0 %v3917
      %4114 = vmatmul.mubr.f32.gmra.mxu0 %v3753
      %v4115 = vpop.f32.mrf.mxu0
      %v4116 = vadd.f32 %v3853, %v4115
      %v4117 = vpop.f32.mrf.mxu0
      %4118 = vmatprep.mubr.f32.mxu0 %v3920
      %4119 = vmatmul.mubr.f32.gmra.mxu0 %v3754
      %v4120 = vpop.f32.mrf.mxu0
      %v4121 = vadd.f32 %v3853, %v4120
      %v4122 = vpop.f32.mrf.mxu0
      %4123 = vmatprep.mubr.f32.mxu0 %v3923
      %4124 = vmatmul.mubr.f32.gmra.mxu0 %v3755
      %v4125 = vpop.f32.mrf.mxu0
      %v4126 = vadd.f32 %v3853, %v4125
      %v4127 = vpop.f32.mrf.mxu0
      %4128 = vmatprep.mubr.f32.mxu0 %v3926
      %4129 = vmatmul.mubr.f32.gmra.mxu0 %v3756
      %v4130 = vpop.f32.mrf.mxu0
      %v4131 = vadd.f32 %v3853, %v4130
      %v4132 = vpop.f32.mrf.mxu0
      %4133 = vmatprep.mubr.f32.mxu0 %v3929
      %4134 = vmatmul.mubr.f32.gmra.mxu0 %v3757
      %v4135 = vpop.f32.mrf.mxu0
      %v4136 = vadd.f32 %v3853, %v4135
      %v4137 = vpop.f32.mrf.mxu0
      %4138 = vmatprep.mubr.f32.mxu0 %v3932
      %4139 = vmatmul.mubr.f32.gmra.mxu0 %v3758
      %v4140 = vpop.f32.mrf.mxu0
      %v4141 = vadd.f32 %v3853, %v4140
      %v4142 = vpop.f32.mrf.mxu0
      %4143 = vmatprep.mubr.f32.mxu0 %v3935
      %4144 = vmatmul.mubr.f32.gmra.mxu0 %v3759
      %v4145 = vpop.f32.mrf.mxu0
      %v4146 = vadd.f32 %v3853, %v4145
      %v4147 = vpop.f32.mrf.mxu0
      %4148 = vmatprep.mubr.f32.mxu0 %v3938
      %4149 = vmatmul.mubr.f32.gmra.mxu0 %v3760
      %v4150 = vpop.f32.mrf.mxu0
      %v4151 = vadd.f32 %v3853, %v4150
      %v4152 = vpop.f32.mrf.mxu0
      %4153 = vmatprep.mubr.f32.mxu0 %v3941
      %4154 = vmatmul.mubr.f32.gmra.mxu0 %v3761
      %v4155 = vpop.f32.mrf.mxu0
      %v4156 = vadd.f32 %v3853, %v4155
      %v4157 = vpop.f32.mrf.mxu0
      %4158 = vmatprep.mubr.f32.mxu0 %v3944
      %4159 = vmatmul.mubr.f32.gmra.mxu0 %v3762
      %v4160 = vpop.f32.mrf.mxu0
      %v4161 = vadd.f32 %v3853, %v4160
      %v4162 = vpop.f32.mrf.mxu0
      %4163 = vmatprep.mubr.f32.mxu0 %v3935
      %4164 = vmatmul.mubr.f32.gmra.mxu0 %v3763
      %v4165 = vpop.f32.mrf.mxu0
      %v4166 = vadd.f32 %v3853, %v4165
      %v4167 = vpop.f32.mrf.mxu0
      %4168 = vmatprep.mubr.f32.mxu0 %v3938
      %4169 = vmatmul.mubr.f32.gmra.mxu0 %v3764
      %v4170 = vpop.f32.mrf.mxu0
      %v4171 = vadd.f32 %v3853, %v4170
      %v4172 = vpop.f32.mrf.mxu0
      %4173 = vdwg.mxu0
      %v4174 = vmax.f32 %v4016, 0.0
      %v4175 = vmax.f32 %v4021, 0.0
      %v4176 = vmax.f32 %v4026, 0.0
      %v4177 = vmax.f32 %v4031, 0.0
      %v4178 = vmax.f32 %v4036, 0.0
      %v4179 = vmax.f32 %v4041, 0.0
      %v4180 = vmax.f32 %v4046, 0.0
      %v4181 = vmax.f32 %v4051, 0.0
      %v4182 = vmax.f32 %v4056, 0.0
      %v4183 = vmax.f32 %v4061, 0.0
      %v4184 = vmax.f32 %v4066, 0.0
      %v4185 = vmax.f32 %v4071, 0.0
      %v4186 = vmax.f32 %v4076, 0.0
      %v4187 = vmax.f32 %v4081, 0.0
      %v4188 = vmax.f32 %v4086, 0.0
      %v4189 = vmax.f32 %v4091, 0.0
      %v4190 = vmax.f32 %v4096, 0.0
      %v4191 = vmax.f32 %v4101, 0.0
      %v4192 = vmax.f32 %v4106, 0.0
      %v4193 = vmax.f32 %v4111, 0.0
      %v4194 = vmax.f32 %v4116, 0.0
      %v4195 = vmax.f32 %v4121, 0.0
      %v4196 = vmax.f32 %v4126, 0.0
      %v4197 = vmax.f32 %v4131, 0.0
      %v4198 = vmax.f32 %v4136, 0.0
      %v4199 = vmax.f32 %v4141, 0.0
      %v4200 = vmax.f32 %v4146, 0.0
      %v4201 = vmax.f32 %v4151, 0.0
      %v4202 = vmax.f32 %v4156, 0.0
      %v4203 = vmax.f32 %v4161, 0.0
      %v4204 = vmax.f32 %v4166, 0.0
      %v4205 = vmax.f32 %v4171, 0.0
      %v4206 = vsel %vm1607, %v4174, 0.0
      %v4207 = vsel %vm1607, %v4175, 0.0
      %v4208 = vsel %vm1607, %v4176, 0.0
      %v4209 = vsel %vm1607, %v4177, 0.0
      %v4210 = vsel %vm1607, %v4178, 0.0
      %v4211 = vsel %vm1607, %v4179, 0.0
      %v4212 = vsel %vm1607, %v4180, 0.0
      %v4213 = vsel %vm1607, %v4181, 0.0
      %v4214 = vsel %vm1607, %v4182, 0.0
      %v4215 = vsel %vm1607, %v4183, 0.0
      %v4216 = vsel %vm1607, %v4184, 0.0
      %v4217 = vsel %vm1607, %v4185, 0.0
      %v4218 = vsel %vm1607, %v4186, 0.0
      %v4219 = vsel %vm1607, %v4187, 0.0
      %v4220 = vsel %vm1607, %v4188, 0.0
      %v4221 = vsel %vm1607, %v4189, 0.0
      %v4222 = vsel %vm1607, %v4190, 0.0
      %v4223 = vsel %vm1607, %v4191, 0.0
      %v4224 = vsel %vm1607, %v4192, 0.0
      %v4225 = vsel %vm1607, %v4193, 0.0
      %v4226 = vsel %vm1607, %v4194, 0.0
      %v4227 = vsel %vm1607, %v4195, 0.0
      %v4228 = vsel %vm1607, %v4196, 0.0
      %v4229 = vsel %vm1607, %v4197, 0.0
      %v4230 = vsel %vm1607, %v4198, 0.0
      %v4231 = vsel %vm1607, %v4199, 0.0
      %v4232 = vsel %vm1607, %v4200, 0.0
      %v4233 = vsel %vm1607, %v4201, 0.0
      %v4234 = vsel %vm1607, %v4202, 0.0
      %v4235 = vsel %vm1607, %v4203, 0.0
      %v4236 = vsel %vm1607, %v4204, 0.0
      %v4237 = vsel %vm1607, %v4205, 0.0
      %4238 = vxpose.xlu0.b32.start [1/16] %v4206, 128
      %4239 = vxpose.xlu0.b32.cont [2/16] %v4207, 128
      %4240 = vxpose.xlu0.b32.cont [3/16] %v4208, 128
      %4241 = vxpose.xlu0.b32.cont [4/16] %v4209, 128
      %4242 = vxpose.xlu0.b32.cont [5/16] %v4210, 128
      %4243 = vxpose.xlu0.b32.cont [6/16] %v4211, 128
      %4244 = vxpose.xlu0.b32.cont [7/16] %v4212, 128
      %4245 = vxpose.xlu0.b32.cont [8/16] %v4213, 128
      %4246 = vxpose.xlu0.b32.cont [9/16] %v4214, 128
      %4247 = vxpose.xlu0.b32.cont [10/16] %v4215, 128
      %4248 = vxpose.xlu0.b32.cont [11/16] %v4216, 128
      %4249 = vxpose.xlu0.b32.cont [12/16] %v4217, 128
      %4250 = vxpose.xlu0.b32.cont [13/16] %v4218, 128
      %4251 = vxpose.xlu0.b32.cont [14/16] %v4219, 128
      %4252 = vxpose.xlu0.b32.cont [15/16] %v4220, 128
      %4253 = vxpose.xlu0.b32.end [16/16] %v4221, 128
      %v4254 = vpop.trf.xlu0
      %v4255 = vpop.trf.xlu0
      %v4256 = vpop.trf.xlu0
      %v4257 = vpop.trf.xlu0
      %v4258 = vpop.trf.xlu0
      %v4259 = vpop.trf.xlu0
      %v4260 = vpop.trf.xlu0
      %v4261 = vpop.trf.xlu0
      %v4262 = vpop.trf.xlu0
      %v4263 = vpop.trf.xlu0
      %v4264 = vpop.trf.xlu0
      %v4265 = vpop.trf.xlu0
      %v4266 = vpop.trf.xlu0
      %v4267 = vpop.trf.xlu0
      %v4268 = vpop.trf.xlu0
      %v4269 = vpop.trf.xlu0
      %4270 = vxpose.xlu0.b32.start [1/16] %v4222, 128
      %4271 = vxpose.xlu0.b32.cont [2/16] %v4223, 128
      %4272 = vxpose.xlu0.b32.cont [3/16] %v4224, 128
      %4273 = vxpose.xlu0.b32.cont [4/16] %v4225, 128
      %4274 = vxpose.xlu0.b32.cont [5/16] %v4226, 128
      %4275 = vxpose.xlu0.b32.cont [6/16] %v4227, 128
      %4276 = vxpose.xlu0.b32.cont [7/16] %v4228, 128
      %4277 = vxpose.xlu0.b32.cont [8/16] %v4229, 128
      %4278 = vxpose.xlu0.b32.cont [9/16] %v4230, 128
      %4279 = vxpose.xlu0.b32.cont [10/16] %v4231, 128
      %4280 = vxpose.xlu0.b32.cont [11/16] %v4232, 128
      %4281 = vxpose.xlu0.b32.cont [12/16] %v4233, 128
      %4282 = vxpose.xlu0.b32.cont [13/16] %v4234, 128
      %4283 = vxpose.xlu0.b32.cont [14/16] %v4235, 128
      %4284 = vxpose.xlu0.b32.cont [15/16] %v4236, 128
      %4285 = vxpose.xlu0.b32.end [16/16] %v4237, 128
      %v4286 = vpop.trf.xlu0
      %v4287 = vpop.trf.xlu0
      %v4288 = vpop.trf.xlu0
      %v4289 = vpop.trf.xlu0
      %v4290 = vpop.trf.xlu0
      %v4291 = vpop.trf.xlu0
      %v4292 = vpop.trf.xlu0
      %v4293 = vpop.trf.xlu0
      %v4294 = vpop.trf.xlu0
      %v4295 = vpop.trf.xlu0
      %v4296 = vpop.trf.xlu0
      %v4297 = vpop.trf.xlu0
      %v4298 = vpop.trf.xlu0
      %v4299 = vpop.trf.xlu0
      %v4300 = vpop.trf.xlu0
      %v4301 = vpop.trf.xlu0
      %v4306 = vrot.slane %v4254, 4
      %v4307 = vrot.slane %v4286, 4
      %v4308 = vrot.slane %v4255, 4
      %v4309 = vsel %vm289, %v4306, %v4308
      %v4310 = vrot.slane %v4287, 4
      %v4311 = vsel %vm289, %v4307, %v4310
      %4318 = vst [vmem:[%s278 + $0x20] sm:$0xf0] %v4306
      %4319 = vst [vmem:[%s278 + $0x28] sm:$0xf0] %v4307
      %4320 = vst [vmem:[%s278 + $0x30] sm:$0xff] %v4309
      %4321 = vst [vmem:[%s278 + $0x38] sm:$0xff] %v4311
      %4322 = vst [vmem:[%s278 + $0x40] sm:$0xf] %v4308
      %4323 = vst [vmem:[%s278 + $0x48] sm:$0xf] %v4310
      %4356 = vrot.lane.b32.xlu0 %v4174, 20
      %v4357 = vpop.permute.xlu0 %4356
      %4358 = vrot.lane.b32.xlu0 %v4175, 20
      %v4359 = vpop.permute.xlu0 %4358
      %4360 = vrot.lane.b32.xlu0 %v4176, 20
      %v4361 = vpop.permute.xlu0 %4360
      %4362 = vrot.lane.b32.xlu0 %v4177, 20
      %v4363 = vpop.permute.xlu0 %4362
      %4364 = vrot.lane.b32.xlu0 %v4178, 20
      %v4365 = vpop.permute.xlu0 %4364
      %4366 = vrot.lane.b32.xlu0 %v4179, 20
      %v4367 = vpop.permute.xlu0 %4366
      %4368 = vrot.lane.b32.xlu0 %v4180, 20
      %v4369 = vpop.permute.xlu0 %4368
      %4370 = vrot.lane.b32.xlu0 %v4181, 20
      %v4371 = vpop.permute.xlu0 %4370
      %4372 = vrot.lane.b32.xlu0 %v4182, 20
      %v4373 = vpop.permute.xlu0 %4372
      %4374 = vrot.lane.b32.xlu0 %v4183, 20
      %v4375 = vpop.permute.xlu0 %4374
      %4376 = vrot.lane.b32.xlu0 %v4184, 20
      %v4377 = vpop.permute.xlu0 %4376
      %4378 = vrot.lane.b32.xlu0 %v4185, 20
      %v4379 = vpop.permute.xlu0 %4378
      %4380 = vrot.lane.b32.xlu0 %v4186, 20
      %v4381 = vpop.permute.xlu0 %4380
      %4382 = vrot.lane.b32.xlu0 %v4187, 20
      %v4383 = vpop.permute.xlu0 %4382
      %4384 = vrot.lane.b32.xlu0 %v4188, 20
      %v4385 = vpop.permute.xlu0 %4384
      %4386 = vrot.lane.b32.xlu0 %v4189, 20
      %v4387 = vpop.permute.xlu0 %4386
      %4388 = vrot.lane.b32.xlu0 %v4190, 20
      %v4389 = vpop.permute.xlu0 %4388
      %4390 = vrot.lane.b32.xlu0 %v4191, 20
      %v4391 = vpop.permute.xlu0 %4390
      %4392 = vrot.lane.b32.xlu0 %v4192, 20
      %v4393 = vpop.permute.xlu0 %4392
      %4394 = vrot.lane.b32.xlu0 %v4193, 20
      %v4395 = vpop.permute.xlu0 %4394
      %4396 = vrot.lane.b32.xlu0 %v4194, 20
      %v4397 = vpop.permute.xlu0 %4396
      %4398 = vrot.lane.b32.xlu0 %v4195, 20
      %v4399 = vpop.permute.xlu0 %4398
      %4400 = vrot.lane.b32.xlu0 %v4196, 20
      %v4401 = vpop.permute.xlu0 %4400
      %4402 = vrot.lane.b32.xlu0 %v4197, 20
      %v4403 = vpop.permute.xlu0 %4402
      %4404 = vrot.lane.b32.xlu0 %v4198, 20
      %v4405 = vpop.permute.xlu0 %4404
      %4406 = vrot.lane.b32.xlu0 %v4199, 20
      %v4407 = vpop.permute.xlu0 %4406
      %4408 = vrot.lane.b32.xlu0 %v4200, 20
      %v4409 = vpop.permute.xlu0 %4408
      %4410 = vrot.lane.b32.xlu0 %v4201, 20
      %v4411 = vpop.permute.xlu0 %4410
      %4412 = vrot.lane.b32.xlu0 %v4202, 20
      %v4413 = vpop.permute.xlu0 %4412
      %4414 = vrot.lane.b32.xlu0 %v4203, 20
      %v4415 = vpop.permute.xlu0 %4414
      %4416 = vrot.lane.b32.xlu0 %v4204, 20
      %v4417 = vpop.permute.xlu0 %4416
      %4418 = vrot.lane.b32.xlu0 %v4205, 20
      %v4419 = vpop.permute.xlu0 %4418
      %v4452 = vsel %vm1640, %v2387, %v4357
      %v4453 = vsel %vm1640, %v2388, %v4359
      %v4454 = vsel %vm1640, %v2389, %v4361
      %v4455 = vsel %vm1640, %v2390, %v4363
      %v4456 = vsel %vm1640, %v2391, %v4365
      %v4457 = vsel %vm1640, %v2392, %v4367
      %v4458 = vsel %vm1640, %v2393, %v4369
      %v4459 = vsel %vm1640, %v2394, %v4371
      %v4460 = vsel %vm1640, %v2395, %v4373
      %v4461 = vsel %vm1640, %v2396, %v4375
      %v4462 = vsel %vm1640, %v2397, %v4377
      %v4463 = vsel %vm1640, %v2398, %v4379
      %v4464 = vsel %vm1640, %v2399, %v4381
      %v4465 = vsel %vm1640, %v2400, %v4383
      %v4466 = vsel %vm1640, %v2401, %v4385
      %v4467 = vsel %vm1640, %v2402, %v4387
      %v4468 = vsel %vm1640, %v2403, %v4389
      %v4469 = vsel %vm1640, %v2404, %v4391
      %v4470 = vsel %vm1640, %v2405, %v4393
      %v4471 = vsel %vm1640, %v2406, %v4395
      %v4472 = vsel %vm1640, %v2407, %v4397
      %v4473 = vsel %vm1640, %v2408, %v4399
      %v4474 = vsel %vm1640, %v2409, %v4401
      %v4475 = vsel %vm1640, %v2410, %v4403
      %v4476 = vsel %vm1640, %v2411, %v4405
      %v4477 = vsel %vm1640, %v2412, %v4407
      %v4478 = vsel %vm1640, %v2413, %v4409
      %v4479 = vsel %vm1640, %v2414, %v4411
      %v4480 = vsel %vm1640, %v2415, %v4413
      %v4481 = vsel %vm1640, %v2416, %v4415
      %v4482 = vsel %vm1640, %v2417, %v4417
      %v4483 = vsel %vm1640, %v2418, %v4419
      %v4500 = vrot.slane %v4454, 1
      %v4501 = vrot.slane %v4452, 1
      %v4502 = vrot.slane %v4456, 1
      %v4503 = vrot.slane %v4458, 1
      %v4504 = vrot.slane %v4460, 1
      %v4505 = vrot.slane %v4462, 1
      %v4506 = vrot.slane %v4464, 1
      %v4507 = vrot.slane %v4466, 1
      %v4508 = vrot.slane %v4468, 1
      %v4509 = vrot.slane %v4470, 1
      %v4510 = vrot.slane %v4472, 1
      %v4511 = vrot.slane %v4474, 1
      %v4512 = vrot.slane %v4476, 1
      %v4513 = vrot.slane %v4478, 1
      %v4514 = vrot.slane %v4480, 1
      %v4515 = vrot.slane %v4482, 1
      %v4548 = vrot.slane %v4454, 7
      %v4549 = vrot.slane %v4455, 7
      %v4550 = vsel %vm420, %v4548, %v4549
      %v4551 = vrot.slane %v4452, 7
      %v4552 = vrot.slane %v4453, 7
      %v4553 = vsel %vm420, %v4551, %v4552
      %v4554 = vrot.slane %v4456, 7
      %v4555 = vrot.slane %v4457, 7
      %v4556 = vsel %vm420, %v4554, %v4555
      %v4557 = vrot.slane %v4458, 7
      %v4558 = vrot.slane %v4459, 7
      %v4559 = vsel %vm420, %v4557, %v4558
      %v4560 = vrot.slane %v4460, 7
      %v4561 = vrot.slane %v4461, 7
      %v4562 = vsel %vm420, %v4560, %v4561
      %v4563 = vrot.slane %v4462, 7
      %v4564 = vrot.slane %v4463, 7
      %v4565 = vsel %vm420, %v4563, %v4564
      %v4566 = vrot.slane %v4464, 7
      %v4567 = vrot.slane %v4465, 7
      %v4568 = vsel %vm420, %v4566, %v4567
      %v4569 = vrot.slane %v4466, 7
      %v4570 = vrot.slane %v4467, 7
      %v4571 = vsel %vm420, %v4569, %v4570
      %v4572 = vrot.slane %v4468, 7
      %v4573 = vrot.slane %v4469, 7
      %v4574 = vsel %vm420, %v4572, %v4573
      %v4575 = vrot.slane %v4470, 7
      %v4576 = vrot.slane %v4471, 7
      %v4577 = vsel %vm420, %v4575, %v4576
      %v4578 = vrot.slane %v4472, 7
      %v4579 = vrot.slane %v4473, 7
      %v4580 = vsel %vm420, %v4578, %v4579
      %v4581 = vrot.slane %v4474, 7
      %v4582 = vrot.slane %v4475, 7
      %v4583 = vsel %vm420, %v4581, %v4582
      %v4584 = vrot.slane %v4476, 7
      %v4585 = vrot.slane %v4477, 7
      %v4586 = vsel %vm420, %v4584, %v4585
      %v4587 = vrot.slane %v4478, 7
      %v4588 = vrot.slane %v4479, 7
      %v4589 = vsel %vm420, %v4587, %v4588
      %v4590 = vrot.slane %v4480, 7
      %v4591 = vrot.slane %v4481, 7
      %v4592 = vsel %vm420, %v4590, %v4591
      %v4593 = vrot.slane %v4482, 7
      %v4594 = vrot.slane %v4483, 7
      %v4595 = vsel %vm420, %v4593, %v4594
      %v4643 = vrot.slane %v4455, 5
      %v4644 = vrot.slane %v4453, 5
      %v4645 = vrot.slane %v4457, 5
      %v4646 = vrot.slane %v4459, 5
      %v4647 = vrot.slane %v4461, 5
      %v4648 = vrot.slane %v4463, 5
      %v4649 = vrot.slane %v4465, 5
      %v4650 = vrot.slane %v4467, 5
      %v4651 = vrot.slane %v4469, 5
      %v4652 = vrot.slane %v4471, 5
      %v4653 = vrot.slane %v4473, 5
      %v4654 = vrot.slane %v4475, 5
      %v4655 = vrot.slane %v4477, 5
      %v4656 = vrot.slane %v4479, 5
      %v4657 = vrot.slane %v4481, 5
      %v4658 = vrot.slane %v4483, 5
      %v4675 = vsel %vm420, %v4500, %v4548
      %v4676 = vsel %vm420, %v4501, %v4551
      %v4677 = vsel %vm420, %v4502, %v4554
      %v4678 = vsel %vm420, %v4503, %v4557
      %v4679 = vsel %vm420, %v4504, %v4560
      %v4680 = vsel %vm420, %v4505, %v4563
      %v4681 = vsel %vm420, %v4506, %v4566
      %v4682 = vsel %vm420, %v4507, %v4569
      %v4683 = vsel %vm420, %v4508, %v4572
      %v4684 = vsel %vm420, %v4509, %v4575
      %v4685 = vsel %vm420, %v4510, %v4578
      %v4686 = vsel %vm420, %v4511, %v4581
      %v4687 = vsel %vm420, %v4512, %v4584
      %v4688 = vsel %vm420, %v4513, %v4587
      %v4689 = vsel %vm420, %v4514, %v4590
      %v4690 = vsel %vm420, %v4515, %v4593
      %v4691 = vsel %vm420, %v4549, %v4643
      %v4692 = vsel %vm420, %v4552, %v4644
      %v4693 = vsel %vm420, %v4555, %v4645
      %v4694 = vsel %vm420, %v4558, %v4646
      %v4695 = vsel %vm420, %v4561, %v4647
      %v4696 = vsel %vm420, %v4564, %v4648
      %v4697 = vsel %vm420, %v4567, %v4649
      %v4698 = vsel %vm420, %v4570, %v4650
      %v4699 = vsel %vm420, %v4573, %v4651
      %v4700 = vsel %vm420, %v4576, %v4652
      %v4701 = vsel %vm420, %v4579, %v4653
      %v4702 = vsel %vm420, %v4582, %v4654
      %v4703 = vsel %vm420, %v4585, %v4655
      %v4704 = vsel %vm420, %v4588, %v4656
      %v4705 = vsel %vm420, %v4591, %v4657
      %v4706 = vsel %vm420, %v4594, %v4658
      %v4737 = vrot.slane %v4675, 1
      %v4738 = vrot.slane %v4550, 1
      %v4739 = vsel %vm610, %v4737, %v4738
      %v4740 = vrot.slane %v4691, 1
      %v4741 = vsel %vm610, %v4738, %v4740
      %v4742 = vrot.slane %v4676, 1
      %v4743 = vrot.slane %v4553, 1
      %v4744 = vsel %vm610, %v4742, %v4743
      %v4745 = vrot.slane %v4692, 1
      %v4746 = vsel %vm610, %v4743, %v4745
      %v4747 = vrot.slane %v4677, 1
      %v4748 = vrot.slane %v4556, 1
      %v4749 = vsel %vm610, %v4747, %v4748
      %v4750 = vrot.slane %v4693, 1
      %v4751 = vsel %vm610, %v4748, %v4750
      %v4752 = vrot.slane %v4678, 1
      %v4753 = vrot.slane %v4559, 1
      %v4754 = vsel %vm610, %v4752, %v4753
      %v4755 = vrot.slane %v4694, 1
      %v4756 = vsel %vm610, %v4753, %v4755
      %v4757 = vrot.slane %v4679, 1
      %v4758 = vrot.slane %v4562, 1
      %v4759 = vsel %vm610, %v4757, %v4758
      %v4760 = vrot.slane %v4695, 1
      %v4761 = vsel %vm610, %v4758, %v4760
      %v4762 = vrot.slane %v4680, 1
      %v4763 = vrot.slane %v4565, 1
      %v4764 = vsel %vm610, %v4762, %v4763
      %v4765 = vrot.slane %v4696, 1
      %v4766 = vsel %vm610, %v4763, %v4765
      %v4767 = vrot.slane %v4681, 1
      %v4768 = vrot.slane %v4568, 1
      %v4769 = vsel %vm610, %v4767, %v4768
      %v4770 = vrot.slane %v4697, 1
      %v4771 = vsel %vm610, %v4768, %v4770
      %v4772 = vrot.slane %v4682, 1
      %v4773 = vrot.slane %v4571, 1
      %v4774 = vsel %vm610, %v4772, %v4773
      %v4775 = vrot.slane %v4698, 1
      %v4776 = vsel %vm610, %v4773, %v4775
      %v4777 = vrot.slane %v4683, 1
      %v4778 = vrot.slane %v4574, 1
      %v4779 = vsel %vm610, %v4777, %v4778
      %v4780 = vrot.slane %v4699, 1
      %v4781 = vsel %vm610, %v4778, %v4780
      %v4782 = vrot.slane %v4684, 1
      %v4783 = vrot.slane %v4577, 1
      %v4784 = vsel %vm610, %v4782, %v4783
      %v4785 = vrot.slane %v4700, 1
      %v4786 = vsel %vm610, %v4783, %v4785
      %v4787 = vrot.slane %v4685, 1
      %v4788 = vrot.slane %v4580, 1
      %v4789 = vsel %vm610, %v4787, %v4788
      %v4790 = vrot.slane %v4701, 1
      %v4791 = vsel %vm610, %v4788, %v4790
      %v4792 = vrot.slane %v4686, 1
      %v4793 = vrot.slane %v4583, 1
      %v4794 = vsel %vm610, %v4792, %v4793
      %v4795 = vrot.slane %v4702, 1
      %v4796 = vsel %vm610, %v4793, %v4795
      %v4797 = vrot.slane %v4687, 1
      %v4798 = vrot.slane %v4586, 1
      %v4799 = vsel %vm610, %v4797, %v4798
      %v4800 = vrot.slane %v4703, 1
      %v4801 = vsel %vm610, %v4798, %v4800
      %v4802 = vrot.slane %v4688, 1
      %v4803 = vrot.slane %v4589, 1
      %v4804 = vsel %vm610, %v4802, %v4803
      %v4805 = vrot.slane %v4704, 1
      %v4806 = vsel %vm610, %v4803, %v4805
      %v4807 = vrot.slane %v4689, 1
      %v4808 = vrot.slane %v4592, 1
      %v4809 = vsel %vm610, %v4807, %v4808
      %v4810 = vrot.slane %v4705, 1
      %v4811 = vsel %vm610, %v4808, %v4810
      %v4812 = vrot.slane %v4675, 2
      %v4813 = vrot.slane %v4550, 2
      %v4814 = vsel %vm686, %v4812, %v4813
      %v4815 = vrot.slane %v4691, 2
      %v4816 = vsel %vm686, %v4813, %v4815
      %v4817 = vrot.slane %v4676, 2
      %v4818 = vrot.slane %v4553, 2
      %v4819 = vsel %vm686, %v4817, %v4818
      %v4820 = vrot.slane %v4692, 2
      %v4821 = vsel %vm686, %v4818, %v4820
      %v4822 = vrot.slane %v4677, 2
      %v4823 = vrot.slane %v4556, 2
      %v4824 = vsel %vm686, %v4822, %v4823
      %v4825 = vrot.slane %v4693, 2
      %v4826 = vsel %vm686, %v4823, %v4825
      %v4827 = vrot.slane %v4678, 2
      %v4828 = vrot.slane %v4559, 2
      %v4829 = vsel %vm686, %v4827, %v4828
      %v4830 = vrot.slane %v4694, 2
      %v4831 = vsel %vm686, %v4828, %v4830
      %v4832 = vrot.slane %v4679, 2
      %v4833 = vrot.slane %v4562, 2
      %v4834 = vsel %vm686, %v4832, %v4833
      %v4835 = vrot.slane %v4695, 2
      %v4836 = vsel %vm686, %v4833, %v4835
      %v4837 = vrot.slane %v4680, 2
      %v4838 = vrot.slane %v4565, 2
      %v4839 = vsel %vm686, %v4837, %v4838
      %v4840 = vrot.slane %v4696, 2
      %v4841 = vsel %vm686, %v4838, %v4840
      %v4842 = vrot.slane %v4681, 2
      %v4843 = vrot.slane %v4568, 2
      %v4844 = vsel %vm686, %v4842, %v4843
      %v4845 = vrot.slane %v4697, 2
      %v4846 = vsel %vm686, %v4843, %v4845
      %v4847 = vrot.slane %v4682, 2
      %v4848 = vrot.slane %v4571, 2
      %v4849 = vsel %vm686, %v4847, %v4848
      %v4850 = vrot.slane %v4698, 2
      %v4851 = vsel %vm686, %v4848, %v4850
      %v4852 = vrot.slane %v4683, 2
      %v4853 = vrot.slane %v4574, 2
      %v4854 = vsel %vm686, %v4852, %v4853
      %v4855 = vrot.slane %v4699, 2
      %v4856 = vsel %vm686, %v4853, %v4855
      %v4857 = vrot.slane %v4684, 2
      %v4858 = vrot.slane %v4577, 2
      %v4859 = vsel %vm686, %v4857, %v4858
      %v4860 = vrot.slane %v4700, 2
      %v4861 = vsel %vm686, %v4858, %v4860
      %v4862 = vrot.slane %v4685, 2
      %v4863 = vrot.slane %v4580, 2
      %v4864 = vsel %vm686, %v4862, %v4863
      %v4865 = vrot.slane %v4701, 2
      %v4866 = vsel %vm686, %v4863, %v4865
      %v4867 = vrot.slane %v4686, 2
      %v4868 = vrot.slane %v4583, 2
      %v4869 = vsel %vm686, %v4867, %v4868
      %v4870 = vrot.slane %v4702, 2
      %v4871 = vsel %vm686, %v4868, %v4870
      %v4872 = vrot.slane %v4687, 2
      %v4873 = vrot.slane %v4586, 2
      %v4874 = vsel %vm686, %v4872, %v4873
      %v4875 = vrot.slane %v4703, 2
      %v4876 = vsel %vm686, %v4873, %v4875
      %v4877 = vrot.slane %v4688, 2
      %v4878 = vrot.slane %v4589, 2
      %v4879 = vsel %vm686, %v4877, %v4878
      %v4880 = vrot.slane %v4704, 2
      %v4881 = vsel %vm686, %v4878, %v4880
      %v4882 = vrot.slane %v4689, 2
      %v4883 = vrot.slane %v4592, 2
      %v4884 = vsel %vm686, %v4882, %v4883
      %v4885 = vrot.slane %v4705, 2
      %v4886 = vsel %vm686, %v4883, %v4885
      %v4889 = vrot.slane %v4690, 1
      %v4890 = vrot.slane %v4595, 1
      %v4891 = vsel %vm610, %v4889, %v4890
      %v4892 = vrot.slane %v4706, 1
      %v4893 = vsel %vm610, %v4890, %v4892
      %v4894 = vrot.slane %v4690, 2
      %v4895 = vrot.slane %v4595, 2
      %v4896 = vsel %vm686, %v4894, %v4895
      %v4897 = vrot.slane %v4706, 2
      %v4898 = vsel %vm686, %v4895, %v4897
      %4899 = vrot.lane.b32.xlu0 %v4739, 36
      %v4900 = vpop.permute.xlu0 %4899
      %4901 = vrot.lane.b32.xlu0 %v4741, 36
      %v4902 = vpop.permute.xlu0 %4901
      %4903 = vrot.lane.b32.xlu0 %v4744, 36
      %v4904 = vpop.permute.xlu0 %4903
      %4905 = vrot.lane.b32.xlu0 %v4746, 36
      %v4906 = vpop.permute.xlu0 %4905
      %4907 = vrot.lane.b32.xlu0 %v4749, 36
      %v4908 = vpop.permute.xlu0 %4907
      %4909 = vrot.lane.b32.xlu0 %v4751, 36
      %v4910 = vpop.permute.xlu0 %4909
      %4911 = vrot.lane.b32.xlu0 %v4754, 36
      %v4912 = vpop.permute.xlu0 %4911
      %4913 = vrot.lane.b32.xlu0 %v4756, 36
      %v4914 = vpop.permute.xlu0 %4913
      %4915 = vrot.lane.b32.xlu0 %v4759, 36
      %v4916 = vpop.permute.xlu0 %4915
      %4917 = vrot.lane.b32.xlu0 %v4761, 36
      %v4918 = vpop.permute.xlu0 %4917
      %4919 = vrot.lane.b32.xlu0 %v4764, 36
      %v4920 = vpop.permute.xlu0 %4919
      %4921 = vrot.lane.b32.xlu0 %v4766, 36
      %v4922 = vpop.permute.xlu0 %4921
      %4923 = vrot.lane.b32.xlu0 %v4769, 36
      %v4924 = vpop.permute.xlu0 %4923
      %4925 = vrot.lane.b32.xlu0 %v4771, 36
      %v4926 = vpop.permute.xlu0 %4925
      %4927 = vrot.lane.b32.xlu0 %v4774, 36
      %v4928 = vpop.permute.xlu0 %4927
      %4929 = vrot.lane.b32.xlu0 %v4776, 36
      %v4930 = vpop.permute.xlu0 %4929
      %4931 = vrot.lane.b32.xlu0 %v4779, 36
      %v4932 = vpop.permute.xlu0 %4931
      %4933 = vrot.lane.b32.xlu0 %v4781, 36
      %v4934 = vpop.permute.xlu0 %4933
      %4935 = vrot.lane.b32.xlu0 %v4784, 36
      %v4936 = vpop.permute.xlu0 %4935
      %4937 = vrot.lane.b32.xlu0 %v4786, 36
      %v4938 = vpop.permute.xlu0 %4937
      %4939 = vrot.lane.b32.xlu0 %v4789, 36
      %v4940 = vpop.permute.xlu0 %4939
      %4941 = vrot.lane.b32.xlu0 %v4791, 36
      %v4942 = vpop.permute.xlu0 %4941
      %4943 = vrot.lane.b32.xlu0 %v4794, 36
      %v4944 = vpop.permute.xlu0 %4943
      %4945 = vrot.lane.b32.xlu0 %v4796, 36
      %v4946 = vpop.permute.xlu0 %4945
      %4947 = vrot.lane.b32.xlu0 %v4799, 36
      %v4948 = vpop.permute.xlu0 %4947
      %4949 = vrot.lane.b32.xlu0 %v4801, 36
      %v4950 = vpop.permute.xlu0 %4949
      %4951 = vrot.lane.b32.xlu0 %v4804, 36
      %v4952 = vpop.permute.xlu0 %4951
      %4953 = vrot.lane.b32.xlu0 %v4806, 36
      %v4954 = vpop.permute.xlu0 %4953
      %4955 = vrot.lane.b32.xlu0 %v4809, 36
      %v4956 = vpop.permute.xlu0 %4955
      %4957 = vrot.lane.b32.xlu0 %v4811, 36
      %v4958 = vpop.permute.xlu0 %4957
      %4989 = vrot.lane.b32.xlu0 %v4814, 72
      %v4990 = vpop.permute.xlu0 %4989
      %4991 = vrot.lane.b32.xlu0 %v4816, 72
      %v4992 = vpop.permute.xlu0 %4991
      %4993 = vrot.lane.b32.xlu0 %v4819, 72
      %v4994 = vpop.permute.xlu0 %4993
      %4995 = vrot.lane.b32.xlu0 %v4821, 72
      %v4996 = vpop.permute.xlu0 %4995
      %4997 = vrot.lane.b32.xlu0 %v4824, 72
      %v4998 = vpop.permute.xlu0 %4997
      %4999 = vrot.lane.b32.xlu0 %v4826, 72
      %v5000 = vpop.permute.xlu0 %4999
      %5001 = vrot.lane.b32.xlu0 %v4829, 72
      %v5002 = vpop.permute.xlu0 %5001
      %5003 = vrot.lane.b32.xlu0 %v4831, 72
      %v5004 = vpop.permute.xlu0 %5003
      %5005 = vrot.lane.b32.xlu0 %v4834, 72
      %v5006 = vpop.permute.xlu0 %5005
      %5007 = vrot.lane.b32.xlu0 %v4836, 72
      %v5008 = vpop.permute.xlu0 %5007
      %5009 = vrot.lane.b32.xlu0 %v4839, 72
      %v5010 = vpop.permute.xlu0 %5009
      %5011 = vrot.lane.b32.xlu0 %v4841, 72
      %v5012 = vpop.permute.xlu0 %5011
      %5013 = vrot.lane.b32.xlu0 %v4844, 72
      %v5014 = vpop.permute.xlu0 %5013
      %5015 = vrot.lane.b32.xlu0 %v4846, 72
      %v5016 = vpop.permute.xlu0 %5015
      %5017 = vrot.lane.b32.xlu0 %v4849, 72
      %v5018 = vpop.permute.xlu0 %5017
      %5019 = vrot.lane.b32.xlu0 %v4851, 72
      %v5020 = vpop.permute.xlu0 %5019
      %5021 = vrot.lane.b32.xlu0 %v4854, 72
      %v5022 = vpop.permute.xlu0 %5021
      %5023 = vrot.lane.b32.xlu0 %v4856, 72
      %v5024 = vpop.permute.xlu0 %5023
      %5025 = vrot.lane.b32.xlu0 %v4859, 72
      %v5026 = vpop.permute.xlu0 %5025
      %5027 = vrot.lane.b32.xlu0 %v4861, 72
      %v5028 = vpop.permute.xlu0 %5027
      %5029 = vrot.lane.b32.xlu0 %v4864, 72
      %v5030 = vpop.permute.xlu0 %5029
      %5031 = vrot.lane.b32.xlu0 %v4866, 72
      %v5032 = vpop.permute.xlu0 %5031
      %5033 = vrot.lane.b32.xlu0 %v4869, 72
      %v5034 = vpop.permute.xlu0 %5033
      %5035 = vrot.lane.b32.xlu0 %v4871, 72
      %v5036 = vpop.permute.xlu0 %5035
      %5037 = vrot.lane.b32.xlu0 %v4874, 72
      %v5038 = vpop.permute.xlu0 %5037
      %5039 = vrot.lane.b32.xlu0 %v4876, 72
      %v5040 = vpop.permute.xlu0 %5039
      %5041 = vrot.lane.b32.xlu0 %v4879, 72
      %v5042 = vpop.permute.xlu0 %5041
      %5043 = vrot.lane.b32.xlu0 %v4881, 72
      %v5044 = vpop.permute.xlu0 %5043
      %5045 = vrot.lane.b32.xlu0 %v4884, 72
      %v5046 = vpop.permute.xlu0 %5045
      %5047 = vrot.lane.b32.xlu0 %v4886, 72
      %v5048 = vpop.permute.xlu0 %5047
      %5079 = vrot.lane.b32.xlu0 %v4676, 108
      %v5080 = vpop.permute.xlu0 %5079
      %5081 = vrot.lane.b32.xlu0 %v4553, 108
      %v5082 = vpop.permute.xlu0 %5081
      %5083 = vrot.lane.b32.xlu0 %v4675, 108
      %v5084 = vpop.permute.xlu0 %5083
      %5085 = vrot.lane.b32.xlu0 %v4550, 108
      %v5086 = vpop.permute.xlu0 %5085
      %5087 = vrot.lane.b32.xlu0 %v4677, 108
      %v5088 = vpop.permute.xlu0 %5087
      %5089 = vrot.lane.b32.xlu0 %v4556, 108
      %v5090 = vpop.permute.xlu0 %5089
      %5091 = vrot.lane.b32.xlu0 %v4678, 108
      %v5092 = vpop.permute.xlu0 %5091
      %5093 = vrot.lane.b32.xlu0 %v4559, 108
      %v5094 = vpop.permute.xlu0 %5093
      %5095 = vrot.lane.b32.xlu0 %v4679, 108
      %v5096 = vpop.permute.xlu0 %5095
      %5097 = vrot.lane.b32.xlu0 %v4562, 108
      %v5098 = vpop.permute.xlu0 %5097
      %5099 = vrot.lane.b32.xlu0 %v4680, 108
      %v5100 = vpop.permute.xlu0 %5099
      %5101 = vrot.lane.b32.xlu0 %v4565, 108
      %v5102 = vpop.permute.xlu0 %5101
      %5103 = vrot.lane.b32.xlu0 %v4681, 108
      %v5104 = vpop.permute.xlu0 %5103
      %5105 = vrot.lane.b32.xlu0 %v4568, 108
      %v5106 = vpop.permute.xlu0 %5105
      %5107 = vrot.lane.b32.xlu0 %v4682, 108
      %v5108 = vpop.permute.xlu0 %5107
      %5109 = vrot.lane.b32.xlu0 %v4571, 108
      %v5110 = vpop.permute.xlu0 %5109
      %5111 = vrot.lane.b32.xlu0 %v4683, 108
      %v5112 = vpop.permute.xlu0 %5111
      %5113 = vrot.lane.b32.xlu0 %v4574, 108
      %v5114 = vpop.permute.xlu0 %5113
      %5115 = vrot.lane.b32.xlu0 %v4684, 108
      %v5116 = vpop.permute.xlu0 %5115
      %5117 = vrot.lane.b32.xlu0 %v4577, 108
      %v5118 = vpop.permute.xlu0 %5117
      %5119 = vrot.lane.b32.xlu0 %v4685, 108
      %v5120 = vpop.permute.xlu0 %5119
      %5121 = vrot.lane.b32.xlu0 %v4580, 108
      %v5122 = vpop.permute.xlu0 %5121
      %5123 = vrot.lane.b32.xlu0 %v4686, 108
      %v5124 = vpop.permute.xlu0 %5123
      %5125 = vrot.lane.b32.xlu0 %v4583, 108
      %v5126 = vpop.permute.xlu0 %5125
      %5127 = vrot.lane.b32.xlu0 %v4687, 108
      %v5128 = vpop.permute.xlu0 %5127
      %5129 = vrot.lane.b32.xlu0 %v4586, 108
      %v5130 = vpop.permute.xlu0 %5129
      %5131 = vrot.lane.b32.xlu0 %v4688, 108
      %v5132 = vpop.permute.xlu0 %5131
      %5133 = vrot.lane.b32.xlu0 %v4589, 108
      %v5134 = vpop.permute.xlu0 %5133
      %5135 = vrot.lane.b32.xlu0 %v4689, 108
      %v5136 = vpop.permute.xlu0 %5135
      %5137 = vrot.lane.b32.xlu0 %v4592, 108
      %v5138 = vpop.permute.xlu0 %5137
      %5139 = vrot.lane.b32.xlu0 %v4690, 108
      %v5140 = vpop.permute.xlu0 %5139
      %5141 = vrot.lane.b32.xlu0 %v4595, 108
      %v5142 = vpop.permute.xlu0 %5141
      %5175 = vrot.lane.b32.xlu0 %v4744, 16
      %v5176 = vpop.permute.xlu0 %5175
      %5177 = vrot.lane.b32.xlu0 %v4746, 16
      %v5178 = vpop.permute.xlu0 %5177
      %5179 = vrot.lane.b32.xlu0 %v4739, 16
      %v5180 = vpop.permute.xlu0 %5179
      %5181 = vrot.lane.b32.xlu0 %v4741, 16
      %v5182 = vpop.permute.xlu0 %5181
      %5183 = vrot.lane.b32.xlu0 %v4749, 16
      %v5184 = vpop.permute.xlu0 %5183
      %5185 = vrot.lane.b32.xlu0 %v4751, 16
      %v5186 = vpop.permute.xlu0 %5185
      %5187 = vrot.lane.b32.xlu0 %v4754, 16
      %v5188 = vpop.permute.xlu0 %5187
      %5189 = vrot.lane.b32.xlu0 %v4756, 16
      %v5190 = vpop.permute.xlu0 %5189
      %5191 = vrot.lane.b32.xlu0 %v4759, 16
      %v5192 = vpop.permute.xlu0 %5191
      %5193 = vrot.lane.b32.xlu0 %v4761, 16
      %v5194 = vpop.permute.xlu0 %5193
      %5195 = vrot.lane.b32.xlu0 %v4764, 16
      %v5196 = vpop.permute.xlu0 %5195
      %5197 = vrot.lane.b32.xlu0 %v4766, 16
      %v5198 = vpop.permute.xlu0 %5197
      %5199 = vrot.lane.b32.xlu0 %v4769, 16
      %v5200 = vpop.permute.xlu0 %5199
      %5201 = vrot.lane.b32.xlu0 %v4771, 16
      %v5202 = vpop.permute.xlu0 %5201
      %5203 = vrot.lane.b32.xlu0 %v4774, 16
      %v5204 = vpop.permute.xlu0 %5203
      %5205 = vrot.lane.b32.xlu0 %v4776, 16
      %v5206 = vpop.permute.xlu0 %5205
      %5207 = vrot.lane.b32.xlu0 %v4779, 16
      %v5208 = vpop.permute.xlu0 %5207
      %5209 = vrot.lane.b32.xlu0 %v4781, 16
      %v5210 = vpop.permute.xlu0 %5209
      %5211 = vrot.lane.b32.xlu0 %v4784, 16
      %v5212 = vpop.permute.xlu0 %5211
      %5213 = vrot.lane.b32.xlu0 %v4786, 16
      %v5214 = vpop.permute.xlu0 %5213
      %5215 = vrot.lane.b32.xlu0 %v4789, 16
      %v5216 = vpop.permute.xlu0 %5215
      %5217 = vrot.lane.b32.xlu0 %v4791, 16
      %v5218 = vpop.permute.xlu0 %5217
      %5219 = vrot.lane.b32.xlu0 %v4794, 16
      %v5220 = vpop.permute.xlu0 %5219
      %5221 = vrot.lane.b32.xlu0 %v4796, 16
      %v5222 = vpop.permute.xlu0 %5221
      %5223 = vrot.lane.b32.xlu0 %v4799, 16
      %v5224 = vpop.permute.xlu0 %5223
      %5225 = vrot.lane.b32.xlu0 %v4801, 16
      %v5226 = vpop.permute.xlu0 %5225
      %5227 = vrot.lane.b32.xlu0 %v4804, 16
      %v5228 = vpop.permute.xlu0 %5227
      %5229 = vrot.lane.b32.xlu0 %v4806, 16
      %v5230 = vpop.permute.xlu0 %5229
      %5231 = vrot.lane.b32.xlu0 %v4809, 16
      %v5232 = vpop.permute.xlu0 %5231
      %5233 = vrot.lane.b32.xlu0 %v4811, 16
      %v5234 = vpop.permute.xlu0 %5233
      %5235 = vrot.lane.b32.xlu0 %v4891, 16
      %v5236 = vpop.permute.xlu0 %5235
      %5237 = vrot.lane.b32.xlu0 %v4893, 16
      %v5238 = vpop.permute.xlu0 %5237
      %5271 = vrot.lane.b32.xlu0 %v4819, 52
      %v5272 = vpop.permute.xlu0 %5271
      %5273 = vrot.lane.b32.xlu0 %v4821, 52
      %v5274 = vpop.permute.xlu0 %5273
      %5275 = vrot.lane.b32.xlu0 %v4814, 52
      %v5276 = vpop.permute.xlu0 %5275
      %5277 = vrot.lane.b32.xlu0 %v4816, 52
      %v5278 = vpop.permute.xlu0 %5277
      %5279 = vrot.lane.b32.xlu0 %v4824, 52
      %v5280 = vpop.permute.xlu0 %5279
      %5281 = vrot.lane.b32.xlu0 %v4826, 52
      %v5282 = vpop.permute.xlu0 %5281
      %5283 = vrot.lane.b32.xlu0 %v4829, 52
      %v5284 = vpop.permute.xlu0 %5283
      %5285 = vrot.lane.b32.xlu0 %v4831, 52
      %v5286 = vpop.permute.xlu0 %5285
      %5287 = vrot.lane.b32.xlu0 %v4834, 52
      %v5288 = vpop.permute.xlu0 %5287
      %5289 = vrot.lane.b32.xlu0 %v4836, 52
      %v5290 = vpop.permute.xlu0 %5289
      %5291 = vrot.lane.b32.xlu0 %v4839, 52
      %v5292 = vpop.permute.xlu0 %5291
      %5293 = vrot.lane.b32.xlu0 %v4841, 52
      %v5294 = vpop.permute.xlu0 %5293
      %5295 = vrot.lane.b32.xlu0 %v4844, 52
      %v5296 = vpop.permute.xlu0 %5295
      %5297 = vrot.lane.b32.xlu0 %v4846, 52
      %v5298 = vpop.permute.xlu0 %5297
      %5299 = vrot.lane.b32.xlu0 %v4849, 52
      %v5300 = vpop.permute.xlu0 %5299
      %5301 = vrot.lane.b32.xlu0 %v4851, 52
      %v5302 = vpop.permute.xlu0 %5301
      %5303 = vrot.lane.b32.xlu0 %v4854, 52
      %v5304 = vpop.permute.xlu0 %5303
      %5305 = vrot.lane.b32.xlu0 %v4856, 52
      %v5306 = vpop.permute.xlu0 %5305
      %5307 = vrot.lane.b32.xlu0 %v4859, 52
      %v5308 = vpop.permute.xlu0 %5307
      %5309 = vrot.lane.b32.xlu0 %v4861, 52
      %v5310 = vpop.permute.xlu0 %5309
      %5311 = vrot.lane.b32.xlu0 %v4864, 52
      %v5312 = vpop.permute.xlu0 %5311
      %5313 = vrot.lane.b32.xlu0 %v4866, 52
      %v5314 = vpop.permute.xlu0 %5313
      %5315 = vrot.lane.b32.xlu0 %v4869, 52
      %v5316 = vpop.permute.xlu0 %5315
      %5317 = vrot.lane.b32.xlu0 %v4871, 52
      %v5318 = vpop.permute.xlu0 %5317
      %5319 = vrot.lane.b32.xlu0 %v4874, 52
      %v5320 = vpop.permute.xlu0 %5319
      %5321 = vrot.lane.b32.xlu0 %v4876, 52
      %v5322 = vpop.permute.xlu0 %5321
      %5323 = vrot.lane.b32.xlu0 %v4879, 52
      %v5324 = vpop.permute.xlu0 %5323
      %5325 = vrot.lane.b32.xlu0 %v4881, 52
      %v5326 = vpop.permute.xlu0 %5325
      %5327 = vrot.lane.b32.xlu0 %v4884, 52
      %v5328 = vpop.permute.xlu0 %5327
      %5329 = vrot.lane.b32.xlu0 %v4886, 52
      %v5330 = vpop.permute.xlu0 %5329
      %5331 = vrot.lane.b32.xlu0 %v4896, 52
      %v5332 = vpop.permute.xlu0 %5331
      %5333 = vrot.lane.b32.xlu0 %v4898, 52
      %v5334 = vpop.permute.xlu0 %5333
      %5367 = vrot.lane.b32.xlu0 %v4675, 88
      %v5368 = vpop.permute.xlu0 %5367
      %5369 = vrot.lane.b32.xlu0 %v4550, 88
      %v5370 = vpop.permute.xlu0 %5369
      %5371 = vrot.lane.b32.xlu0 %v4677, 88
      %v5372 = vpop.permute.xlu0 %5371
      %5373 = vrot.lane.b32.xlu0 %v4556, 88
      %v5374 = vpop.permute.xlu0 %5373
      %5375 = vrot.lane.b32.xlu0 %v4678, 88
      %v5376 = vpop.permute.xlu0 %5375
      %5377 = vrot.lane.b32.xlu0 %v4559, 88
      %v5378 = vpop.permute.xlu0 %5377
      %5379 = vrot.lane.b32.xlu0 %v4679, 88
      %v5380 = vpop.permute.xlu0 %5379
      %5381 = vrot.lane.b32.xlu0 %v4562, 88
      %v5382 = vpop.permute.xlu0 %5381
      %5383 = vrot.lane.b32.xlu0 %v4680, 88
      %v5384 = vpop.permute.xlu0 %5383
      %5385 = vrot.lane.b32.xlu0 %v4565, 88
      %v5386 = vpop.permute.xlu0 %5385
      %5387 = vrot.lane.b32.xlu0 %v4681, 88
      %v5388 = vpop.permute.xlu0 %5387
      %5389 = vrot.lane.b32.xlu0 %v4568, 88
      %v5390 = vpop.permute.xlu0 %5389
      %5391 = vrot.lane.b32.xlu0 %v4682, 88
      %v5392 = vpop.permute.xlu0 %5391
      %5393 = vrot.lane.b32.xlu0 %v4571, 88
      %v5394 = vpop.permute.xlu0 %5393
      %5395 = vrot.lane.b32.xlu0 %v4683, 88
      %v5396 = vpop.permute.xlu0 %5395
      %5397 = vrot.lane.b32.xlu0 %v4574, 88
      %v5398 = vpop.permute.xlu0 %5397
      %5399 = vrot.lane.b32.xlu0 %v4684, 88
      %v5400 = vpop.permute.xlu0 %5399
      %5401 = vrot.lane.b32.xlu0 %v4577, 88
      %v5402 = vpop.permute.xlu0 %5401
      %5403 = vrot.lane.b32.xlu0 %v4685, 88
      %v5404 = vpop.permute.xlu0 %5403
      %5405 = vrot.lane.b32.xlu0 %v4580, 88
      %v5406 = vpop.permute.xlu0 %5405
      %5407 = vrot.lane.b32.xlu0 %v4686, 88
      %v5408 = vpop.permute.xlu0 %5407
      %5409 = vrot.lane.b32.xlu0 %v4583, 88
      %v5410 = vpop.permute.xlu0 %5409
      %5411 = vrot.lane.b32.xlu0 %v4687, 88
      %v5412 = vpop.permute.xlu0 %5411
      %5413 = vrot.lane.b32.xlu0 %v4586, 88
      %v5414 = vpop.permute.xlu0 %5413
      %5415 = vrot.lane.b32.xlu0 %v4688, 88
      %v5416 = vpop.permute.xlu0 %5415
      %5417 = vrot.lane.b32.xlu0 %v4589, 88
      %v5418 = vpop.permute.xlu0 %5417
      %5419 = vrot.lane.b32.xlu0 %v4689, 88
      %v5420 = vpop.permute.xlu0 %5419
      %5421 = vrot.lane.b32.xlu0 %v4592, 88
      %v5422 = vpop.permute.xlu0 %5421
      %5423 = vrot.lane.b32.xlu0 %v4690, 88
      %v5424 = vpop.permute.xlu0 %5423
      %5425 = vrot.lane.b32.xlu0 %v4595, 88
      %v5426 = vpop.permute.xlu0 %5425
      %5457 = vrot.lane.b32.xlu0 %v4739, 124
      %v5458 = vpop.permute.xlu0 %5457
      %5459 = vrot.lane.b32.xlu0 %v4741, 124
      %v5460 = vpop.permute.xlu0 %5459
      %5461 = vrot.lane.b32.xlu0 %v4749, 124
      %v5462 = vpop.permute.xlu0 %5461
      %5463 = vrot.lane.b32.xlu0 %v4751, 124
      %v5464 = vpop.permute.xlu0 %5463
      %5465 = vrot.lane.b32.xlu0 %v4754, 124
      %v5466 = vpop.permute.xlu0 %5465
      %5467 = vrot.lane.b32.xlu0 %v4756, 124
      %v5468 = vpop.permute.xlu0 %5467
      %5469 = vrot.lane.b32.xlu0 %v4759, 124
      %v5470 = vpop.permute.xlu0 %5469
      %5471 = vrot.lane.b32.xlu0 %v4761, 124
      %v5472 = vpop.permute.xlu0 %5471
      %5473 = vrot.lane.b32.xlu0 %v4764, 124
      %v5474 = vpop.permute.xlu0 %5473
      %5475 = vrot.lane.b32.xlu0 %v4766, 124
      %v5476 = vpop.permute.xlu0 %5475
      %5477 = vrot.lane.b32.xlu0 %v4769, 124
      %v5478 = vpop.permute.xlu0 %5477
      %5479 = vrot.lane.b32.xlu0 %v4771, 124
      %v5480 = vpop.permute.xlu0 %5479
      %5481 = vrot.lane.b32.xlu0 %v4774, 124
      %v5482 = vpop.permute.xlu0 %5481
      %5483 = vrot.lane.b32.xlu0 %v4776, 124
      %v5484 = vpop.permute.xlu0 %5483
      %5485 = vrot.lane.b32.xlu0 %v4779, 124
      %v5486 = vpop.permute.xlu0 %5485
      %5487 = vrot.lane.b32.xlu0 %v4781, 124
      %v5488 = vpop.permute.xlu0 %5487
      %5489 = vrot.lane.b32.xlu0 %v4784, 124
      %v5490 = vpop.permute.xlu0 %5489
      %5491 = vrot.lane.b32.xlu0 %v4786, 124
      %v5492 = vpop.permute.xlu0 %5491
      %5493 = vrot.lane.b32.xlu0 %v4789, 124
      %v5494 = vpop.permute.xlu0 %5493
      %5495 = vrot.lane.b32.xlu0 %v4791, 124
      %v5496 = vpop.permute.xlu0 %5495
      %5497 = vrot.lane.b32.xlu0 %v4794, 124
      %v5498 = vpop.permute.xlu0 %5497
      %5499 = vrot.lane.b32.xlu0 %v4796, 124
      %v5500 = vpop.permute.xlu0 %5499
      %5501 = vrot.lane.b32.xlu0 %v4799, 124
      %v5502 = vpop.permute.xlu0 %5501
      %5503 = vrot.lane.b32.xlu0 %v4801, 124
      %v5504 = vpop.permute.xlu0 %5503
      %5505 = vrot.lane.b32.xlu0 %v4804, 124
      %v5506 = vpop.permute.xlu0 %5505
      %5507 = vrot.lane.b32.xlu0 %v4806, 124
      %v5508 = vpop.permute.xlu0 %5507
      %5509 = vrot.lane.b32.xlu0 %v4809, 124
      %v5510 = vpop.permute.xlu0 %5509
      %5511 = vrot.lane.b32.xlu0 %v4811, 124
      %v5512 = vpop.permute.xlu0 %5511
      %5513 = vrot.lane.b32.xlu0 %v4891, 124
      %v5514 = vpop.permute.xlu0 %5513
      %5515 = vrot.lane.b32.xlu0 %v4893, 124
      %v5516 = vpop.permute.xlu0 %5515
      %5547 = vrot.lane.b32.xlu0 %v4814, 32
      %v5548 = vpop.permute.xlu0 %5547
      %5549 = vrot.lane.b32.xlu0 %v4816, 32
      %v5550 = vpop.permute.xlu0 %5549
      %5551 = vrot.lane.b32.xlu0 %v4824, 32
      %v5552 = vpop.permute.xlu0 %5551
      %5553 = vrot.lane.b32.xlu0 %v4826, 32
      %v5554 = vpop.permute.xlu0 %5553
      %5555 = vrot.lane.b32.xlu0 %v4829, 32
      %v5556 = vpop.permute.xlu0 %5555
      %5557 = vrot.lane.b32.xlu0 %v4831, 32
      %v5558 = vpop.permute.xlu0 %5557
      %5559 = vrot.lane.b32.xlu0 %v4834, 32
      %v5560 = vpop.permute.xlu0 %5559
      %5561 = vrot.lane.b32.xlu0 %v4836, 32
      %v5562 = vpop.permute.xlu0 %5561
      %5563 = vrot.lane.b32.xlu0 %v4839, 32
      %v5564 = vpop.permute.xlu0 %5563
      %5565 = vrot.lane.b32.xlu0 %v4841, 32
      %v5566 = vpop.permute.xlu0 %5565
      %5567 = vrot.lane.b32.xlu0 %v4844, 32
      %v5568 = vpop.permute.xlu0 %5567
      %5569 = vrot.lane.b32.xlu0 %v4846, 32
      %v5570 = vpop.permute.xlu0 %5569
      %5571 = vrot.lane.b32.xlu0 %v4849, 32
      %v5572 = vpop.permute.xlu0 %5571
      %5573 = vrot.lane.b32.xlu0 %v4851, 32
      %v5574 = vpop.permute.xlu0 %5573
      %5575 = vrot.lane.b32.xlu0 %v4854, 32
      %v5576 = vpop.permute.xlu0 %5575
      %5577 = vrot.lane.b32.xlu0 %v4856, 32
      %v5578 = vpop.permute.xlu0 %5577
      %5579 = vrot.lane.b32.xlu0 %v4859, 32
      %v5580 = vpop.permute.xlu0 %5579
      %5581 = vrot.lane.b32.xlu0 %v4861, 32
      %v5582 = vpop.permute.xlu0 %5581
      %5583 = vrot.lane.b32.xlu0 %v4864, 32
      %v5584 = vpop.permute.xlu0 %5583
      %5585 = vrot.lane.b32.xlu0 %v4866, 32
      %v5586 = vpop.permute.xlu0 %5585
      %5587 = vrot.lane.b32.xlu0 %v4869, 32
      %v5588 = vpop.permute.xlu0 %5587
      %5589 = vrot.lane.b32.xlu0 %v4871, 32
      %v5590 = vpop.permute.xlu0 %5589
      %5591 = vrot.lane.b32.xlu0 %v4874, 32
      %v5592 = vpop.permute.xlu0 %5591
      %5593 = vrot.lane.b32.xlu0 %v4876, 32
      %v5594 = vpop.permute.xlu0 %5593
      %5595 = vrot.lane.b32.xlu0 %v4879, 32
      %v5596 = vpop.permute.xlu0 %5595
      %5597 = vrot.lane.b32.xlu0 %v4881, 32
      %v5598 = vpop.permute.xlu0 %5597
      %5599 = vrot.lane.b32.xlu0 %v4884, 32
      %v5600 = vpop.permute.xlu0 %5599
      %5601 = vrot.lane.b32.xlu0 %v4886, 32
      %v5602 = vpop.permute.xlu0 %5601
      %5603 = vrot.lane.b32.xlu0 %v4896, 32
      %v5604 = vpop.permute.xlu0 %5603
      %5605 = vrot.lane.b32.xlu0 %v4898, 32
      %v5606 = vpop.permute.xlu0 %5605
      %v5637 = vsel %vm1784, %v4675, %v4900
      %v5638 = vsel %vm1784, %v4550, %v4902
      %v5639 = vsel %vm1784, %v4676, %v4904
      %v5640 = vsel %vm1784, %v4553, %v4906
      %v5641 = vsel %vm1784, %v4677, %v4908
      %v5642 = vsel %vm1784, %v4556, %v4910
      %v5643 = vsel %vm1784, %v4678, %v4912
      %v5644 = vsel %vm1784, %v4559, %v4914
      %v5645 = vsel %vm1784, %v4679, %v4916
      %v5646 = vsel %vm1784, %v4562, %v4918
      %v5647 = vsel %vm1784, %v4680, %v4920
      %v5648 = vsel %vm1784, %v4565, %v4922
      %v5649 = vsel %vm1784, %v4681, %v4924
      %v5650 = vsel %vm1784, %v4568, %v4926
      %v5651 = vsel %vm1784, %v4682, %v4928
      %v5652 = vsel %vm1784, %v4571, %v4930
      %v5653 = vsel %vm1784, %v4683, %v4932
      %v5654 = vsel %vm1784, %v4574, %v4934
      %v5655 = vsel %vm1784, %v4684, %v4936
      %v5656 = vsel %vm1784, %v4577, %v4938
      %v5657 = vsel %vm1784, %v4685, %v4940
      %v5658 = vsel %vm1784, %v4580, %v4942
      %v5659 = vsel %vm1784, %v4686, %v4944
      %v5660 = vsel %vm1784, %v4583, %v4946
      %v5661 = vsel %vm1784, %v4687, %v4948
      %v5662 = vsel %vm1784, %v4586, %v4950
      %v5663 = vsel %vm1784, %v4688, %v4952
      %v5664 = vsel %vm1784, %v4589, %v4954
      %v5665 = vsel %vm1784, %v4689, %v4956
      %v5666 = vsel %vm1784, %v4592, %v4958
      %vm5667 = vcmask 588800
      %v5668 = vsel %vm5667, %v5637, %v4990
      %v5669 = vsel %vm5667, %v5638, %v4992
      %v5670 = vsel %vm5667, %v5639, %v4994
      %v5671 = vsel %vm5667, %v5640, %v4996
      %v5672 = vsel %vm5667, %v5641, %v4998
      %v5673 = vsel %vm5667, %v5642, %v5000
      %v5674 = vsel %vm5667, %v5643, %v5002
      %v5675 = vsel %vm5667, %v5644, %v5004
      %v5676 = vsel %vm5667, %v5645, %v5006
      %v5677 = vsel %vm5667, %v5646, %v5008
      %v5678 = vsel %vm5667, %v5647, %v5010
      %v5679 = vsel %vm5667, %v5648, %v5012
      %v5680 = vsel %vm5667, %v5649, %v5014
      %v5681 = vsel %vm5667, %v5650, %v5016
      %v5682 = vsel %vm5667, %v5651, %v5018
      %v5683 = vsel %vm5667, %v5652, %v5020
      %v5684 = vsel %vm5667, %v5653, %v5022
      %v5685 = vsel %vm5667, %v5654, %v5024
      %v5686 = vsel %vm5667, %v5655, %v5026
      %v5687 = vsel %vm5667, %v5656, %v5028
      %v5688 = vsel %vm5667, %v5657, %v5030
      %v5689 = vsel %vm5667, %v5658, %v5032
      %v5690 = vsel %vm5667, %v5659, %v5034
      %v5691 = vsel %vm5667, %v5660, %v5036
      %v5692 = vsel %vm5667, %v5661, %v5038
      %v5693 = vsel %vm5667, %v5662, %v5040
      %v5694 = vsel %vm5667, %v5663, %v5042
      %v5695 = vsel %vm5667, %v5664, %v5044
      %v5696 = vsel %vm5667, %v5665, %v5046
      %v5697 = vsel %vm5667, %v5666, %v5048
      %vm5698 = vcmask 883712
      %v5699 = vsel %vm5698, %v5668, %v5080
      %v5700 = vsel %vm5698, %v5669, %v5082
      %v5701 = vsel %vm5698, %v5670, %v5084
      %v5702 = vsel %vm5698, %v5671, %v5086
      %v5703 = vsel %vm5698, %v5668, %v5088
      %v5704 = vsel %vm5698, %v5669, %v5090
      %v5705 = vsel %vm5698, %v5672, %v5092
      %v5706 = vsel %vm5698, %v5673, %v5094
      %v5707 = vsel %vm5698, %v5674, %v5096
      %v5708 = vsel %vm5698, %v5675, %v5098
      %v5709 = vsel %vm5698, %v5676, %v5100
      %v5710 = vsel %vm5698, %v5677, %v5102
      %v5711 = vsel %vm5698, %v5678, %v5104
      %v5712 = vsel %vm5698, %v5679, %v5106
      %v5713 = vsel %vm5698, %v5680, %v5108
      %v5714 = vsel %vm5698, %v5681, %v5110
      %v5715 = vsel %vm5698, %v5682, %v5112
      %v5716 = vsel %vm5698, %v5683, %v5114
      %v5717 = vsel %vm5698, %v5684, %v5116
      %v5718 = vsel %vm5698, %v5685, %v5118
      %v5719 = vsel %vm5698, %v5686, %v5120
      %v5720 = vsel %vm5698, %v5687, %v5122
      %v5721 = vsel %vm5698, %v5688, %v5124
      %v5722 = vsel %vm5698, %v5689, %v5126
      %v5723 = vsel %vm5698, %v5690, %v5128
      %v5724 = vsel %vm5698, %v5691, %v5130
      %v5725 = vsel %vm5698, %v5692, %v5132
      %v5726 = vsel %vm5698, %v5693, %v5134
      %v5727 = vsel %vm5698, %v5694, %v5136
      %v5728 = vsel %vm5698, %v5695, %v5138
      %v5729 = vsel %vm5698, %v5696, %v5140
      %v5730 = vsel %vm5698, %v5697, %v5142
      %v5731 = vsel %vm1607, %v5080, %v5176
      %v5732 = vsel %vm1607, %v5082, %v5178
      %v5733 = vsel %vm1607, %v5084, %v5180
      %v5734 = vsel %vm1607, %v5086, %v5182
      %v5735 = vsel %vm1607, %v5088, %v5184
      %v5736 = vsel %vm1607, %v5090, %v5186
      %v5737 = vsel %vm1607, %v5092, %v5188
      %v5738 = vsel %vm1607, %v5094, %v5190
      %v5739 = vsel %vm1607, %v5096, %v5192
      %v5740 = vsel %vm1607, %v5098, %v5194
      %v5741 = vsel %vm1607, %v5100, %v5196
      %v5742 = vsel %vm1607, %v5102, %v5198
      %v5743 = vsel %vm1607, %v5104, %v5200
      %v5744 = vsel %vm1607, %v5106, %v5202
      %v5745 = vsel %vm1607, %v5108, %v5204
      %v5746 = vsel %vm1607, %v5110, %v5206
      %v5747 = vsel %vm1607, %v5112, %v5208
      %v5748 = vsel %vm1607, %v5114, %v5210
      %v5749 = vsel %vm1607, %v5116, %v5212
      %v5750 = vsel %vm1607, %v5118, %v5214
      %v5751 = vsel %vm1607, %v5120, %v5216
      %v5752 = vsel %vm1607, %v5122, %v5218
      %v5753 = vsel %vm1607, %v5124, %v5220
      %v5754 = vsel %vm1607, %v5126, %v5222
      %v5755 = vsel %vm1607, %v5128, %v5224
      %v5756 = vsel %vm1607, %v5130, %v5226
      %v5757 = vsel %vm1607, %v5132, %v5228
      %v5758 = vsel %vm1607, %v5134, %v5230
      %v5759 = vsel %vm1607, %v5136, %v5232
      %v5760 = vsel %vm1607, %v5138, %v5234
      %v5761 = vsel %vm1607, %v5140, %v5236
      %v5762 = vsel %vm1607, %v5142, %v5238
      %v5763 = vsel %vm3855, %v5731, %v5272
      %v5764 = vsel %vm3855, %v5732, %v5274
      %v5765 = vsel %vm3855, %v5733, %v5276
      %v5766 = vsel %vm3855, %v5734, %v5278
      %v5767 = vsel %vm3855, %v5735, %v5280
      %v5768 = vsel %vm3855, %v5736, %v5282
      %v5769 = vsel %vm3855, %v5737, %v5284
      %v5770 = vsel %vm3855, %v5738, %v5286
      %v5771 = vsel %vm3855, %v5739, %v5288
      %v5772 = vsel %vm3855, %v5740, %v5290
      %v5773 = vsel %vm3855, %v5741, %v5292
      %v5774 = vsel %vm3855, %v5742, %v5294
      %v5775 = vsel %vm3855, %v5743, %v5296
      %v5776 = vsel %vm3855, %v5744, %v5298
      %v5777 = vsel %vm3855, %v5745, %v5300
      %v5778 = vsel %vm3855, %v5746, %v5302
      %v5779 = vsel %vm3855, %v5747, %v5304
      %v5780 = vsel %vm3855, %v5748, %v5306
      %v5781 = vsel %vm3855, %v5749, %v5308
      %v5782 = vsel %vm3855, %v5750, %v5310
      %v5783 = vsel %vm3855, %v5751, %v5312
      %v5784 = vsel %vm3855, %v5752, %v5314
      %v5785 = vsel %vm3855, %v5753, %v5316
      %v5786 = vsel %vm3855, %v5754, %v5318
      %v5787 = vsel %vm3855, %v5755, %v5320
      %v5788 = vsel %vm3855, %v5756, %v5322
      %v5789 = vsel %vm3855, %v5757, %v5324
      %v5790 = vsel %vm3855, %v5758, %v5326
      %v5791 = vsel %vm3855, %v5759, %v5328
      %v5792 = vsel %vm3855, %v5760, %v5330
      %v5793 = vsel %vm3855, %v5761, %v5332
      %v5794 = vsel %vm3855, %v5762, %v5334
      %vm5795 = vcmask 719872
      %v5796 = vsel %vm5795, %v5763, %v5368
      %v5797 = vsel %vm5795, %v5764, %v5370
      %v5798 = vsel %vm5795, %v5765, %v5372
      %v5799 = vsel %vm5795, %v5766, %v5374
      %v5800 = vsel %vm5795, %v5767, %v5376
      %v5801 = vsel %vm5795, %v5768, %v5378
      %v5802 = vsel %vm5795, %v5769, %v5380
      %v5803 = vsel %vm5795, %v5770, %v5382
      %v5804 = vsel %vm5795, %v5771, %v5384
      %v5805 = vsel %vm5795, %v5772, %v5386
      %v5806 = vsel %vm5795, %v5773, %v5388
      %v5807 = vsel %vm5795, %v5774, %v5390
      %v5808 = vsel %vm5795, %v5775, %v5392
      %v5809 = vsel %vm5795, %v5776, %v5394
      %v5810 = vsel %vm5795, %v5777, %v5396
      %v5811 = vsel %vm5795, %v5778, %v5398
      %v5812 = vsel %vm5795, %v5779, %v5400
      %v5813 = vsel %vm5795, %v5780, %v5402
      %v5814 = vsel %vm5795, %v5781, %v5404
      %v5815 = vsel %vm5795, %v5782, %v5406
      %v5816 = vsel %vm5795, %v5783, %v5408
      %v5817 = vsel %vm5795, %v5784, %v5410
      %v5818 = vsel %vm5795, %v5785, %v5412
      %v5819 = vsel %vm5795, %v5786, %v5414
      %v5820 = vsel %vm5795, %v5787, %v5416
      %v5821 = vsel %vm5795, %v5788, %v5418
      %v5822 = vsel %vm5795, %v5789, %v5420
      %v5823 = vsel %vm5795, %v5790, %v5422
      %v5824 = vsel %vm5795, %v5791, %v5424
      %v5825 = vsel %vm5795, %v5792, %v5426
      %v5826 = vsel %vm5795, %v5793, %v5420
      %v5827 = vsel %vm5795, %v5794, %v5422
      %vm5828 = vcmask 1014784
      %v5829 = vsel %vm5828, %v5796, %v5458
      %v5830 = vsel %vm5828, %v5797, %v5460
      %v5831 = vsel %vm5828, %v5798, %v5462
      %v5832 = vsel %vm5828, %v5799, %v5464
      %v5833 = vsel %vm5828, %v5800, %v5466
      %v5834 = vsel %vm5828, %v5801, %v5468
      %v5835 = vsel %vm5828, %v5802, %v5470
      %v5836 = vsel %vm5828, %v5803, %v5472
      %v5837 = vsel %vm5828, %v5804, %v5474
      %v5838 = vsel %vm5828, %v5805, %v5476
      %v5839 = vsel %vm5828, %v5806, %v5478
      %v5840 = vsel %vm5828, %v5807, %v5480
      %v5841 = vsel %vm5828, %v5808, %v5482
      %v5842 = vsel %vm5828, %v5809, %v5484
      %v5843 = vsel %vm5828, %v5810, %v5486
      %v5844 = vsel %vm5828, %v5811, %v5488
      %v5845 = vsel %vm5828, %v5812, %v5490
      %v5846 = vsel %vm5828, %v5813, %v5492
      %v5847 = vsel %vm5828, %v5814, %v5494
      %v5848 = vsel %vm5828, %v5815, %v5496
      %v5849 = vsel %vm5828, %v5816, %v5498
      %v5850 = vsel %vm5828, %v5817, %v5500
      %v5851 = vsel %vm5828, %v5818, %v5502
      %v5852 = vsel %vm5828, %v5819, %v5504
      %v5853 = vsel %vm5828, %v5820, %v5506
      %v5854 = vsel %vm5828, %v5821, %v5508
      %v5855 = vsel %vm5828, %v5822, %v5510
      %v5856 = vsel %vm5828, %v5823, %v5512
      %v5857 = vsel %vm5828, %v5824, %v5514
      %v5858 = vsel %vm5828, %v5825, %v5516
      %v5859 = vsel %vm5828, %v5826, %v5510
      %v5860 = vsel %vm5828, %v5827, %v5512
      %v5861 = vsel %vm1739, %v5458, %v5548
      %v5862 = vsel %vm1739, %v5460, %v5550
      %v5863 = vsel %vm1739, %v5462, %v5552
      %v5864 = vsel %vm1739, %v5464, %v5554
      %v5865 = vsel %vm1739, %v5466, %v5556
      %v5866 = vsel %vm1739, %v5468, %v5558
      %v5867 = vsel %vm1739, %v5470, %v5560
      %v5868 = vsel %vm1739, %v5472, %v5562
      %v5869 = vsel %vm1739, %v5474, %v5564
      %v5870 = vsel %vm1739, %v5476, %v5566
      %v5871 = vsel %vm1739, %v5478, %v5568
      %v5872 = vsel %vm1739, %v5480, %v5570
      %v5873 = vsel %vm1739, %v5482, %v5572
      %v5874 = vsel %vm1739, %v5484, %v5574
      %v5875 = vsel %vm1739, %v5486, %v5576
      %v5876 = vsel %vm1739, %v5488, %v5578
      %v5877 = vsel %vm1739, %v5490, %v5580
      %v5878 = vsel %vm1739, %v5492, %v5582
      %v5879 = vsel %vm1739, %v5494, %v5584
      %v5880 = vsel %vm1739, %v5496, %v5586
      %v5881 = vsel %vm1739, %v5498, %v5588
      %v5882 = vsel %vm1739, %v5500, %v5590
      %v5883 = vsel %vm1739, %v5502, %v5592
      %v5884 = vsel %vm1739, %v5504, %v5594
      %v5885 = vsel %vm1739, %v5506, %v5596
      %v5886 = vsel %vm1739, %v5508, %v5598
      %v5887 = vsel %vm1739, %v5510, %v5600
      %v5888 = vsel %vm1739, %v5512, %v5602
      %v5889 = vsel %vm1739, %v5514, %v5604
      %v5890 = vsel %vm1739, %v5516, %v5606
      %v5891 = vld [vmem:[%s5] sm:$0xff]
      %v5892 = vld [vmem:[%s5 + $0x8] sm:$0xff]
      %v5893 = vld [vmem:[%s5 + $0x10] sm:$0xff]
      %v5894 = vld [vmem:[%s5 + $0x18] sm:$0xff]
      %v5895 = vld [vmem:[%s5 + $0x20] sm:$0xff]
      %v5896 = vld [vmem:[%s5 + $0x28] sm:$0xff]
      %v5897 = vld [vmem:[%s5 + $0x30] sm:$0xff]
      %v5898 = vld [vmem:[%s5 + $0x38] sm:$0xff]
      %v5899 = vld [vmem:[%s5 + $0x40] sm:$0xff]
      %v5900 = vld [vmem:[%s5 + $0x48] sm:$0xff]
      %v5901 = vld [vmem:[%s5 + $0x50] sm:$0xff]
      %v5902 = vld [vmem:[%s5 + $0x58] sm:$0xff]
      %v5903 = vld [vmem:[%s5 + $0x60] sm:$0xff]
      %v5904 = vld [vmem:[%s5 + $0x68] sm:$0xff]
      %v5905 = vld [vmem:[%s5 + $0x70] sm:$0xff]
      %v5906 = vld [vmem:[%s5 + $0x78] sm:$0xff]
      %v5907 = vld [vmem:[%s5 + $0x80] sm:$0xff]
      %v5908 = vld [vmem:[%s5 + $0x88] sm:$0xff]
      %v5909 = vld [vmem:[%s5 + $0x90] sm:$0xff]
      %v5910 = vld [vmem:[%s5 + $0x98] sm:$0xff]
      %v5911 = vld [vmem:[%s5 + $0xa0] sm:$0xff]
      %v5912 = vld [vmem:[%s5 + $0xa8] sm:$0xff]
      %v5913 = vld [vmem:[%s5 + $0xb0] sm:$0xff]
      %v5914 = vld [vmem:[%s5 + $0xb8] sm:$0xff]
      %v5915 = vld [vmem:[%s5 + $0xc0] sm:$0xff]
      %v5916 = vld [vmem:[%s5 + $0xc8] sm:$0xff]
      %v5917 = vld [vmem:[%s5 + $0xd0] sm:$0xff]
      %v5918 = vld [vmem:[%s5 + $0xd8] sm:$0xff]
      %v5919 = vld [vmem:[%s5 + $0xe0] sm:$0xff]
      %v5920 = vld [vmem:[%s5 + $0xe8] sm:$0xff]
      %v5921 = vld [vmem:[%s5 + $0xf0] sm:$0xff]
      %v5922 = vld [vmem:[%s5 + $0xf8] sm:$0xff]
      %v5923 = vld [vmem:[%s5 + $0x100] sm:$0xff]
      %v5924 = vld [vmem:[%s5 + $0x108] sm:$0xff]
      %v5925 = vld [vmem:[%s5 + $0x110] sm:$0xff]
      %v5926 = vld [vmem:[%s5 + $0x118] sm:$0xff]
      %v5927 = vld [vmem:[%s5 + $0x120] sm:$0xff]
      %v5928 = vld [vmem:[%s5 + $0x128] sm:$0xff]
      %v5929 = vld [vmem:[%s5 + $0x130] sm:$0xff]
      %v5930 = vld [vmem:[%s5 + $0x138] sm:$0xff]
      %v5931 = vld [vmem:[%s5 + $0x140] sm:$0xf]
      %v5932 = vld [vmem:[%s6] sm:$0x1]
      %v5934 = vlaneseq
      %v5935 = vshrl.u32 %v5934, 7
      %v5936 = vsub.s32 0, %v5935
      %v5937 = vrot.slane %v5932, %v5936
      %vm5939 = vcmask 556032
      %v5941 = vsel %vm5939, %v5861, 0
      %v5944 = vsel %vm5939, %v5862, 0
      %v5947 = vsel %vm5939, %v5863, 0
      %v5950 = vsel %vm5939, %v5864, 0
      %v5953 = vsel %vm5939, %v5865, 0
      %v5956 = vsel %vm5939, %v5866, 0
      %v5959 = vsel %vm5939, %v5867, 0
      %v5962 = vsel %vm5939, %v5868, 0
      %v5965 = vsel %vm5939, %v5869, 0
      %v5968 = vsel %vm5939, %v5870, 0
      %v5971 = vsel %vm5939, %v5871, 0
      %v5974 = vsel %vm5939, %v5872, 0
      %v5977 = vsel %vm5939, %v5873, 0
      %v5980 = vsel %vm5939, %v5874, 0
      %v5983 = vsel %vm5939, %v5875, 0
      %v5986 = vsel %vm5939, %v5876, 0
      %v5989 = vsel %vm5939, %v5877, 0
      %v5992 = vsel %vm5939, %v5878, 0
      %v5995 = vsel %vm5939, %v5879, 0
      %v5998 = vsel %vm5939, %v5880, 0
      %v6001 = vsel %vm5939, %v5881, 0
      %v6004 = vsel %vm5939, %v5882, 0
      %v6007 = vsel %vm5939, %v5883, 0
      %v6010 = vsel %vm5939, %v5884, 0
      %v6013 = vsel %vm5939, %v5885, 0
      %v6016 = vsel %vm5939, %v5886, 0
      %v6019 = vsel %vm5939, %v5887, 0
      %v6022 = vsel %vm5939, %v5888, 0
      %v6025 = vsel %vm5939, %v5889, 0
      %v6028 = vsel %vm5939, %v5890, 0
      %v6031 = vsel %vm289, %v5931, 0
      %6033 = vmatprep.subr.mxu0 0.0
      %6034 = vmatpush1.msra.mxu0 %v5906
      %6035 = vmatprep.subr.mxu0 0.0
      %6036 = vmatpush1.msra.mxu0 %v5905
      %6037 = vmatprep.subr.mxu0 0.0
      %6038 = vmatpush1.msra.mxu0 %v5904
      %6039 = vmatprep.subr.mxu0 0.0
      %6040 = vmatpush1.msra.mxu0 %v5903
      %6041 = vmatprep.subr.mxu0 0.0
      %6042 = vmatpush1.msra.mxu0 %v5902
      %6043 = vmatprep.subr.mxu0 0.0
      %6044 = vmatpush1.msra.mxu0 %v5901
      %6045 = vmatprep.subr.mxu0 0.0
      %6046 = vmatpush1.msra.mxu0 %v5900
      %6047 = vmatprep.subr.mxu0 0.0
      %6048 = vmatpush1.msra.mxu0 %v5899
      %6049 = vmatprep.subr.mxu0 0.0
      %6050 = vmatpush1.msra.mxu0 %v5898
      %6051 = vmatprep.subr.mxu0 0.0
      %6052 = vmatpush1.msra.mxu0 %v5897
      %6053 = vmatprep.subr.mxu0 0.0
      %6054 = vmatpush1.msra.mxu0 %v5896
      %6055 = vmatprep.subr.mxu0 0.0
      %6056 = vmatpush1.msra.mxu0 %v5895
      %6057 = vmatprep.subr.mxu0 0.0
      %6058 = vmatpush1.msra.mxu0 %v5894
      %6059 = vmatprep.subr.mxu0 0.0
      %6060 = vmatpush1.msra.mxu0 %v5893
      %6061 = vmatprep.subr.mxu0 0.0
      %6062 = vmatpush1.msra.mxu0 %v5892
      %6063 = vmatprep.subr.mxu0 0.0
      %6064 = vmatpush1.msra.mxu0 %v5891
      %6065 = vmatprep.subr.mxu0 0.0
      %6066 = vmatpush2.msra.mxu0 %v5922
      %6067 = vmatprep.subr.mxu0 0.0
      %6068 = vmatpush2.msra.mxu0 %v5921
      %6069 = vmatprep.subr.mxu0 0.0
      %6070 = vmatpush2.msra.mxu0 %v5920
      %6071 = vmatprep.subr.mxu0 0.0
      %6072 = vmatpush2.msra.mxu0 %v5919
      %6073 = vmatprep.subr.mxu0 0.0
      %6074 = vmatpush2.msra.mxu0 %v5918
      %6075 = vmatprep.subr.mxu0 0.0
      %6076 = vmatpush2.msra.mxu0 %v5917
      %6077 = vmatprep.subr.mxu0 0.0
      %6078 = vmatpush2.msra.mxu0 %v5916
      %6079 = vmatprep.subr.mxu0 0.0
      %6080 = vmatpush2.msra.mxu0 %v5915
      %6081 = vmatprep.subr.mxu0 0.0
      %6082 = vmatpush2.msra.mxu0 %v5914
      %6083 = vmatprep.subr.mxu0 0.0
      %6084 = vmatpush2.msra.mxu0 %v5913
      %6085 = vmatprep.subr.mxu0 0.0
      %6086 = vmatpush2.msra.mxu0 %v5912
      %6087 = vmatprep.subr.mxu0 0.0
      %6088 = vmatpush2.msra.mxu0 %v5911
      %6089 = vmatprep.subr.mxu0 0.0
      %6090 = vmatpush2.msra.mxu0 %v5910
      %6091 = vmatprep.subr.mxu0 0.0
      %6092 = vmatpush2.msra.mxu0 %v5909
      %6093 = vmatprep.subr.mxu0 0.0
      %6094 = vmatpush2.msra.mxu0 %v5908
      %6095 = vmatprep.subr.mxu0 0.0
      %6096 = vmatpush2.msra.mxu0 %v5907
      %6097 = vmatprep.mubr.f32.mxu0 %v5829
      %6098 = vmatmul.mubr.f32.gmra.mxu0 %v5699
      %v6099 = vpop.f32.mrf.mxu0
      %v6100 = vadd.f32 %v5937, %v6099
      %v6101 = vpop.f32.mrf.mxu0
      %6102 = vmatprep.mubr.f32.mxu0 %v5830
      %6103 = vmatmul.mubr.f32.gmra.mxu0 %v5700
      %v6104 = vpop.f32.mrf.mxu0
      %v6105 = vadd.f32 %v5937, %v6104
      %v6106 = vpop.f32.mrf.mxu0
      %6107 = vmatprep.mubr.f32.mxu0 %v5831
      %6108 = vmatmul.mubr.f32.gmra.mxu0 %v5701
      %v6109 = vpop.f32.mrf.mxu0
      %v6110 = vadd.f32 %v5937, %v6109
      %v6111 = vpop.f32.mrf.mxu0
      %6112 = vmatprep.mubr.f32.mxu0 %v5832
      %6113 = vmatmul.mubr.f32.gmra.mxu0 %v5702
      %v6114 = vpop.f32.mrf.mxu0
      %v6115 = vadd.f32 %v5937, %v6114
      %v6116 = vpop.f32.mrf.mxu0
      %6117 = vmatprep.mubr.f32.mxu0 %v5833
      %6118 = vmatmul.mubr.f32.gmra.mxu0 %v5703
      %v6119 = vpop.f32.mrf.mxu0
      %v6120 = vadd.f32 %v5937, %v6119
      %v6121 = vpop.f32.mrf.mxu0
      %6122 = vmatprep.mubr.f32.mxu0 %v5834
      %6123 = vmatmul.mubr.f32.gmra.mxu0 %v5704
      %v6124 = vpop.f32.mrf.mxu0
      %v6125 = vadd.f32 %v5937, %v6124
      %v6126 = vpop.f32.mrf.mxu0
      %6127 = vmatprep.mubr.f32.mxu0 %v5835
      %6128 = vmatmul.mubr.f32.gmra.mxu0 %v5705
      %v6129 = vpop.f32.mrf.mxu0
      %v6130 = vadd.f32 %v5937, %v6129
      %v6131 = vpop.f32.mrf.mxu0
      %6132 = vmatprep.mubr.f32.mxu0 %v5836
      %6133 = vmatmul.mubr.f32.gmra.mxu0 %v5706
      %v6134 = vpop.f32.mrf.mxu0
      %v6135 = vadd.f32 %v5937, %v6134
      %v6136 = vpop.f32.mrf.mxu0
      %6137 = vmatprep.mubr.f32.mxu0 %v5837
      %6138 = vmatmul.mubr.f32.gmra.mxu0 %v5707
      %v6139 = vpop.f32.mrf.mxu0
      %v6140 = vadd.f32 %v5937, %v6139
      %v6141 = vpop.f32.mrf.mxu0
      %6142 = vmatprep.mubr.f32.mxu0 %v5838
      %6143 = vmatmul.mubr.f32.gmra.mxu0 %v5708
      %v6144 = vpop.f32.mrf.mxu0
      %v6145 = vadd.f32 %v5937, %v6144
      %v6146 = vpop.f32.mrf.mxu0
      %6147 = vmatprep.mubr.f32.mxu0 %v5839
      %6148 = vmatmul.mubr.f32.gmra.mxu0 %v5709
      %v6149 = vpop.f32.mrf.mxu0
      %v6150 = vadd.f32 %v5937, %v6149
      %v6151 = vpop.f32.mrf.mxu0
      %6152 = vmatprep.mubr.f32.mxu0 %v5840
      %6153 = vmatmul.mubr.f32.gmra.mxu0 %v5710
      %v6154 = vpop.f32.mrf.mxu0
      %v6155 = vadd.f32 %v5937, %v6154
      %v6156 = vpop.f32.mrf.mxu0
      %6157 = vmatprep.mubr.f32.mxu0 %v5841
      %6158 = vmatmul.mubr.f32.gmra.mxu0 %v5711
      %v6159 = vpop.f32.mrf.mxu0
      %v6160 = vadd.f32 %v5937, %v6159
      %v6161 = vpop.f32.mrf.mxu0
      %6162 = vmatprep.mubr.f32.mxu0 %v5842
      %6163 = vmatmul.mubr.f32.gmra.mxu0 %v5712
      %v6164 = vpop.f32.mrf.mxu0
      %v6165 = vadd.f32 %v5937, %v6164
      %v6166 = vpop.f32.mrf.mxu0
      %6167 = vmatprep.mubr.f32.mxu0 %v5843
      %6168 = vmatmul.mubr.f32.gmra.mxu0 %v5713
      %v6169 = vpop.f32.mrf.mxu0
      %v6170 = vadd.f32 %v5937, %v6169
      %v6171 = vpop.f32.mrf.mxu0
      %6172 = vmatprep.mubr.f32.mxu0 %v5844
      %6173 = vmatmul.mubr.f32.gmra.mxu0 %v5714
      %v6174 = vpop.f32.mrf.mxu0
      %v6175 = vadd.f32 %v5937, %v6174
      %v6176 = vpop.f32.mrf.mxu0
      %6177 = vmatprep.mubr.f32.mxu0 %v5845
      %6178 = vmatmul.mubr.f32.gmra.mxu0 %v5715
      %v6179 = vpop.f32.mrf.mxu0
      %v6180 = vadd.f32 %v5937, %v6179
      %v6181 = vpop.f32.mrf.mxu0
      %6182 = vmatprep.mubr.f32.mxu0 %v5846
      %6183 = vmatmul.mubr.f32.gmra.mxu0 %v5716
      %v6184 = vpop.f32.mrf.mxu0
      %v6185 = vadd.f32 %v5937, %v6184
      %v6186 = vpop.f32.mrf.mxu0
      %6187 = vmatprep.mubr.f32.mxu0 %v5847
      %6188 = vmatmul.mubr.f32.gmra.mxu0 %v5717
      %v6189 = vpop.f32.mrf.mxu0
      %v6190 = vadd.f32 %v5937, %v6189
      %v6191 = vpop.f32.mrf.mxu0
      %6192 = vmatprep.mubr.f32.mxu0 %v5848
      %6193 = vmatmul.mubr.f32.gmra.mxu0 %v5718
      %v6194 = vpop.f32.mrf.mxu0
      %v6195 = vadd.f32 %v5937, %v6194
      %v6196 = vpop.f32.mrf.mxu0
      %6197 = vmatprep.mubr.f32.mxu0 %v5849
      %6198 = vmatmul.mubr.f32.gmra.mxu0 %v5719
      %v6199 = vpop.f32.mrf.mxu0
      %v6200 = vadd.f32 %v5937, %v6199
      %v6201 = vpop.f32.mrf.mxu0
      %6202 = vmatprep.mubr.f32.mxu0 %v5850
      %6203 = vmatmul.mubr.f32.gmra.mxu0 %v5720
      %v6204 = vpop.f32.mrf.mxu0
      %v6205 = vadd.f32 %v5937, %v6204
      %v6206 = vpop.f32.mrf.mxu0
      %6207 = vmatprep.mubr.f32.mxu0 %v5851
      %6208 = vmatmul.mubr.f32.gmra.mxu0 %v5721
      %v6209 = vpop.f32.mrf.mxu0
      %v6210 = vadd.f32 %v5937, %v6209
      %v6211 = vpop.f32.mrf.mxu0
      %6212 = vmatprep.mubr.f32.mxu0 %v5852
      %6213 = vmatmul.mubr.f32.gmra.mxu0 %v5722
      %v6214 = vpop.f32.mrf.mxu0
      %v6215 = vadd.f32 %v5937, %v6214
      %v6216 = vpop.f32.mrf.mxu0
      %6217 = vmatprep.mubr.f32.mxu0 %v5853
      %6218 = vmatmul.mubr.f32.gmra.mxu0 %v5723
      %v6219 = vpop.f32.mrf.mxu0
      %v6220 = vadd.f32 %v5937, %v6219
      %v6221 = vpop.f32.mrf.mxu0
      %6222 = vmatprep.mubr.f32.mxu0 %v5854
      %6223 = vmatmul.mubr.f32.gmra.mxu0 %v5724
      %v6224 = vpop.f32.mrf.mxu0
      %v6225 = vadd.f32 %v5937, %v6224
      %v6226 = vpop.f32.mrf.mxu0
      %6227 = vmatprep.mubr.f32.mxu0 %v5855
      %6228 = vmatmul.mubr.f32.gmra.mxu0 %v5725
      %v6229 = vpop.f32.mrf.mxu0
      %v6230 = vadd.f32 %v5937, %v6229
      %v6231 = vpop.f32.mrf.mxu0
      %6232 = vmatprep.mubr.f32.mxu0 %v5856
      %6233 = vmatmul.mubr.f32.gmra.mxu0 %v5726
      %v6234 = vpop.f32.mrf.mxu0
      %v6235 = vadd.f32 %v5937, %v6234
      %v6236 = vpop.f32.mrf.mxu0
      %6237 = vmatprep.mubr.f32.mxu0 %v5857
      %6238 = vmatmul.mubr.f32.gmra.mxu0 %v5727
      %v6239 = vpop.f32.mrf.mxu0
      %v6240 = vadd.f32 %v5937, %v6239
      %v6241 = vpop.f32.mrf.mxu0
      %6242 = vmatprep.mubr.f32.mxu0 %v5858
      %6243 = vmatmul.mubr.f32.gmra.mxu0 %v5728
      %v6244 = vpop.f32.mrf.mxu0
      %v6245 = vadd.f32 %v5937, %v6244
      %v6246 = vpop.f32.mrf.mxu0
      %6247 = vmatprep.mubr.f32.mxu0 %v5859
      %6248 = vmatmul.mubr.f32.gmra.mxu0 %v5729
      %v6249 = vpop.f32.mrf.mxu0
      %v6250 = vadd.f32 %v5937, %v6249
      %v6251 = vpop.f32.mrf.mxu0
      %6252 = vmatprep.mubr.f32.mxu0 %v5860
      %6253 = vmatmul.mubr.f32.gmra.mxu0 %v5730
      %v6254 = vpop.f32.mrf.mxu0
      %v6255 = vadd.f32 %v5937, %v6254
      %v6256 = vpop.f32.mrf.mxu0
      %6257 = vdwg.mxu0
      %6258 = vmatprep.subr.mxu0 0.0
      %6259 = vmatpush1.msra.mxu0 0.0
      %6260 = vmatprep.subr.mxu0 0.0
      %6261 = vmatpush1.msra.mxu0 0.0
      %6262 = vmatprep.subr.mxu0 0.0
      %6263 = vmatpush1.msra.mxu0 0.0
      %6264 = vmatprep.subr.mxu0 0.0
      %6265 = vmatpush1.msra.mxu0 0.0
      %6266 = vmatprep.subr.mxu0 0.0
      %6267 = vmatpush1.msra.mxu0 0.0
      %6268 = vmatprep.subr.mxu0 0.0
      %6269 = vmatpush1.msra.mxu0 0.0
      %6270 = vmatprep.subr.mxu0 0.0
      %6271 = vmatpush1.msra.mxu0 0.0
      %6272 = vmatprep.subr.mxu0 0.0
      %6273 = vmatpush1.msra.mxu0 %v6031
      %6274 = vmatprep.subr.mxu0 0.0
      %6275 = vmatpush1.msra.mxu0 %v5930
      %6276 = vmatprep.subr.mxu0 0.0
      %6277 = vmatpush1.msra.mxu0 %v5929
      %6278 = vmatprep.subr.mxu0 0.0
      %6279 = vmatpush1.msra.mxu0 %v5928
      %6280 = vmatprep.subr.mxu0 0.0
      %6281 = vmatpush1.msra.mxu0 %v5927
      %6282 = vmatprep.subr.mxu0 0.0
      %6283 = vmatpush1.msra.mxu0 %v5926
      %6284 = vmatprep.subr.mxu0 0.0
      %6285 = vmatpush1.msra.mxu0 %v5925
      %6286 = vmatprep.subr.mxu0 0.0
      %6287 = vmatpush1.msra.mxu0 %v5924
      %6288 = vmatprep.subr.mxu0 0.0
      %6289 = vmatpush1.msra.mxu0 %v5923
      %6290 = vmatprep.subr.mxu0 0.0
      %6291 = vmatpush2.msra.mxu0 0.0
      %6292 = vmatprep.subr.mxu0 0.0
      %6293 = vmatpush2.msra.mxu0 0.0
      %6294 = vmatprep.subr.mxu0 0.0
      %6295 = vmatpush2.msra.mxu0 0.0
      %6296 = vmatprep.subr.mxu0 0.0
      %6297 = vmatpush2.msra.mxu0 0.0
      %6298 = vmatprep.subr.mxu0 0.0
      %6299 = vmatpush2.msra.mxu0 0.0
      %6300 = vmatprep.subr.mxu0 0.0
      %6301 = vmatpush2.msra.mxu0 0.0
      %6302 = vmatprep.subr.mxu0 0.0
      %6303 = vmatpush2.msra.mxu0 0.0
      %6304 = vmatprep.subr.mxu0 0.0
      %6305 = vmatpush2.msra.mxu0 0.0
      %6306 = vmatprep.subr.mxu0 0.0
      %6307 = vmatpush2.msra.mxu0 0.0
      %6308 = vmatprep.subr.mxu0 0.0
      %6309 = vmatpush2.msra.mxu0 0.0
      %6310 = vmatprep.subr.mxu0 0.0
      %6311 = vmatpush2.msra.mxu0 0.0
      %6312 = vmatprep.subr.mxu0 0.0
      %6313 = vmatpush2.msra.mxu0 0.0
      %6314 = vmatprep.subr.mxu0 0.0
      %6315 = vmatpush2.msra.mxu0 0.0
      %6316 = vmatprep.subr.mxu0 0.0
      %6317 = vmatpush2.msra.mxu0 0.0
      %6318 = vmatprep.subr.mxu0 0.0
      %6319 = vmatpush2.msra.mxu0 0.0
      %6320 = vmatprep.subr.mxu0 0.0
      %6321 = vmatpush2.msra.mxu0 0.0
      %6322 = vmatprep.mubr.f32.mxu0 0.0
      %6323 = vmatmul.mubr.f32.gmra.mxu0 %v5941
      %v6324 = vpop.f32.mrf.mxu0
      %v6325 = vadd.f32 %v6100, %v6324
      %v6326 = vpop.f32.mrf.mxu0
      %6327 = vmatprep.mubr.f32.mxu0 0.0
      %6328 = vmatmul.mubr.f32.gmra.mxu0 %v5944
      %v6329 = vpop.f32.mrf.mxu0
      %v6330 = vadd.f32 %v6105, %v6329
      %v6331 = vpop.f32.mrf.mxu0
      %6332 = vmatprep.mubr.f32.mxu0 0.0
      %6333 = vmatmul.mubr.f32.gmra.mxu0 %v5947
      %v6334 = vpop.f32.mrf.mxu0
      %v6335 = vadd.f32 %v6110, %v6334
      %v6336 = vpop.f32.mrf.mxu0
      %6337 = vmatprep.mubr.f32.mxu0 0.0
      %6338 = vmatmul.mubr.f32.gmra.mxu0 %v5950
      %v6339 = vpop.f32.mrf.mxu0
      %v6340 = vadd.f32 %v6115, %v6339
      %v6341 = vpop.f32.mrf.mxu0
      %6342 = vmatprep.mubr.f32.mxu0 0.0
      %6343 = vmatmul.mubr.f32.gmra.mxu0 %v5953
      %v6344 = vpop.f32.mrf.mxu0
      %v6345 = vadd.f32 %v6120, %v6344
      %v6346 = vpop.f32.mrf.mxu0
      %6347 = vmatprep.mubr.f32.mxu0 0.0
      %6348 = vmatmul.mubr.f32.gmra.mxu0 %v5956
      %v6349 = vpop.f32.mrf.mxu0
      %v6350 = vadd.f32 %v6125, %v6349
      %v6351 = vpop.f32.mrf.mxu0
      %6352 = vmatprep.mubr.f32.mxu0 0.0
      %6353 = vmatmul.mubr.f32.gmra.mxu0 %v5959
      %v6354 = vpop.f32.mrf.mxu0
      %v6355 = vadd.f32 %v6130, %v6354
      %v6356 = vpop.f32.mrf.mxu0
      %6357 = vmatprep.mubr.f32.mxu0 0.0
      %6358 = vmatmul.mubr.f32.gmra.mxu0 %v5962
      %v6359 = vpop.f32.mrf.mxu0
      %v6360 = vadd.f32 %v6135, %v6359
      %v6361 = vpop.f32.mrf.mxu0
      %6362 = vmatprep.mubr.f32.mxu0 0.0
      %6363 = vmatmul.mubr.f32.gmra.mxu0 %v5965
      %v6364 = vpop.f32.mrf.mxu0
      %v6365 = vadd.f32 %v6140, %v6364
      %v6366 = vpop.f32.mrf.mxu0
      %6367 = vmatprep.mubr.f32.mxu0 0.0
      %6368 = vmatmul.mubr.f32.gmra.mxu0 %v5968
      %v6369 = vpop.f32.mrf.mxu0
      %v6370 = vadd.f32 %v6145, %v6369
      %v6371 = vpop.f32.mrf.mxu0
      %6372 = vmatprep.mubr.f32.mxu0 0.0
      %6373 = vmatmul.mubr.f32.gmra.mxu0 %v5971
      %v6374 = vpop.f32.mrf.mxu0
      %v6375 = vadd.f32 %v6150, %v6374
      %v6376 = vpop.f32.mrf.mxu0
      %6377 = vmatprep.mubr.f32.mxu0 0.0
      %6378 = vmatmul.mubr.f32.gmra.mxu0 %v5974
      %v6379 = vpop.f32.mrf.mxu0
      %v6380 = vadd.f32 %v6155, %v6379
      %v6381 = vpop.f32.mrf.mxu0
      %6382 = vmatprep.mubr.f32.mxu0 0.0
      %6383 = vmatmul.mubr.f32.gmra.mxu0 %v5977
      %v6384 = vpop.f32.mrf.mxu0
      %v6385 = vadd.f32 %v6160, %v6384
      %v6386 = vpop.f32.mrf.mxu0
      %6387 = vmatprep.mubr.f32.mxu0 0.0
      %6388 = vmatmul.mubr.f32.gmra.mxu0 %v5980
      %v6389 = vpop.f32.mrf.mxu0
      %v6390 = vadd.f32 %v6165, %v6389
      %v6391 = vpop.f32.mrf.mxu0
      %6392 = vmatprep.mubr.f32.mxu0 0.0
      %6393 = vmatmul.mubr.f32.gmra.mxu0 %v5983
      %v6394 = vpop.f32.mrf.mxu0
      %v6395 = vadd.f32 %v6170, %v6394
      %v6396 = vpop.f32.mrf.mxu0
      %6397 = vmatprep.mubr.f32.mxu0 0.0
      %6398 = vmatmul.mubr.f32.gmra.mxu0 %v5986
      %v6399 = vpop.f32.mrf.mxu0
      %v6400 = vadd.f32 %v6175, %v6399
      %v6401 = vpop.f32.mrf.mxu0
      %6402 = vmatprep.mubr.f32.mxu0 0.0
      %6403 = vmatmul.mubr.f32.gmra.mxu0 %v5989
      %v6404 = vpop.f32.mrf.mxu0
      %v6405 = vadd.f32 %v6180, %v6404
      %v6406 = vpop.f32.mrf.mxu0
      %6407 = vmatprep.mubr.f32.mxu0 0.0
      %6408 = vmatmul.mubr.f32.gmra.mxu0 %v5992
      %v6409 = vpop.f32.mrf.mxu0
      %v6410 = vadd.f32 %v6185, %v6409
      %v6411 = vpop.f32.mrf.mxu0
      %6412 = vmatprep.mubr.f32.mxu0 0.0
      %6413 = vmatmul.mubr.f32.gmra.mxu0 %v5995
      %v6414 = vpop.f32.mrf.mxu0
      %v6415 = vadd.f32 %v6190, %v6414
      %v6416 = vpop.f32.mrf.mxu0
      %6417 = vmatprep.mubr.f32.mxu0 0.0
      %6418 = vmatmul.mubr.f32.gmra.mxu0 %v5998
      %v6419 = vpop.f32.mrf.mxu0
      %v6420 = vadd.f32 %v6195, %v6419
      %v6421 = vpop.f32.mrf.mxu0
      %6422 = vmatprep.mubr.f32.mxu0 0.0
      %6423 = vmatmul.mubr.f32.gmra.mxu0 %v6001
      %v6424 = vpop.f32.mrf.mxu0
      %v6425 = vadd.f32 %v6200, %v6424
      %v6426 = vpop.f32.mrf.mxu0
      %6427 = vmatprep.mubr.f32.mxu0 0.0
      %6428 = vmatmul.mubr.f32.gmra.mxu0 %v6004
      %v6429 = vpop.f32.mrf.mxu0
      %v6430 = vadd.f32 %v6205, %v6429
      %v6431 = vpop.f32.mrf.mxu0
      %6432 = vmatprep.mubr.f32.mxu0 0.0
      %6433 = vmatmul.mubr.f32.gmra.mxu0 %v6007
      %v6434 = vpop.f32.mrf.mxu0
      %v6435 = vadd.f32 %v6210, %v6434
      %v6436 = vpop.f32.mrf.mxu0
      %6437 = vmatprep.mubr.f32.mxu0 0.0
      %6438 = vmatmul.mubr.f32.gmra.mxu0 %v6010
      %v6439 = vpop.f32.mrf.mxu0
      %v6440 = vadd.f32 %v6215, %v6439
      %v6441 = vpop.f32.mrf.mxu0
      %6442 = vmatprep.mubr.f32.mxu0 0.0
      %6443 = vmatmul.mubr.f32.gmra.mxu0 %v6013
      %v6444 = vpop.f32.mrf.mxu0
      %v6445 = vadd.f32 %v6220, %v6444
      %v6446 = vpop.f32.mrf.mxu0
      %6447 = vmatprep.mubr.f32.mxu0 0.0
      %6448 = vmatmul.mubr.f32.gmra.mxu0 %v6016
      %v6449 = vpop.f32.mrf.mxu0
      %v6450 = vadd.f32 %v6225, %v6449
      %v6451 = vpop.f32.mrf.mxu0
      %6452 = vmatprep.mubr.f32.mxu0 0.0
      %6453 = vmatmul.mubr.f32.gmra.mxu0 %v6019
      %v6454 = vpop.f32.mrf.mxu0
      %v6455 = vadd.f32 %v6230, %v6454
      %v6456 = vpop.f32.mrf.mxu0
      %6457 = vmatprep.mubr.f32.mxu0 0.0
      %6458 = vmatmul.mubr.f32.gmra.mxu0 %v6022
      %v6459 = vpop.f32.mrf.mxu0
      %v6460 = vadd.f32 %v6235, %v6459
      %v6461 = vpop.f32.mrf.mxu0
      %6462 = vmatprep.mubr.f32.mxu0 0.0
      %6463 = vmatmul.mubr.f32.gmra.mxu0 %v6025
      %v6464 = vpop.f32.mrf.mxu0
      %v6465 = vadd.f32 %v6240, %v6464
      %v6466 = vpop.f32.mrf.mxu0
      %6467 = vmatprep.mubr.f32.mxu0 0.0
      %6468 = vmatmul.mubr.f32.gmra.mxu0 %v6028
      %v6469 = vpop.f32.mrf.mxu0
      %v6470 = vadd.f32 %v6245, %v6469
      %v6471 = vpop.f32.mrf.mxu0
      %6472 = vmatprep.mubr.f32.mxu0 0.0
      %6473 = vmatmul.mubr.f32.gmra.mxu0 %v6019
      %v6474 = vpop.f32.mrf.mxu0
      %v6475 = vadd.f32 %v6250, %v6474
      %v6476 = vpop.f32.mrf.mxu0
      %6477 = vmatprep.mubr.f32.mxu0 0.0
      %6478 = vmatmul.mubr.f32.gmra.mxu0 %v6022
      %v6479 = vpop.f32.mrf.mxu0
      %v6480 = vadd.f32 %v6255, %v6479
      %v6481 = vpop.f32.mrf.mxu0
      %6482 = vdwg.mxu0
      %v6483 = vmax.f32 %v6325, 0.0
      %v6484 = vmax.f32 %v6330, 0.0
      %v6485 = vmax.f32 %v6335, 0.0
      %v6486 = vmax.f32 %v6340, 0.0
      %v6487 = vmax.f32 %v6345, 0.0
      %v6488 = vmax.f32 %v6350, 0.0
      %v6489 = vmax.f32 %v6355, 0.0
      %v6490 = vmax.f32 %v6360, 0.0
      %v6491 = vmax.f32 %v6365, 0.0
      %v6492 = vmax.f32 %v6370, 0.0
      %v6493 = vmax.f32 %v6375, 0.0
      %v6494 = vmax.f32 %v6380, 0.0
      %v6495 = vmax.f32 %v6385, 0.0
      %v6496 = vmax.f32 %v6390, 0.0
      %v6497 = vmax.f32 %v6395, 0.0
      %v6498 = vmax.f32 %v6400, 0.0
      %v6499 = vmax.f32 %v6405, 0.0
      %v6500 = vmax.f32 %v6410, 0.0
      %v6501 = vmax.f32 %v6415, 0.0
      %v6502 = vmax.f32 %v6420, 0.0
      %v6503 = vmax.f32 %v6425, 0.0
      %v6504 = vmax.f32 %v6430, 0.0
      %v6505 = vmax.f32 %v6435, 0.0
      %v6506 = vmax.f32 %v6440, 0.0
      %v6507 = vmax.f32 %v6445, 0.0
      %v6508 = vmax.f32 %v6450, 0.0
      %v6509 = vmax.f32 %v6455, 0.0
      %v6510 = vmax.f32 %v6460, 0.0
      %v6511 = vmax.f32 %v6465, 0.0
      %v6512 = vmax.f32 %v6470, 0.0
      %v6513 = vmax.f32 %v6475, 0.0
      %v6514 = vmax.f32 %v6480, 0.0
      %v6515 = vsel %vm1607, %v6483, 0.0
      %v6516 = vsel %vm1607, %v6484, 0.0
      %v6517 = vsel %vm1607, %v6485, 0.0
      %v6518 = vsel %vm1607, %v6486, 0.0
      %v6519 = vsel %vm1607, %v6487, 0.0
      %v6520 = vsel %vm1607, %v6488, 0.0
      %v6521 = vsel %vm1607, %v6489, 0.0
      %v6522 = vsel %vm1607, %v6490, 0.0
      %v6523 = vsel %vm1607, %v6491, 0.0
      %v6524 = vsel %vm1607, %v6492, 0.0
      %v6525 = vsel %vm1607, %v6493, 0.0
      %v6526 = vsel %vm1607, %v6494, 0.0
      %v6527 = vsel %vm1607, %v6495, 0.0
      %v6528 = vsel %vm1607, %v6496, 0.0
      %v6529 = vsel %vm1607, %v6497, 0.0
      %v6530 = vsel %vm1607, %v6498, 0.0
      %v6531 = vsel %vm1607, %v6499, 0.0
      %v6532 = vsel %vm1607, %v6500, 0.0
      %v6533 = vsel %vm1607, %v6501, 0.0
      %v6534 = vsel %vm1607, %v6502, 0.0
      %v6535 = vsel %vm1607, %v6503, 0.0
      %v6536 = vsel %vm1607, %v6504, 0.0
      %v6537 = vsel %vm1607, %v6505, 0.0
      %v6538 = vsel %vm1607, %v6506, 0.0
      %v6539 = vsel %vm1607, %v6507, 0.0
      %v6540 = vsel %vm1607, %v6508, 0.0
      %v6541 = vsel %vm1607, %v6509, 0.0
      %v6542 = vsel %vm1607, %v6510, 0.0
      %v6543 = vsel %vm1607, %v6511, 0.0
      %v6544 = vsel %vm1607, %v6512, 0.0
      %v6545 = vsel %vm1607, %v6513, 0.0
      %v6546 = vsel %vm1607, %v6514, 0.0
      %6547 = vxpose.xlu0.b32.start [1/16] %v6515, 128
      %6548 = vxpose.xlu0.b32.cont [2/16] %v6516, 128
      %6549 = vxpose.xlu0.b32.cont [3/16] %v6517, 128
      %6550 = vxpose.xlu0.b32.cont [4/16] %v6518, 128
      %6551 = vxpose.xlu0.b32.cont [5/16] %v6519, 128
      %6552 = vxpose.xlu0.b32.cont [6/16] %v6520, 128
      %6553 = vxpose.xlu0.b32.cont [7/16] %v6521, 128
      %6554 = vxpose.xlu0.b32.cont [8/16] %v6522, 128
      %6555 = vxpose.xlu0.b32.cont [9/16] %v6523, 128
      %6556 = vxpose.xlu0.b32.cont [10/16] %v6524, 128
      %6557 = vxpose.xlu0.b32.cont [11/16] %v6525, 128
      %6558 = vxpose.xlu0.b32.cont [12/16] %v6526, 128
      %6559 = vxpose.xlu0.b32.cont [13/16] %v6527, 128
      %6560 = vxpose.xlu0.b32.cont [14/16] %v6528, 128
      %6561 = vxpose.xlu0.b32.cont [15/16] %v6529, 128
      %6562 = vxpose.xlu0.b32.end [16/16] %v6530, 128
      %v6563 = vpop.trf.xlu0
      %v6564 = vpop.trf.xlu0
      %v6565 = vpop.trf.xlu0
      %v6566 = vpop.trf.xlu0
      %v6567 = vpop.trf.xlu0
      %v6568 = vpop.trf.xlu0
      %v6569 = vpop.trf.xlu0
      %v6570 = vpop.trf.xlu0
      %v6571 = vpop.trf.xlu0
      %v6572 = vpop.trf.xlu0
      %v6573 = vpop.trf.xlu0
      %v6574 = vpop.trf.xlu0
      %v6575 = vpop.trf.xlu0
      %v6576 = vpop.trf.xlu0
      %v6577 = vpop.trf.xlu0
      %v6578 = vpop.trf.xlu0
      %6579 = vxpose.xlu0.b32.start [1/16] %v6531, 128
      %6580 = vxpose.xlu0.b32.cont [2/16] %v6532, 128
      %6581 = vxpose.xlu0.b32.cont [3/16] %v6533, 128
      %6582 = vxpose.xlu0.b32.cont [4/16] %v6534, 128
      %6583 = vxpose.xlu0.b32.cont [5/16] %v6535, 128
      %6584 = vxpose.xlu0.b32.cont [6/16] %v6536, 128
      %6585 = vxpose.xlu0.b32.cont [7/16] %v6537, 128
      %6586 = vxpose.xlu0.b32.cont [8/16] %v6538, 128
      %6587 = vxpose.xlu0.b32.cont [9/16] %v6539, 128
      %6588 = vxpose.xlu0.b32.cont [10/16] %v6540, 128
      %6589 = vxpose.xlu0.b32.cont [11/16] %v6541, 128
      %6590 = vxpose.xlu0.b32.cont [12/16] %v6542, 128
      %6591 = vxpose.xlu0.b32.cont [13/16] %v6543, 128
      %6592 = vxpose.xlu0.b32.cont [14/16] %v6544, 128
      %6593 = vxpose.xlu0.b32.cont [15/16] %v6545, 128
      %6594 = vxpose.xlu0.b32.end [16/16] %v6546, 128
      %v6595 = vpop.trf.xlu0
      %v6596 = vpop.trf.xlu0
      %v6597 = vpop.trf.xlu0
      %v6598 = vpop.trf.xlu0
      %v6599 = vpop.trf.xlu0
      %v6600 = vpop.trf.xlu0
      %v6601 = vpop.trf.xlu0
      %v6602 = vpop.trf.xlu0
      %v6603 = vpop.trf.xlu0
      %v6604 = vpop.trf.xlu0
      %v6605 = vpop.trf.xlu0
      %v6606 = vpop.trf.xlu0
      %v6607 = vpop.trf.xlu0
      %v6608 = vpop.trf.xlu0
      %v6609 = vpop.trf.xlu0
      %v6610 = vpop.trf.xlu0
      %v6615 = vrot.slane %v6563, 4
      %v6616 = vrot.slane %v6595, 4
      %v6617 = vrot.slane %v6564, 4
      %v6618 = vsel %vm289, %v6615, %v6617
      %v6619 = vrot.slane %v6596, 4
      %v6620 = vsel %vm289, %v6616, %v6619
      %6627 = vst [vmem:[%s278 + $0x40] sm:$0xf0] %v6615
      %6628 = vst [vmem:[%s278 + $0x48] sm:$0xf0] %v6616
      %6629 = vst [vmem:[%s278 + $0x50] sm:$0xff] %v6618
      %6630 = vst [vmem:[%s278 + $0x58] sm:$0xff] %v6620
      %6631 = vst [vmem:[%s278 + $0x60] sm:$0xf] %v6617
      %6632 = vst [vmem:[%s278 + $0x68] sm:$0xf] %v6619
      %p6633 = scmp.lt.s32.totalorder %s18, 1
      %s6634 = scalar_select %p6633, %s18, 1
      %s6635 = smul.addr %s6634, 14
      %s6636 = smul.addr %s6635, 8
      %s6637 = scalar_lea.vmem %s7, %s6636
      // Predicated region
      $region49: #{dense_block.1} parent=47 // pred_check
        %p6638 = pneg %p188
      $region50: #{dense_block.1} parent=47 // pred_check_branch
        %6640 = sbr.rel (%p6638) target = $region52
      $region51: #{dense_block.1} parent=47 // pred_region
        _
      $region52: #{dense_block.1} parent=47 // pred_fallthru
        _
    $region48: #{dense_block.1} parent=5 // pred_fallthru
      _
    %p6641 = scmp.le.s32.totalorder 2, %s13
    // Predicated region
    $region53: #{dense_block.1} parent=5 // pred_check
      %p6642 = pneg %p6641
    $region54: #{dense_block.1} parent=5 // pred_check_branch
      %6644 = sbr.rel (%p6642) target = $region56
    $region55: #{dense_block.1} parent=5 // pred_region
      %s6645 = ssub.s32 %s13, 2
      // Predicated region
      $region57: #{dense_block.1} parent=55 // pred_check
        %p6646 = pneg %p194
      $region58: #{dense_block.1} parent=55 // pred_check_branch
        %6648 = sbr.rel (%p6646) target = $region60
      $region59: #{dense_block.1} parent=55 // pred_region
        %p6649 = scmp.lt.s32.totalorder %s19, 1
        %s6650 = scalar_select %p6649, %s19, 1
        %s6651 = smul.addr %s6650, 14
        %s6652 = smul.addr %s6651, 8
        %s6653 = scalar_lea.vmem %s7, %s6652
      $region60: #{dense_block.1} parent=55 // pred_fallthru
        _
    $region56: #{dense_block.1} parent=5 // pred_fallthru
      _
  $region6: #{dense_block.1} parent=0 // loop_footer
    %s17 = sadd.s32 1, %s13
  $region7: #{dense_block.1} parent=0 // loop_footer_branch
    %12 = sbr.rel target = $region3
  $region8: #{dense_block.1} parent=0 // loop_exit
    _

</llo_original>
